<compile_context>
chip_gen: v7x
topology: tpu7x:2x2x1
jax: 0.10.0
libtpu: 0.0.40
codegen_flags: <defaults>
</compile_context>

<pallas_src>
import functools

import jax
import jax.numpy as jnp
from jax.experimental import pallas as pl
from jax.experimental.pallas import tpu as pltpu


def _default_vmem_limit():
    """Generation-aware scoped-VMEM limit (v5e/v6e: 128 MiB phys, v7x: 64 MiB)."""
    try:
        cap = getattr(pltpu.get_tpu_info(), "vmem_capacity_bytes", 64 * 1024 * 1024)
    except Exception:                      # conservative fallback
        cap = 64 * 1024 * 1024
    return int(min(cap * 3 // 4, 96 * 1024 * 1024))


# -----------------------------------------------------------------------------
# Kernel 1: direct 3x3 SAME conv + bias + fused ReLU, one image per grid step.
#   input  block: (cin,  h*w)  f32   (raw activation, read once)
#   output block: (cout, h*w)  f32   (lane-dense: h*w on lanes == NCHW layout)
# The 9 taps are realised as static lane rolls of the flattened image plus iota
# masks for the image borders; each tap contributes one bf16 MXU dot into an f32
# accumulator.
# -----------------------------------------------------------------------------
def _conv3x3_relu_kernel(x_ref, w_ref, b_ref, *out_refs, width, want_pre):
    x = x_ref[...]                                        # (cin, h*w) float32
    cin, hw = x.shape
    cout = w_ref.shape[1]

    pos = jax.lax.broadcasted_iota(jnp.int32, (cin, hw), 1)
    if (width & (width - 1)) == 0:
        col = pos & (width - 1)
    else:
        # TODO(synk): vector integer mod only exercised for non power-of-two widths.
        col = pos % width

    acc = jnp.zeros((cout, hw), jnp.float32)
    tap = 0
    for ry in (-1, 0, 1):
        for rx in (-1, 0, 1):
            off = ry * width + rx
            shifted = x if off == 0 else pltpu.roll(x, shift=(-off) % hw, axis=1)
            rowshift = pos + ry * width
            valid = ((rowshift >= 0) & (rowshift < hw) &
                     (col + rx >= 0) & (col + rx < width))
            xt = jnp.where(valid, shifted, 0.0).astype(jnp.bfloat16)
            acc = acc + jax.lax.dot_general(
                w_ref[tap], xt, (((1,), (0,)), ((), ())),
                preferred_element_type=jnp.float32)
            tap += 1

    acc = acc + b_ref[...]                                # (cout, 1) broadcast over lanes
    out_refs[0][...] = jnp.maximum(acc, 0.0)              # post-ReLU (next layer input)
    if want_pre:
        out_refs[1][...] = acc                            # pre-ReLU feature (basicsr)


def pallas_conv3x3_relu(x, w, b, height, width, *, want_pre, vmem_limit):
    """3x3 SAME conv + bias (+ fused ReLU).

    x: (n, cin, height*width) float32 activations (h*w on lanes).
    w: (cout, cin, 3, 3) torch OIHW weights, b: (cout,).
    Returns (post_relu, pre_relu | None), both (n, cout, height*width) float32.
    """
    n, cin, hw = x.shape
    assert hw == height * width
    cout = w.shape[0]

    # (ky, kx, cout, cin) stack so w_ref[ky*3+kx] is the (cout, cin) tap matrix.
    wstack = jnp.transpose(w, (2, 3, 0, 1)).reshape(9, cout, cin).astype(jnp.bfloat16)
    bias = b.reshape(cout, 1).astype(jnp.float32)

    out_shape = [jax.ShapeDtypeStruct((n, cout, hw), jnp.float32)]
    out_specs = [pl.BlockSpec((None, cout, hw), lambda i: (i, 0, 0))]
    if want_pre:
        out_shape.append(jax.ShapeDtypeStruct((n, cout, hw), jnp.float32))
        out_specs.append(pl.BlockSpec((None, cout, hw), lambda i: (i, 0, 0)))

    outs = pl.pallas_call(
        functools.partial(_conv3x3_relu_kernel, width=width, want_pre=want_pre),
        out_shape=tuple(out_shape),
        grid_spec=pltpu.PrefetchScalarGridSpec(
            num_scalar_prefetch=0,
            grid=(n,),
            in_specs=[
                pl.BlockSpec((None, cin, hw), lambda i: (i, 0, 0)),
                pl.BlockSpec((9, cout, cin), lambda i: (0, 0, 0)),
                pl.BlockSpec((cout, 1), lambda i: (0, 0)),
            ],
            out_specs=tuple(out_specs),
        ),
        compiler_params=pltpu.CompilerParams(
            dimension_semantics=("parallel",),
            vmem_limit_bytes=vmem_limit),
    )(x.astype(jnp.float32), wstack, bias)

    post = outs[0]
    pre = outs[1] if want_pre else None
    return post, pre


# -----------------------------------------------------------------------------
# Kernel 2: fused per-layer loss sums.  One image per grid step reads the x and
# gt feature blocks once, accumulates sum|fx - fg| (perceptual L1 numerator) and,
# optionally, builds both gram matrices in VMEM and sum|gram(fx) - gram(fg)|
# (style L1 numerator).  Per-image partials are written as (8,128) splat blocks
# (lane-dense stores, 'parallel' batch axis); means / weights happen in the wrapper.
# -----------------------------------------------------------------------------
def _layer_loss_kernel(fx_ref, fg_ref, *out_refs, gram_scale, with_style):
    fx = fx_ref[...]                                      # (c, h*w) float32
    fg = fg_ref[...]
    p = jnp.sum(jnp.abs(fx - fg))
    out_refs[0][...] = jnp.broadcast_to(p, out_refs[0].shape)
    if with_style:
        fxb = fx.astype(jnp.bfloat16)
        fgb = fg.astype(jnp.bfloat16)
        nt = (((1,), (1,)), ((), ()))                     # contract the h*w (lane) axis
        gx = jax.lax.dot_general(fxb, fxb, nt, preferred_element_type=jnp.float32)
        gg = jax.lax.dot_general(fgb, fgb, nt, preferred_element_type=jnp.float32)
        s = jnp.sum(jnp.abs(gx - gg)) * gram_scale
        out_refs[1][...] = jnp.broadcast_to(s, out_refs[1].shape)


def pallas_layer_loss_sums(feats, batch, *, with_style, vmem_limit):
    """feats: (2*batch, c, h*w) pre-ReLU features; rows [:batch] from x, [batch:] from gt.

    Returns (sum|fx-fg|, sum|gram(fx)-gram(fg)| or None); gram already normalised
    by 1/(c*h*w).  Means / layer weights are applied by the caller.
    """
    n2, c, hw = feats.shape
    assert n2 == 2 * batch
    gram_scale = 1.0 / (c * hw)

    out_shape = [jax.ShapeDtypeStruct((batch * 8, 128), jnp.float32)]
    out_specs = [pl.BlockSpec((8, 128), lambda i: (i, 0))]
    if with_style:
        out_shape.append(jax.ShapeDtypeStruct((batch * 8, 128), jnp.float32))
        out_specs.append(pl.BlockSpec((8, 128), lambda i: (i, 0)))

    outs = pl.pallas_call(
        functools.partial(_layer_loss_kernel, gram_scale=gram_scale,
                          with_style=with_style),
        out_shape=tuple(out_shape),
        grid_spec=pltpu.PrefetchScalarGridSpec(
            num_scalar_prefetch=0,
            grid=(batch,),
            in_specs=[
                pl.BlockSpec((None, c, hw), lambda i: (i, 0, 0)),
                pl.BlockSpec((None, c, hw), lambda i: (i + batch, 0, 0)),
            ],
            out_specs=tuple(out_specs),
        ),
        compiler_params=pltpu.CompilerParams(
            dimension_semantics=("parallel",),
            vmem_limit_bytes=vmem_limit),
    )(feats, feats)

    p_sum = jnp.sum(outs[0][::8, 0])
    s_sum = jnp.sum(outs[1][::8, 0]) if with_style else None
    return p_sum, s_sum


# -----------------------------------------------------------------------------
# Small deterministic VGG-style feature extractor (stand-in for pretrained VGG19).
# -----------------------------------------------------------------------------
_VGG_LAYERS = (
    ("conv1_1", 3, 16),
    ("conv1_2", 16, 16),
    ("pool1", 0, 0),
    ("conv2_1", 16, 32),
    ("conv2_2", 32, 32),
)
_IMAGENET_MEAN = (0.485, 0.456, 0.406)
_IMAGENET_STD = (0.229, 0.224, 0.225)


def init_vgg_params(key):
    params = {}
    for name, cin, cout in _VGG_LAYERS:
        if name.startswith("pool"):
            continue
        key, kw, kb = jax.random.split(key, 3)
        params[name] = {
            "w": 0.2 * jax.random.normal(kw, (cout, cin, 3, 3), dtype=jnp.float32),
            "b": 0.05 * jax.random.normal(kb, (cout,), dtype=jnp.float32),
        }
    return params


def _max_pool2x2(x):
    n, c, h, w = x.shape
    return x.reshape(n, c, h // 2, 2, w // 2, 2).max(axis=(3, 5))


def _normalize_input(x, use_input_norm, range_norm):
    if range_norm:
        x = (x + 1.0) * 0.5
    if use_input_norm:
        mean = jnp.asarray(_IMAGENET_MEAN, jnp.float32).reshape(1, 3, 1, 1)
        std = jnp.asarray(_IMAGENET_STD, jnp.float32).reshape(1, 3, 1, 1)
        x = (x - mean) / std
    return x


def vgg_features_pallas(x, params, layer_names, *, use_input_norm=True,
                        range_norm=False, vmem_limit=None):
    """Pallas VGG stand-in.  Returns {layer: (n, c, h*w) PRE-ReLU features}."""
    x = _normalize_input(x.astype(jnp.float32), use_input_norm, range_norm)
    n, c, h, w = x.shape
    act = x.reshape(n, c, h * w)
    cur_h, cur_w = h, w
    feats = {}
    for name, _, _ in _VGG_LAYERS:
        if name.startswith("pool"):
            cur_c = act.shape[1]
            pooled = _max_pool2x2(act.reshape(n, cur_c, cur_h, cur_w))
            cur_h, cur_w = cur_h // 2, cur_w // 2
            act = pooled.reshape(n, cur_c, cur_h * cur_w)
        else:
            want_pre = name in layer_names
            post, pre = pallas_conv3x3_relu(
                act, params[name]["w"], params[name]["b"], cur_h, cur_w,
                want_pre=want_pre, vmem_limit=vmem_limit)
            if want_pre:
                feats[name] = pre
            act = post
        if all(k in feats for k in layer_names):
            break
    return feats


# -----------------------------------------------------------------------------
# PerceptualLoss forward (Pallas path).
# -----------------------------------------------------------------------------
def perceptual_loss_pallas(x, gt, params, *, layer_weights, perceptual_weight=1.0,
                           style_weight=0.0, use_input_norm=True, range_norm=False,
                           criterion="l1"):
    if criterion != "l1":
        # TODO(synk): 'fro' / 'l2' criteria of the original module are not implemented.
        raise NotImplementedError(f"{criterion} criterion has not been supported.")

    names = tuple(layer_weights.keys())
    batch = x.shape[0]
    vmem_limit = _default_vmem_limit()

    # Single VGG pass over [x ; gt.detach()] (halves launches / pipeline warm-up).
    both = jnp.concatenate([x, jax.lax.stop_gradient(gt)], axis=0)
    feats = vgg_features_pallas(both, params, names, use_input_norm=use_input_norm,
                                range_norm=range_norm, vmem_limit=vmem_limit)

    with_style = style_weight > 0
    percep = jnp.float32(0.0)
    style = jnp.float32(0.0)
    for k in names:
        f = feats[k]
        c, hw = f.shape[1], f.shape[2]
        p_sum, s_sum = pallas_layer_loss_sums(f, batch, with_style=with_style,
                                              vmem_limit=vmem_limit)
        percep = percep + (p_sum / (batch * c * hw)) * layer_weights[k]
        if with_style:
            style = style + (s_sum / (batch * c * c)) * layer_weights[k]

    percep_out = percep * perceptual_weight if perceptual_weight > 0 else None
    style_out = style * style_weight if with_style else None
    return percep_out, style_out


# -----------------------------------------------------------------------------
# Pure-JAX reference (same bf16-operand / f32-accumulate math; HIGHEST on the
# bf16-rounded operands gives an accurately accumulated checker).
# -----------------------------------------------------------------------------
def _ref_conv3x3(x, w, b):
    xb = x.astype(jnp.bfloat16).astype(jnp.float32)
    wb = w.astype(jnp.bfloat16).astype(jnp.float32)
    y = jax.lax.conv_general_dilated(
        xb, wb, window_strides=(1, 1), padding="SAME",
        dimension_numbers=("NCHW", "OIHW", "NCHW"),
        precision=jax.lax.Precision.HIGHEST)
    return y + b.reshape(1, -1, 1, 1).astype(jnp.float32)


def _ref_gram(x):
    n, c, h, w = x.shape
    f = x.reshape(n, c, h * w).astype(jnp.bfloat16).astype(jnp.float32)
    g = jnp.einsum("ncx,ndx->ncd", f, f, precision=jax.lax.Precision.HIGHEST)
    return g / (c * h * w)


def vgg_features_reference(x, params, layer_names, *, use_input_norm=True,
                           range_norm=False):
    x = _normalize_input(x.astype(jnp.float32), use_input_norm, range_norm)
    feats = {}
    h = x
    for name, _, _ in _VGG_LAYERS:
        if name.startswith("pool"):
            h = _max_pool2x2(h)
        else:
            pre = _ref_conv3x3(h, params[name]["w"], params[name]["b"])
            if name in layer_names:
                feats[name] = pre
            h = jnp.maximum(pre, 0.0)
        if all(k in feats for k in layer_names):
            break
    return feats


def perceptual_loss_reference(x, gt, params, *, layer_weights, perceptual_weight=1.0,
                              style_weight=0.0):
    names = tuple(layer_weights.keys())
    xf = vgg_features_reference(x, params, names)
    gf = vgg_features_reference(gt, params, names)
    percep = sum(jnp.mean(jnp.abs(xf[k] - gf[k])) * layer_weights[k] for k in names)
    percep = percep * perceptual_weight if perceptual_weight > 0 else None
    if style_weight > 0:
        style = sum(jnp.mean(jnp.abs(_ref_gram(xf[k]) - _ref_gram(gf[k])))
                    * layer_weights[k] for k in names)
        style = style * style_weight
    else:
        style = None
    return percep, style


if __name__ == "__main__":
    key = jax.random.PRNGKey(0)
    kx, kg, kp = jax.random.split(key, 3)

    # Small but TPU-friendly: 32x32 keeps every h*w lane dimension a multiple of 128
    # through the pooling stage (lane-dense rolls / stores).
    B, C, H, W = 2, 3, 32, 32
    layer_weights = {"conv1_2": 0.5, "conv2_2": 1.0}
    perceptual_weight = 1.0
    style_weight = 0.5

    x = jax.random.uniform(kx, (B, C, H, W), dtype=jnp.float32)
    gt = jax.random.uniform(kg, (B, C, H, W), dtype=jnp.float32)
    params = init_vgg_params(kp)

    percep, style = perceptual_loss_pallas(
        x, gt, params, layer_weights=layer_weights,
        perceptual_weight=perceptual_weight, style_weight=style_weight)
    percep = jax.block_until_ready(percep)
    style = jax.block_until_ready(style)

    ref_p, ref_s = perceptual_loss_reference(
        x, gt, params, layer_weights=layer_weights,
        perceptual_weight=perceptual_weight, style_weight=style_weight)

    assert jnp.allclose(percep, ref_p, rtol=5e-3, atol=1e-4), (percep, ref_p)
    assert jnp.allclose(style, ref_s, rtol=5e-3, atol=1e-4), (style, ref_s)

    print("KERNEL_OK")
</pallas_src>

<mosaic_0001>
module attributes {stable_mosaic.version = 11 : i64} {
  func.func @_conv3x3_relu_kernel(%arg0: i32, %arg1: memref<1x3x1024xf32, #tpu.memory_space<vmem>>, %arg2: memref<9x16x3xbf16, #tpu.memory_space<vmem>>, %arg3: memref<16x1xf32, #tpu.memory_space<vmem>>, %arg4: memref<1x16x1024xf32, #tpu.memory_space<vmem>>) attributes {dimension_semantics = [#tpu.dimension_semantics<parallel>], iteration_bounds = array<i64: 4>, scalar_prefetch = 0 : i64, scratch_operands = 0 : i64, tpu.core_type = #tpu.core_type<tc>, window_params = [{transform_indices = @transform_0, window_bounds = array<i64: 1, 3, 1024>}, {pipeline_mode = #tpu.pipeline_mode<synchronous>, transform_indices = @transform_1, window_bounds = array<i64: 9, 16, 3>}, {pipeline_mode = #tpu.pipeline_mode<synchronous>, transform_indices = @transform_2, window_bounds = array<i64: 16, 1>}, {transform_indices = @transform_3, window_bounds = array<i64: 1, 16, 1024>}]} {
    %c0 = arith.constant 0 : index
    %c0_0 = arith.constant 0 : index
    %c0_1 = arith.constant 0 : index
    %0 = vector.load %arg1[%c0, %c0_0, %c0_1] : memref<1x3x1024xf32, #tpu.memory_space<vmem>>, vector<1x3x1024xf32>
    %1 = vector.shape_cast %0 : vector<1x3x1024xf32> to vector<3x1024xf32>
    %2 = tpu.iota {dimensions = array<i32: 1>} : vector<3x1024xi32>
    %c31_i32 = arith.constant 31 : i32
    %3 = vector.broadcast %c31_i32 : i32 to vector<3x1024xi32>
    %4 = arith.andi %2, %3 : vector<3x1024xi32>
    %cst = arith.constant 0.000000e+00 : f32
    %5 = vector.broadcast %cst : f32 to vector<16x1024xf32>
    %c33_i32 = arith.constant 33 : i32
    %6 = tpu.dynamic_rotate %1 by %c33_i32 dim 1 : vector<3x1024xf32>, i32 -> vector<3x1024xf32>
    %c-32_i32 = arith.constant -32 : i32
    %7 = vector.broadcast %c-32_i32 : i32 to vector<3x1024xi32>
    %8 = arith.addi %2, %7 : vector<3x1024xi32>
    %c0_i32 = arith.constant 0 : i32
    %9 = vector.broadcast %c0_i32 : i32 to vector<3x1024xi32>
    %10 = arith.cmpi sge, %8, %9 : vector<3x1024xi32>
    %c1024_i32 = arith.constant 1024 : i32
    %11 = vector.broadcast %c1024_i32 : i32 to vector<3x1024xi32>
    %12 = arith.cmpi slt, %8, %11 : vector<3x1024xi32>
    %13 = arith.andi %10, %12 : vector<3x1024xi1>
    %c-1_i32 = arith.constant -1 : i32
    %14 = vector.broadcast %c-1_i32 : i32 to vector<3x1024xi32>
    %15 = arith.addi %4, %14 : vector<3x1024xi32>
    %c0_i32_2 = arith.constant 0 : i32
    %16 = vector.broadcast %c0_i32_2 : i32 to vector<3x1024xi32>
    %17 = arith.cmpi sge, %15, %16 : vector<3x1024xi32>
    %18 = arith.andi %13, %17 : vector<3x1024xi1>
    %c-1_i32_3 = arith.constant -1 : i32
    %19 = vector.broadcast %c-1_i32_3 : i32 to vector<3x1024xi32>
    %20 = arith.addi %4, %19 : vector<3x1024xi32>
    %c32_i32 = arith.constant 32 : i32
    %21 = vector.broadcast %c32_i32 : i32 to vector<3x1024xi32>
    %22 = arith.cmpi slt, %20, %21 : vector<3x1024xi32>
    %23 = arith.andi %18, %22 : vector<3x1024xi1>
    %cst_4 = arith.constant 0.000000e+00 : f32
    %24 = vector.broadcast %cst_4 : f32 to vector<3x1024xf32>
    %25 = arith.select %23, %6, %24 : vector<3x1024xi1>, vector<3x1024xf32>
    %26 = arith.truncf %25 : vector<3x1024xf32> to vector<3x1024xbf16>
    %c0_5 = arith.constant 0 : index
    %c0_6 = arith.constant 0 : index
    %c0_7 = arith.constant 0 : index
    %27 = vector.load %arg2[%c0_5, %c0_6, %c0_7] : memref<9x16x3xbf16, #tpu.memory_space<vmem>>, vector<1x16x3xbf16>
    %28 = vector.shape_cast %27 : vector<1x16x3xbf16> to vector<16x3xbf16>
    %cst_8 = arith.constant dense<0.000000e+00> : vector<16x1024xf32>
    %29 = tpu.matmul %28, %26, %cst_8 {dimension_numbers = #tpu.dot_dimension_numbers<[1], [0], [0], [1], [0, 0, 1, 1], [], []>} : vector<16x3xbf16>, vector<3x1024xbf16>, vector<16x1024xf32> -> vector<16x1024xf32>
    %30 = arith.addf %5, %29 : vector<16x1024xf32>
    %c32_i32_9 = arith.constant 32 : i32
    %31 = tpu.dynamic_rotate %1 by %c32_i32_9 dim 1 : vector<3x1024xf32>, i32 -> vector<3x1024xf32>
    %c-32_i32_10 = arith.constant -32 : i32
    %32 = vector.broadcast %c-32_i32_10 : i32 to vector<3x1024xi32>
    %33 = arith.addi %2, %32 : vector<3x1024xi32>
    %c0_i32_11 = arith.constant 0 : i32
    %34 = vector.broadcast %c0_i32_11 : i32 to vector<3x1024xi32>
    %35 = arith.cmpi sge, %33, %34 : vector<3x1024xi32>
    %c1024_i32_12 = arith.constant 1024 : i32
    %36 = vector.broadcast %c1024_i32_12 : i32 to vector<3x1024xi32>
    %37 = arith.cmpi slt, %33, %36 : vector<3x1024xi32>
    %38 = arith.andi %35, %37 : vector<3x1024xi1>
    %c0_i32_13 = arith.constant 0 : i32
    %39 = vector.broadcast %c0_i32_13 : i32 to vector<3x1024xi32>
    %40 = arith.addi %4, %39 : vector<3x1024xi32>
    %c0_i32_14 = arith.constant 0 : i32
    %41 = vector.broadcast %c0_i32_14 : i32 to vector<3x1024xi32>
    %42 = arith.cmpi sge, %40, %41 : vector<3x1024xi32>
    %43 = arith.andi %38, %42 : vector<3x1024xi1>
    %c0_i32_15 = arith.constant 0 : i32
    %44 = vector.broadcast %c0_i32_15 : i32 to vector<3x1024xi32>
    %45 = arith.addi %4, %44 : vector<3x1024xi32>
    %c32_i32_16 = arith.constant 32 : i32
    %46 = vector.broadcast %c32_i32_16 : i32 to vector<3x1024xi32>
    %47 = arith.cmpi slt, %45, %46 : vector<3x1024xi32>
    %48 = arith.andi %43, %47 : vector<3x1024xi1>
    %cst_17 = arith.constant 0.000000e+00 : f32
    %49 = vector.broadcast %cst_17 : f32 to vector<3x1024xf32>
    %50 = arith.select %48, %31, %49 : vector<3x1024xi1>, vector<3x1024xf32>
    %51 = arith.truncf %50 : vector<3x1024xf32> to vector<3x1024xbf16>
    %c1 = arith.constant 1 : index
    %c0_18 = arith.constant 0 : index
    %c0_19 = arith.constant 0 : index
    %52 = vector.load %arg2[%c1, %c0_18, %c0_19] : memref<9x16x3xbf16, #tpu.memory_space<vmem>>, vector<1x16x3xbf16>
    %53 = vector.shape_cast %52 : vector<1x16x3xbf16> to vector<16x3xbf16>
    %cst_20 = arith.constant dense<0.000000e+00> : vector<16x1024xf32>
    %54 = tpu.matmul %53, %51, %cst_20 {dimension_numbers = #tpu.dot_dimension_numbers<[1], [0], [0], [1], [0, 0, 1, 1], [], []>} : vector<16x3xbf16>, vector<3x1024xbf16>, vector<16x1024xf32> -> vector<16x1024xf32>
    %55 = arith.addf %30, %54 : vector<16x1024xf32>
    %c31_i32_21 = arith.constant 31 : i32
    %56 = tpu.dynamic_rotate %1 by %c31_i32_21 dim 1 : vector<3x1024xf32>, i32 -> vector<3x1024xf32>
    %c-32_i32_22 = arith.constant -32 : i32
    %57 = vector.broadcast %c-32_i32_22 : i32 to vector<3x1024xi32>
    %58 = arith.addi %2, %57 : vector<3x1024xi32>
    %c0_i32_23 = arith.constant 0 : i32
    %59 = vector.broadcast %c0_i32_23 : i32 to vector<3x1024xi32>
    %60 = arith.cmpi sge, %58, %59 : vector<3x1024xi32>
    %c1024_i32_24 = arith.constant 1024 : i32
    %61 = vector.broadcast %c1024_i32_24 : i32 to vector<3x1024xi32>
    %62 = arith.cmpi slt, %58, %61 : vector<3x1024xi32>
    %63 = arith.andi %60, %62 : vector<3x1024xi1>
    %c1_i32 = arith.constant 1 : i32
    %64 = vector.broadcast %c1_i32 : i32 to vector<3x1024xi32>
    %65 = arith.addi %4, %64 : vector<3x1024xi32>
    %c0_i32_25 = arith.constant 0 : i32
    %66 = vector.broadcast %c0_i32_25 : i32 to vector<3x1024xi32>
    %67 = arith.cmpi sge, %65, %66 : vector<3x1024xi32>
    %68 = arith.andi %63, %67 : vector<3x1024xi1>
    %c1_i32_26 = arith.constant 1 : i32
    %69 = vector.broadcast %c1_i32_26 : i32 to vector<3x1024xi32>
    %70 = arith.addi %4, %69 : vector<3x1024xi32>
    %c32_i32_27 = arith.constant 32 : i32
    %71 = vector.broadcast %c32_i32_27 : i32 to vector<3x1024xi32>
    %72 = arith.cmpi slt, %70, %71 : vector<3x1024xi32>
    %73 = arith.andi %68, %72 : vector<3x1024xi1>
    %cst_28 = arith.constant 0.000000e+00 : f32
    %74 = vector.broadcast %cst_28 : f32 to vector<3x1024xf32>
    %75 = arith.select %73, %56, %74 : vector<3x1024xi1>, vector<3x1024xf32>
    %76 = arith.truncf %75 : vector<3x1024xf32> to vector<3x1024xbf16>
    %c2 = arith.constant 2 : index
    %c0_29 = arith.constant 0 : index
    %c0_30 = arith.constant 0 : index
    %77 = vector.load %arg2[%c2, %c0_29, %c0_30] : memref<9x16x3xbf16, #tpu.memory_space<vmem>>, vector<1x16x3xbf16>
    %78 = vector.shape_cast %77 : vector<1x16x3xbf16> to vector<16x3xbf16>
    %cst_31 = arith.constant dense<0.000000e+00> : vector<16x1024xf32>
    %79 = tpu.matmul %78, %76, %cst_31 {dimension_numbers = #tpu.dot_dimension_numbers<[1], [0], [0], [1], [0, 0, 1, 1], [], []>} : vector<16x3xbf16>, vector<3x1024xbf16>, vector<16x1024xf32> -> vector<16x1024xf32>
    %80 = arith.addf %55, %79 : vector<16x1024xf32>
    %c1_i32_32 = arith.constant 1 : i32
    %81 = tpu.dynamic_rotate %1 by %c1_i32_32 dim 1 : vector<3x1024xf32>, i32 -> vector<3x1024xf32>
    %c0_i32_33 = arith.constant 0 : i32
    %82 = vector.broadcast %c0_i32_33 : i32 to vector<3x1024xi32>
    %83 = arith.addi %2, %82 : vector<3x1024xi32>
    %c0_i32_34 = arith.constant 0 : i32
    %84 = vector.broadcast %c0_i32_34 : i32 to vector<3x1024xi32>
    %85 = arith.cmpi sge, %83, %84 : vector<3x1024xi32>
    %c1024_i32_35 = arith.constant 1024 : i32
    %86 = vector.broadcast %c1024_i32_35 : i32 to vector<3x1024xi32>
    %87 = arith.cmpi slt, %83, %86 : vector<3x1024xi32>
    %88 = arith.andi %85, %87 : vector<3x1024xi1>
    %c-1_i32_36 = arith.constant -1 : i32
    %89 = vector.broadcast %c-1_i32_36 : i32 to vector<3x1024xi32>
    %90 = arith.addi %4, %89 : vector<3x1024xi32>
    %c0_i32_37 = arith.constant 0 : i32
    %91 = vector.broadcast %c0_i32_37 : i32 to vector<3x1024xi32>
    %92 = arith.cmpi sge, %90, %91 : vector<3x1024xi32>
    %93 = arith.andi %88, %92 : vector<3x1024xi1>
    %c-1_i32_38 = arith.constant -1 : i32
    %94 = vector.broadcast %c-1_i32_38 : i32 to vector<3x1024xi32>
    %95 = arith.addi %4, %94 : vector<3x1024xi32>
    %c32_i32_39 = arith.constant 32 : i32
    %96 = vector.broadcast %c32_i32_39 : i32 to vector<3x1024xi32>
    %97 = arith.cmpi slt, %95, %96 : vector<3x1024xi32>
    %98 = arith.andi %93, %97 : vector<3x1024xi1>
    %cst_40 = arith.constant 0.000000e+00 : f32
    %99 = vector.broadcast %cst_40 : f32 to vector<3x1024xf32>
    %100 = arith.select %98, %81, %99 : vector<3x1024xi1>, vector<3x1024xf32>
    %101 = arith.truncf %100 : vector<3x1024xf32> to vector<3x1024xbf16>
    %c3 = arith.constant 3 : index
    %c0_41 = arith.constant 0 : index
    %c0_42 = arith.constant 0 : index
    %102 = vector.load %arg2[%c3, %c0_41, %c0_42] : memref<9x16x3xbf16, #tpu.memory_space<vmem>>, vector<1x16x3xbf16>
    %103 = vector.shape_cast %102 : vector<1x16x3xbf16> to vector<16x3xbf16>
    %cst_43 = arith.constant dense<0.000000e+00> : vector<16x1024xf32>
    %104 = tpu.matmul %103, %101, %cst_43 {dimension_numbers = #tpu.dot_dimension_numbers<[1], [0], [0], [1], [0, 0, 1, 1], [], []>} : vector<16x3xbf16>, vector<3x1024xbf16>, vector<16x1024xf32> -> vector<16x1024xf32>
    %105 = arith.addf %80, %104 : vector<16x1024xf32>
    %c0_i32_44 = arith.constant 0 : i32
    %106 = vector.broadcast %c0_i32_44 : i32 to vector<3x1024xi32>
    %107 = arith.addi %2, %106 : vector<3x1024xi32>
    %c0_i32_45 = arith.constant 0 : i32
    %108 = vector.broadcast %c0_i32_45 : i32 to vector<3x1024xi32>
    %109 = arith.cmpi sge, %107, %108 : vector<3x1024xi32>
    %c1024_i32_46 = arith.constant 1024 : i32
    %110 = vector.broadcast %c1024_i32_46 : i32 to vector<3x1024xi32>
    %111 = arith.cmpi slt, %107, %110 : vector<3x1024xi32>
    %112 = arith.andi %109, %111 : vector<3x1024xi1>
    %c0_i32_47 = arith.constant 0 : i32
    %113 = vector.broadcast %c0_i32_47 : i32 to vector<3x1024xi32>
    %114 = arith.addi %4, %113 : vector<3x1024xi32>
    %c0_i32_48 = arith.constant 0 : i32
    %115 = vector.broadcast %c0_i32_48 : i32 to vector<3x1024xi32>
    %116 = arith.cmpi sge, %114, %115 : vector<3x1024xi32>
    %117 = arith.andi %112, %116 : vector<3x1024xi1>
    %c0_i32_49 = arith.constant 0 : i32
    %118 = vector.broadcast %c0_i32_49 : i32 to vector<3x1024xi32>
    %119 = arith.addi %4, %118 : vector<3x1024xi32>
    %c32_i32_50 = arith.constant 32 : i32
    %120 = vector.broadcast %c32_i32_50 : i32 to vector<3x1024xi32>
    %121 = arith.cmpi slt, %119, %120 : vector<3x1024xi32>
    %122 = arith.andi %117, %121 : vector<3x1024xi1>
    %cst_51 = arith.constant 0.000000e+00 : f32
    %123 = vector.broadcast %cst_51 : f32 to vector<3x1024xf32>
    %124 = arith.select %122, %1, %123 : vector<3x1024xi1>, vector<3x1024xf32>
    %125 = arith.truncf %124 : vector<3x1024xf32> to vector<3x1024xbf16>
    %c4 = arith.constant 4 : index
    %c0_52 = arith.constant 0 : index
    %c0_53 = arith.constant 0 : index
    %126 = vector.load %arg2[%c4, %c0_52, %c0_53] : memref<9x16x3xbf16, #tpu.memory_space<vmem>>, vector<1x16x3xbf16>
    %127 = vector.shape_cast %126 : vector<1x16x3xbf16> to vector<16x3xbf16>
    %cst_54 = arith.constant dense<0.000000e+00> : vector<16x1024xf32>
    %128 = tpu.matmul %127, %125, %cst_54 {dimension_numbers = #tpu.dot_dimension_numbers<[1], [0], [0], [1], [0, 0, 1, 1], [], []>} : vector<16x3xbf16>, vector<3x1024xbf16>, vector<16x1024xf32> -> vector<16x1024xf32>
    %129 = arith.addf %105, %128 : vector<16x1024xf32>
    %c1023_i32 = arith.constant 1023 : i32
    %130 = tpu.dynamic_rotate %1 by %c1023_i32 dim 1 : vector<3x1024xf32>, i32 -> vector<3x1024xf32>
    %c0_i32_55 = arith.constant 0 : i32
    %131 = vector.broadcast %c0_i32_55 : i32 to vector<3x1024xi32>
    %132 = arith.addi %2, %131 : vector<3x1024xi32>
    %c0_i32_56 = arith.constant 0 : i32
    %133 = vector.broadcast %c0_i32_56 : i32 to vector<3x1024xi32>
    %134 = arith.cmpi sge, %132, %133 : vector<3x1024xi32>
    %c1024_i32_57 = arith.constant 1024 : i32
    %135 = vector.broadcast %c1024_i32_57 : i32 to vector<3x1024xi32>
    %136 = arith.cmpi slt, %132, %135 : vector<3x1024xi32>
    %137 = arith.andi %134, %136 : vector<3x1024xi1>
    %c1_i32_58 = arith.constant 1 : i32
    %138 = vector.broadcast %c1_i32_58 : i32 to vector<3x1024xi32>
    %139 = arith.addi %4, %138 : vector<3x1024xi32>
    %c0_i32_59 = arith.constant 0 : i32
    %140 = vector.broadcast %c0_i32_59 : i32 to vector<3x1024xi32>
    %141 = arith.cmpi sge, %139, %140 : vector<3x1024xi32>
    %142 = arith.andi %137, %141 : vector<3x1024xi1>
    %c1_i32_60 = arith.constant 1 : i32
    %143 = vector.broadcast %c1_i32_60 : i32 to vector<3x1024xi32>
    %144 = arith.addi %4, %143 : vector<3x1024xi32>
    %c32_i32_61 = arith.constant 32 : i32
    %145 = vector.broadcast %c32_i32_61 : i32 to vector<3x1024xi32>
    %146 = arith.cmpi slt, %144, %145 : vector<3x1024xi32>
    %147 = arith.andi %142, %146 : vector<3x1024xi1>
    %cst_62 = arith.constant 0.000000e+00 : f32
    %148 = vector.broadcast %cst_62 : f32 to vector<3x1024xf32>
    %149 = arith.select %147, %130, %148 : vector<3x1024xi1>, vector<3x1024xf32>
    %150 = arith.truncf %149 : vector<3x1024xf32> to vector<3x1024xbf16>
    %c5 = arith.constant 5 : index
    %c0_63 = arith.constant 0 : index
    %c0_64 = arith.constant 0 : index
    %151 = vector.load %arg2[%c5, %c0_63, %c0_64] : memref<9x16x3xbf16, #tpu.memory_space<vmem>>, vector<1x16x3xbf16>
    %152 = vector.shape_cast %151 : vector<1x16x3xbf16> to vector<16x3xbf16>
    %cst_65 = arith.constant dense<0.000000e+00> : vector<16x1024xf32>
    %153 = tpu.matmul %152, %150, %cst_65 {dimension_numbers = #tpu.dot_dimension_numbers<[1], [0], [0], [1], [0, 0, 1, 1], [], []>} : vector<16x3xbf16>, vector<3x1024xbf16>, vector<16x1024xf32> -> vector<16x1024xf32>
    %154 = arith.addf %129, %153 : vector<16x1024xf32>
    %c993_i32 = arith.constant 993 : i32
    %155 = tpu.dynamic_rotate %1 by %c993_i32 dim 1 : vector<3x1024xf32>, i32 -> vector<3x1024xf32>
    %c32_i32_66 = arith.constant 32 : i32
    %156 = vector.broadcast %c32_i32_66 : i32 to vector<3x1024xi32>
    %157 = arith.addi %2, %156 : vector<3x1024xi32>
    %c0_i32_67 = arith.constant 0 : i32
    %158 = vector.broadcast %c0_i32_67 : i32 to vector<3x1024xi32>
    %159 = arith.cmpi sge, %157, %158 : vector<3x1024xi32>
    %c1024_i32_68 = arith.constant 1024 : i32
    %160 = vector.broadcast %c1024_i32_68 : i32 to vector<3x1024xi32>
    %161 = arith.cmpi slt, %157, %160 : vector<3x1024xi32>
    %162 = arith.andi %159, %161 : vector<3x1024xi1>
    %c-1_i32_69 = arith.constant -1 : i32
    %163 = vector.broadcast %c-1_i32_69 : i32 to vector<3x1024xi32>
    %164 = arith.addi %4, %163 : vector<3x1024xi32>
    %c0_i32_70 = arith.constant 0 : i32
    %165 = vector.broadcast %c0_i32_70 : i32 to vector<3x1024xi32>
    %166 = arith.cmpi sge, %164, %165 : vector<3x1024xi32>
    %167 = arith.andi %162, %166 : vector<3x1024xi1>
    %c-1_i32_71 = arith.constant -1 : i32
    %168 = vector.broadcast %c-1_i32_71 : i32 to vector<3x1024xi32>
    %169 = arith.addi %4, %168 : vector<3x1024xi32>
    %c32_i32_72 = arith.constant 32 : i32
    %170 = vector.broadcast %c32_i32_72 : i32 to vector<3x1024xi32>
    %171 = arith.cmpi slt, %169, %170 : vector<3x1024xi32>
    %172 = arith.andi %167, %171 : vector<3x1024xi1>
    %cst_73 = arith.constant 0.000000e+00 : f32
    %173 = vector.broadcast %cst_73 : f32 to vector<3x1024xf32>
    %174 = arith.select %172, %155, %173 : vector<3x1024xi1>, vector<3x1024xf32>
    %175 = arith.truncf %174 : vector<3x1024xf32> to vector<3x1024xbf16>
    %c6 = arith.constant 6 : index
    %c0_74 = arith.constant 0 : index
    %c0_75 = arith.constant 0 : index
    %176 = vector.load %arg2[%c6, %c0_74, %c0_75] : memref<9x16x3xbf16, #tpu.memory_space<vmem>>, vector<1x16x3xbf16>
    %177 = vector.shape_cast %176 : vector<1x16x3xbf16> to vector<16x3xbf16>
    %cst_76 = arith.constant dense<0.000000e+00> : vector<16x1024xf32>
    %178 = tpu.matmul %177, %175, %cst_76 {dimension_numbers = #tpu.dot_dimension_numbers<[1], [0], [0], [1], [0, 0, 1, 1], [], []>} : vector<16x3xbf16>, vector<3x1024xbf16>, vector<16x1024xf32> -> vector<16x1024xf32>
    %179 = arith.addf %154, %178 : vector<16x1024xf32>
    %c992_i32 = arith.constant 992 : i32
    %180 = tpu.dynamic_rotate %1 by %c992_i32 dim 1 : vector<3x1024xf32>, i32 -> vector<3x1024xf32>
    %c32_i32_77 = arith.constant 32 : i32
    %181 = vector.broadcast %c32_i32_77 : i32 to vector<3x1024xi32>
    %182 = arith.addi %2, %181 : vector<3x1024xi32>
    %c0_i32_78 = arith.constant 0 : i32
    %183 = vector.broadcast %c0_i32_78 : i32 to vector<3x1024xi32>
    %184 = arith.cmpi sge, %182, %183 : vector<3x1024xi32>
    %c1024_i32_79 = arith.constant 1024 : i32
    %185 = vector.broadcast %c1024_i32_79 : i32 to vector<3x1024xi32>
    %186 = arith.cmpi slt, %182, %185 : vector<3x1024xi32>
    %187 = arith.andi %184, %186 : vector<3x1024xi1>
    %c0_i32_80 = arith.constant 0 : i32
    %188 = vector.broadcast %c0_i32_80 : i32 to vector<3x1024xi32>
    %189 = arith.addi %4, %188 : vector<3x1024xi32>
    %c0_i32_81 = arith.constant 0 : i32
    %190 = vector.broadcast %c0_i32_81 : i32 to vector<3x1024xi32>
    %191 = arith.cmpi sge, %189, %190 : vector<3x1024xi32>
    %192 = arith.andi %187, %191 : vector<3x1024xi1>
    %c0_i32_82 = arith.constant 0 : i32
    %193 = vector.broadcast %c0_i32_82 : i32 to vector<3x1024xi32>
    %194 = arith.addi %4, %193 : vector<3x1024xi32>
    %c32_i32_83 = arith.constant 32 : i32
    %195 = vector.broadcast %c32_i32_83 : i32 to vector<3x1024xi32>
    %196 = arith.cmpi slt, %194, %195 : vector<3x1024xi32>
    %197 = arith.andi %192, %196 : vector<3x1024xi1>
    %cst_84 = arith.constant 0.000000e+00 : f32
    %198 = vector.broadcast %cst_84 : f32 to vector<3x1024xf32>
    %199 = arith.select %197, %180, %198 : vector<3x1024xi1>, vector<3x1024xf32>
    %200 = arith.truncf %199 : vector<3x1024xf32> to vector<3x1024xbf16>
    %c7 = arith.constant 7 : index
    %c0_85 = arith.constant 0 : index
    %c0_86 = arith.constant 0 : index
    %201 = vector.load %arg2[%c7, %c0_85, %c0_86] : memref<9x16x3xbf16, #tpu.memory_space<vmem>>, vector<1x16x3xbf16>
    %202 = vector.shape_cast %201 : vector<1x16x3xbf16> to vector<16x3xbf16>
    %cst_87 = arith.constant dense<0.000000e+00> : vector<16x1024xf32>
    %203 = tpu.matmul %202, %200, %cst_87 {dimension_numbers = #tpu.dot_dimension_numbers<[1], [0], [0], [1], [0, 0, 1, 1], [], []>} : vector<16x3xbf16>, vector<3x1024xbf16>, vector<16x1024xf32> -> vector<16x1024xf32>
    %204 = arith.addf %179, %203 : vector<16x1024xf32>
    %c991_i32 = arith.constant 991 : i32
    %205 = tpu.dynamic_rotate %1 by %c991_i32 dim 1 : vector<3x1024xf32>, i32 -> vector<3x1024xf32>
    %c32_i32_88 = arith.constant 32 : i32
    %206 = vector.broadcast %c32_i32_88 : i32 to vector<3x1024xi32>
    %207 = arith.addi %2, %206 : vector<3x1024xi32>
    %c0_i32_89 = arith.constant 0 : i32
    %208 = vector.broadcast %c0_i32_89 : i32 to vector<3x1024xi32>
    %209 = arith.cmpi sge, %207, %208 : vector<3x1024xi32>
    %c1024_i32_90 = arith.constant 1024 : i32
    %210 = vector.broadcast %c1024_i32_90 : i32 to vector<3x1024xi32>
    %211 = arith.cmpi slt, %207, %210 : vector<3x1024xi32>
    %212 = arith.andi %209, %211 : vector<3x1024xi1>
    %c1_i32_91 = arith.constant 1 : i32
    %213 = vector.broadcast %c1_i32_91 : i32 to vector<3x1024xi32>
    %214 = arith.addi %4, %213 : vector<3x1024xi32>
    %c0_i32_92 = arith.constant 0 : i32
    %215 = vector.broadcast %c0_i32_92 : i32 to vector<3x1024xi32>
    %216 = arith.cmpi sge, %214, %215 : vector<3x1024xi32>
    %217 = arith.andi %212, %216 : vector<3x1024xi1>
    %c1_i32_93 = arith.constant 1 : i32
    %218 = vector.broadcast %c1_i32_93 : i32 to vector<3x1024xi32>
    %219 = arith.addi %4, %218 : vector<3x1024xi32>
    %c32_i32_94 = arith.constant 32 : i32
    %220 = vector.broadcast %c32_i32_94 : i32 to vector<3x1024xi32>
    %221 = arith.cmpi slt, %219, %220 : vector<3x1024xi32>
    %222 = arith.andi %217, %221 : vector<3x1024xi1>
    %cst_95 = arith.constant 0.000000e+00 : f32
    %223 = vector.broadcast %cst_95 : f32 to vector<3x1024xf32>
    %224 = arith.select %222, %205, %223 : vector<3x1024xi1>, vector<3x1024xf32>
    %225 = arith.truncf %224 : vector<3x1024xf32> to vector<3x1024xbf16>
    %c8 = arith.constant 8 : index
    %c0_96 = arith.constant 0 : index
    %c0_97 = arith.constant 0 : index
    %226 = vector.load %arg2[%c8, %c0_96, %c0_97] : memref<9x16x3xbf16, #tpu.memory_space<vmem>>, vector<1x16x3xbf16>
    %227 = vector.shape_cast %226 : vector<1x16x3xbf16> to vector<16x3xbf16>
    %cst_98 = arith.constant dense<0.000000e+00> : vector<16x1024xf32>
    %228 = tpu.matmul %227, %225, %cst_98 {dimension_numbers = #tpu.dot_dimension_numbers<[1], [0], [0], [1], [0, 0, 1, 1], [], []>} : vector<16x3xbf16>, vector<3x1024xbf16>, vector<16x1024xf32> -> vector<16x1024xf32>
    %229 = arith.addf %204, %228 : vector<16x1024xf32>
    %c0_99 = arith.constant 0 : index
    %c0_100 = arith.constant 0 : index
    %230 = vector.load %arg3[%c0_99, %c0_100] : memref<16x1xf32, #tpu.memory_space<vmem>>, vector<16x1xf32>
    %231 = vector.broadcast %230 : vector<16x1xf32> to vector<16x1024xf32>
    %232 = arith.addf %229, %231 : vector<16x1024xf32>
    %cst_101 = arith.constant 0.000000e+00 : f32
    %233 = vector.broadcast %cst_101 : f32 to vector<16x1024xf32>
    %234 = arith.maximumf %232, %233 : vector<16x1024xf32>
    %c0_102 = arith.constant 0 : index
    %c0_103 = arith.constant 0 : index
    %c0_104 = arith.constant 0 : index
    %235 = vector.load %arg4[%c0_102, %c0_103, %c0_104] : memref<1x16x1024xf32, #tpu.memory_space<vmem>>, vector<1x16x1024xf32>
    %236 = vector.shape_cast %235 : vector<1x16x1024xf32> to vector<16x1024xf32>
    %237 = vector.shape_cast %234 : vector<16x1024xf32> to vector<1x16x1024xf32>
    tpu.vector_store %arg4[%c0_102, %c0_103, %c0_104], %237 {strides = array<i32>} : memref<1x16x1024xf32, #tpu.memory_space<vmem>>, vector<1x16x1024xf32>,
    return
  }
  func.func @transform_0(%arg0: i32) -> (i32, i32, i32) {
    %c0_i32 = arith.constant 0 : i32
    %c0_i32_0 = arith.constant 0 : i32
    %c0_i32_1 = arith.constant 0 : i32
    return %arg0, %c0_i32, %c0_i32_0 : i32, i32, i32
  }
  func.func @transform_1(%arg0: i32) -> (i32, i32, i32) {
    %c0_i32 = arith.constant 0 : i32
    %c0_i32_0 = arith.constant 0 : i32
    %c0_i32_1 = arith.constant 0 : i32
    %c0_i32_2 = arith.constant 0 : i32
    return %c0_i32, %c0_i32_0, %c0_i32_1 : i32, i32, i32
  }
  func.func @transform_2(%arg0: i32) -> (i32, i32) {
    %c0_i32 = arith.constant 0 : i32
    %c0_i32_0 = arith.constant 0 : i32
    %c0_i32_1 = arith.constant 0 : i32
    return %c0_i32, %c0_i32_0 : i32, i32
  }
  func.func @transform_3(%arg0: i32) -> (i32, i32, i32) {
    %c0_i32 = arith.constant 0 : i32
    %c0_i32_0 = arith.constant 0 : i32
    %c0_i32_1 = arith.constant 0 : i32
    return %arg0, %c0_i32, %c0_i32_0 : i32, i32, i32
  }
}

</mosaic_0001>

<llo_original>
// kernel: tpu_custom_call.1
$region0: #{tpu_custom_call.1}
  #allocation0 [shape = 'u32[]', space=smem, size = 0x4, offset = 0x4, fixed_abs, tag = 'smem constant byte address 0x4 - core index']
  #allocation1 [shape = 'u32[144,128]{1,0:T(1,128)}', space=vmem, size = 0x12000, scoped, tag = 'internal scratch']
  %s0 = inlined_call_operand.vmem [shape: f32[4,3,1024], index: 0, kind: input, shape index: {}]
  %s1 = inlined_call_operand.vmem [shape: bf16[9,16,3], index: 1, kind: input, shape index: {}]
  %s2 = inlined_call_operand.vmem [shape: f32[16,1], index: 2, kind: input, shape index: {}]
  %s3 = inlined_call_operand.hbm [shape: f32[4,16,1024], index: 3, kind: output, shape index: {}]
  %s4 = sld [smem:[#allocation0]]
  $region45: #{tpu_custom_call.1} parent=0
    _
  %s6 = ssub.s32 1, %s4
  %s7 = scalar_select 0, %s6, %s4
  $region1: #{tpu_custom_call.1} parent=0
    #allocation2 [shape = 'u8[131072]{0}', space=vmem, size = 0x20000, scoped, tag = 'output window, operand 0']
    #allocation3 [shape = 's32[2]{0}', space=sflag, size = 0x8, scoped, tag = 'scoped memory for tpu_custom_call.1']
    %8 = vsyncpa [#allocation3], 0
    %s9 = scalar_lea.sflag [#allocation3], 1
    %10 = vsyncpa %s9, 0
    loop: start=0, step=1, limit=6
    $region2: #{tpu_custom_call.1} parent=1 // loop_pre_header
      _
    $region3: #{tpu_custom_call.1} parent=1 // loop_header
      %s12 = sphi 0, %s16
      %p13 = scmp.ge.s32.totalorder %s12, 6
      %s22 = sphi 0, %s24
      %s25 = sphi 0, %s22
      %s26 = sphi 0, %s25
      %s42 = sphi 0, %s26
      %s46 = sphi 0, %s46
      %s48 = sphi 0, %s46
      %s49 = sphi 0, %s48
      %s63 = sphi 0, %s49
      %s67 = sphi 0, %s67
      %s69 = sphi 0, %s67
      %s70 = sphi 0, %s69
      %s84 = sphi 0, %s70
      %s90 = sphi 0, %s92
      %s93 = sphi 0, %s90
      %s94 = sphi 0, %s93
      %s110 = sphi 0, %s94
    $region4: #{tpu_custom_call.1} parent=1 // loop_header_branch
      %15 = sbr.rel (%p13) target = $region8
    $region5: #{tpu_custom_call.1} parent=1 // loop_body
      %s17 = ssub.s32 %s12, 1
      %s18 = ssub.s32 %s12, 2
      %s19 = sadd.s32 %s12, 1
      %s20 = ssub.s32 %s12, %s19
      %p21 = scmp.eq.s32.totalorder %s20, 0
      %s23 = sadd.s32 %s22, 1
      %s24 = scalar_select %p21, %s22, %s23
      %p27 = pneg %p21
      %p28 = scmp.eq.s32.totalorder %s12, 3
      %p29 = por %p27, %p28
      %p30 = scmp.ne.s32.totalorder %s22, %s25
      %p31 = scmp.eq.s32.totalorder %s12, 0
      %p32 = por %p30, %p31
      %p33 = scmp.ne.s32.totalorder %s22, %s25
      %p34 = scmp.eq.s32.totalorder %s17, 3
      %p35 = por %p33, %p34
      %p36 = scmp.ne.s32.totalorder %s25, %s26
      %p37 = scmp.eq.s32.totalorder %s17, 0
      %p38 = por %p36, %p37
      %p39 = scmp.ne.s32.totalorder %s25, %s26
      %p40 = scmp.eq.s32.totalorder %s18, 3
      %p41 = por %p39, %p40
      %p43 = scmp.ne.s32.totalorder %s26, %s42
      %p44 = scmp.eq.s32.totalorder %s18, 0
      %p45 = por %p43, %p44
      %s47 = sadd.s32 %s46, 1
      %p50 = scmp.eq.s32.totalorder %s12, 3
      %p51 = scmp.ne.s32.totalorder %s46, %s48
      %p52 = scmp.eq.s32.totalorder %s12, 0
      %p53 = por %p51, %p52
      %p54 = scmp.ne.s32.totalorder %s46, %s48
      %p55 = scmp.eq.s32.totalorder %s17, 3
      %p56 = por %p54, %p55
      %p57 = scmp.ne.s32.totalorder %s48, %s49
      %p58 = scmp.eq.s32.totalorder %s17, 0
      %p59 = por %p57, %p58
      %p60 = scmp.ne.s32.totalorder %s48, %s49
      %p61 = scmp.eq.s32.totalorder %s18, 3
      %p62 = por %p60, %p61
      %p64 = scmp.ne.s32.totalorder %s49, %s63
      %p65 = scmp.eq.s32.totalorder %s18, 0
      %p66 = por %p64, %p65
      %s68 = sadd.s32 %s67, 1
      %p71 = scmp.eq.s32.totalorder %s12, 3
      %p72 = scmp.ne.s32.totalorder %s67, %s69
      %p73 = scmp.eq.s32.totalorder %s12, 0
      %p74 = por %p72, %p73
      %p75 = scmp.ne.s32.totalorder %s67, %s69
      %p76 = scmp.eq.s32.totalorder %s17, 3
      %p77 = por %p75, %p76
      %p78 = scmp.ne.s32.totalorder %s69, %s70
      %p79 = scmp.eq.s32.totalorder %s17, 0
      %p80 = por %p78, %p79
      %p81 = scmp.ne.s32.totalorder %s69, %s70
      %p82 = scmp.eq.s32.totalorder %s18, 3
      %p83 = por %p81, %p82
      %p85 = scmp.ne.s32.totalorder %s70, %s84
      %p86 = scmp.eq.s32.totalorder %s18, 0
      %p87 = por %p85, %p86
      %s88 = ssub.s32 %s12, %s19
      %p89 = scmp.eq.s32.totalorder %s88, 0
      %s91 = sadd.s32 %s90, 1
      %s92 = scalar_select %p89, %s90, %s91
      %p95 = pneg %p89
      %p96 = scmp.eq.s32.totalorder %s12, 3
      %p97 = por %p95, %p96
      %p98 = scmp.ne.s32.totalorder %s90, %s93
      %p99 = scmp.eq.s32.totalorder %s12, 0
      %p100 = por %p98, %p99
      %p101 = scmp.ne.s32.totalorder %s90, %s93
      %p102 = scmp.eq.s32.totalorder %s17, 3
      %p103 = por %p101, %p102
      %p104 = scmp.ne.s32.totalorder %s93, %s94
      %p105 = scmp.eq.s32.totalorder %s17, 0
      %p106 = por %p104, %p105
      %p107 = scmp.ne.s32.totalorder %s93, %s94
      %p108 = scmp.eq.s32.totalorder %s18, 3
      %p109 = por %p107, %p108
      %p111 = scmp.ne.s32.totalorder %s94, %s110
      %p112 = scmp.eq.s32.totalorder %s18, 0
      %p113 = por %p111, %p112
      %p114 = scmp.le.s32.totalorder 1, %s12
      %p115 = scmp.lt.s32.totalorder %s12, 5
      %p116 = pnand %p114, %p115
      %p117 = pneg %p116
      // Predicated region
      $region9: #{tpu_custom_call.1} parent=5 // pred_check
        _
      $region10: #{tpu_custom_call.1} parent=5 // pred_check_branch
        %119 = sbr.rel (%p116) target = $region12
      $region11: #{tpu_custom_call.1} parent=5 // pred_region
        %s120 = ssub.s32 %s12, 1
        // Predicated region
        $region13: #{tpu_custom_call.1} parent=11 // pred_check
          %p121 = pneg %p59
        $region14: #{tpu_custom_call.1} parent=11 // pred_check_branch
          %123 = sbr.rel (%p121) target = $region16
        $region15: #{tpu_custom_call.1} parent=11 // pred_region
          _
        $region16: #{tpu_custom_call.1} parent=11 // pred_fallthru
          _
        // Predicated region
        $region17: #{tpu_custom_call.1} parent=11 // pred_check
          %p124 = pneg %p80
        $region18: #{tpu_custom_call.1} parent=11 // pred_check_branch
          %126 = sbr.rel (%p124) target = $region20
        $region19: #{tpu_custom_call.1} parent=11 // pred_region
          _
        $region20: #{tpu_custom_call.1} parent=11 // pred_fallthru
          _
      $region12: #{tpu_custom_call.1} parent=5 // pred_fallthru
        _
      %p127 = scmp.lt.s32.totalorder %s12, 4
      // Predicated region
      $region21: #{tpu_custom_call.1} parent=5 // pred_check
        %p128 = pneg %p127
      $region22: #{tpu_custom_call.1} parent=5 // pred_check_branch
        %130 = sbr.rel (%p128) target = $region24
      $region23: #{tpu_custom_call.1} parent=5 // pred_region
        // Predicated region
        $region25: #{tpu_custom_call.1} parent=23 // pred_check
          %p131 = pneg %p32
        $region26: #{tpu_custom_call.1} parent=23 // pred_check_branch
          %133 = sbr.rel (%p131) target = $region28
        $region27: #{tpu_custom_call.1} parent=23 // pred_region
          %p134 = scmp.lt.s32.totalorder %s12, 3
          %s135 = scalar_select %p134, %s12, 3
          %s136 = smul.addr %s135, 8
          %s137 = smul.addr %s136, 4
          %s138 = scalar_lea.vmem %s0, %s137
        $region28: #{tpu_custom_call.1} parent=23 // pred_fallthru
          _
      $region24: #{tpu_custom_call.1} parent=5 // pred_fallthru
        _
      %p139 = scmp.le.s32.totalorder 1, %s12
      %p140 = scmp.lt.s32.totalorder %s12, 5
      %p141 = pnand %p139, %p140
      %p142 = pneg %p141
      // Predicated region
      $region29: #{tpu_custom_call.1} parent=5 // pred_check
        _
      $region30: #{tpu_custom_call.1} parent=5 // pred_check_branch
        %144 = sbr.rel (%p141) target = $region32
      $region31: #{tpu_custom_call.1} parent=5 // pred_region
        %s145 = ssub.s32 %s12, 1
        %p146 = scmp.lt.s32.totalorder %s17, 3
        %s147 = scalar_select %p146, %s17, 3
        %s148 = smul.addr %s147, 8
        %s149 = smul.addr %s148, 4
        %s150 = scalar_lea.vmem %s0, %s149
        %p151 = pneg %p38
        %p152 = pneg %p35
        %p153 = pneg %p59
        %p154 = pneg %p56
        %p155 = pneg %p80
        %p156 = pneg %p77
        %p157 = pneg %p106
        %p158 = pneg %p103
        %s159 = sand.u32 %s93, 1
        %s160 = scalar_lea.sflag [#allocation3], %s159
        %s161 = sand.u32 %s93, 1
        %s162 = smul.addr %s161, 128
        %s163 = scalar_lea.vmem [#allocation2], %s162
        %p164 = scmp.lt.s32.totalorder %s17, 3
        %s165 = scalar_select %p164, %s17, 3
        %s166 = smul.addr %s165, 8
        %s167 = smul.addr %s166, 4
        %s168 = scalar_lea.vmem %s0, %s167
        %v170 = vld [vmem:[%s168] sm:$0x77]
        %v171 = vld [vmem:[%s168 + $0x8] sm:$0x77]
        %v172 = vld [vmem:[%s168 + $0x10] sm:$0x77]
        %v173 = vld [vmem:[%s168 + $0x18] sm:$0x77]
        %v174 = vlaneseq
        %v175 = vand.u32 %v174, 127
        %v176 = vadd.s32 %v175, 128
        %v177 = vadd.s32 %v175, 256
        %v178 = vadd.s32 %v175, 384
        %v179 = vadd.s32 %v175, 512
        %v180 = vadd.s32 %v175, 640
        %v181 = vadd.s32 %v175, 768
        %v182 = vadd.s32 %v175, 896
        %v183 = vand.u32 %v175, 31
        %v184 = vand.u32 %v176, 31
        %v185 = vand.u32 %v177, 31
        %v186 = vand.u32 %v178, 31
        %v187 = vand.u32 %v179, 31
        %v188 = vand.u32 %v180, 31
        %v189 = vand.u32 %v181, 31
        %v190 = vand.u32 %v182, 31
        %v195 = vcombine.high %v170, %v170
        %v196 = vcombine.high %v171, %v171
        %v197 = vcombine.high %v172, %v172
        %v198 = vcombine.high %v173, %v173
        %203 = vrot.lane.b32.xlu0 %v170, 33
        %v204 = vpop.permute.xlu0 %203
        %205 = vrot.lane.b32.xlu0 %v195, 33
        %v206 = vpop.permute.xlu0 %205
        %207 = vrot.lane.b32.xlu0 %v171, 33
        %v208 = vpop.permute.xlu0 %207
        %209 = vrot.lane.b32.xlu0 %v196, 33
        %v210 = vpop.permute.xlu0 %209
        %211 = vrot.lane.b32.xlu0 %v172, 33
        %v212 = vpop.permute.xlu0 %211
        %213 = vrot.lane.b32.xlu0 %v197, 33
        %v214 = vpop.permute.xlu0 %213
        %215 = vrot.lane.b32.xlu0 %v173, 33
        %v216 = vpop.permute.xlu0 %215
        %217 = vrot.lane.b32.xlu0 %v198, 33
        %v218 = vpop.permute.xlu0 %217
        %vm219 = vcmp.lt.s32.totalorder %v175, 33
        %v220 = vsel %vm219, %v216, %v218
        %v221 = vsel %vm219, %v214, %v216
        %v222 = vsel %vm219, %v212, %v214
        %v223 = vsel %vm219, %v210, %v212
        %v224 = vsel %vm219, %v208, %v210
        %v225 = vsel %vm219, %v206, %v208
        %v226 = vsel %vm219, %v204, %v206
        %v227 = vsel %vm219, %v218, %v204
        %v228 = vadd.s32 %v175, 4294967264
        %v229 = vadd.s32 %v176, 4294967264
        %v230 = vadd.s32 %v177, 4294967264
        %v231 = vadd.s32 %v178, 4294967264
        %v232 = vadd.s32 %v179, 4294967264
        %v233 = vadd.s32 %v180, 4294967264
        %v234 = vadd.s32 %v181, 4294967264
        %v235 = vadd.s32 %v182, 4294967264
        %vm236 = vcmp.ge.s32.totalorder %v228, 0
        %vm237 = vcmp.ge.s32.totalorder %v229, 0
        %vm238 = vcmp.ge.s32.totalorder %v230, 0
        %vm239 = vcmp.ge.s32.totalorder %v231, 0
        %vm240 = vcmp.ge.s32.totalorder %v232, 0
        %vm241 = vcmp.ge.s32.totalorder %v233, 0
        %vm242 = vcmp.ge.s32.totalorder %v234, 0
        %vm243 = vcmp.ge.s32.totalorder %v235, 0
        %vm244 = vcmp.lt.s32.totalorder %v228, 1024
        %vm245 = vcmp.lt.s32.totalorder %v229, 1024
        %vm246 = vcmp.lt.s32.totalorder %v230, 1024
        %vm247 = vcmp.lt.s32.totalorder %v231, 1024
        %vm248 = vcmp.lt.s32.totalorder %v232, 1024
        %vm249 = vcmp.lt.s32.totalorder %v233, 1024
        %vm250 = vcmp.lt.s32.totalorder %v234, 1024
        %vm251 = vcmp.lt.s32.totalorder %v235, 1024
        %vm252 = vmand %vm236, %vm244
        %vm253 = vmand %vm237, %vm245
        %vm254 = vmand %vm238, %vm246
        %vm255 = vmand %vm239, %vm247
        %vm256 = vmand %vm240, %vm248
        %vm257 = vmand %vm241, %vm249
        %vm258 = vmand %vm242, %vm250
        %vm259 = vmand %vm243, %vm251
        %v260 = vadd.s32 %v183, 4294967295
        %v261 = vadd.s32 %v184, 4294967295
        %v262 = vadd.s32 %v185, 4294967295
        %v263 = vadd.s32 %v186, 4294967295
        %v264 = vadd.s32 %v187, 4294967295
        %v265 = vadd.s32 %v188, 4294967295
        %v266 = vadd.s32 %v189, 4294967295
        %v267 = vadd.s32 %v190, 4294967295
        %vm268 = vcmp.ge.s32.totalorder %v260, 0
        %vm269 = vcmp.ge.s32.totalorder %v261, 0
        %vm270 = vcmp.ge.s32.totalorder %v262, 0
        %vm271 = vcmp.ge.s32.totalorder %v263, 0
        %vm272 = vcmp.ge.s32.totalorder %v264, 0
        %vm273 = vcmp.ge.s32.totalorder %v265, 0
        %vm274 = vcmp.ge.s32.totalorder %v266, 0
        %vm275 = vcmp.ge.s32.totalorder %v267, 0
        %vm276 = vmand %vm252, %vm268
        %vm277 = vmand %vm253, %vm269
        %vm278 = vmand %vm254, %vm270
        %vm279 = vmand %vm255, %vm271
        %vm280 = vmand %vm256, %vm272
        %vm281 = vmand %vm257, %vm273
        %vm282 = vmand %vm258, %vm274
        %vm283 = vmand %vm259, %vm275
        %vm284 = vcmp.lt.s32.totalorder %v260, 32
        %vm285 = vcmp.lt.s32.totalorder %v261, 32
        %vm286 = vcmp.lt.s32.totalorder %v262, 32
        %vm287 = vcmp.lt.s32.totalorder %v263, 32
        %vm288 = vcmp.lt.s32.totalorder %v264, 32
        %vm289 = vcmp.lt.s32.totalorder %v265, 32
        %vm290 = vcmp.lt.s32.totalorder %v266, 32
        %vm291 = vcmp.lt.s32.totalorder %v267, 32
        %vm292 = vmand %vm276, %vm284
        %vm293 = vmand %vm277, %vm285
        %vm294 = vmand %vm278, %vm286
        %vm295 = vmand %vm279, %vm287
        %vm296 = vmand %vm280, %vm288
        %vm297 = vmand %vm281, %vm289
        %vm298 = vmand %vm282, %vm290
        %vm299 = vmand %vm283, %vm291
        %v300 = vsel %vm292, %v227, 0.0
        %v301 = vsel %vm293, %v226, 0.0
        %v302 = vsel %vm294, %v225, 0.0
        %v303 = vsel %vm295, %v224, 0.0
        %v304 = vsel %vm296, %v223, 0.0
        %v305 = vsel %vm297, %v222, 0.0
        %v306 = vsel %vm298, %v221, 0.0
        %v307 = vsel %vm299, %v220, 0.0
        %v308 = vpack.c.bf16 %v300, %v300
        %v309 = vpack.c.bf16 %v301, %v301
        %v310 = vpack.c.bf16 %v302, %v302
        %v311 = vpack.c.bf16 %v303, %v303
        %v312 = vpack.c.bf16 %v304, %v304
        %v313 = vpack.c.bf16 %v305, %v305
        %v314 = vpack.c.bf16 %v306, %v306
        %v315 = vpack.c.bf16 %v307, %v307
        %v316 = vld [vmem:[%s1] sm:$0xf]
        %v317 = vld [vmem:[%s1 + $0x4] sm:$0xf]
        %318 = vrot.lane.b32.xlu0 %v170, 32
        %v319 = vpop.permute.xlu0 %318
        %320 = vrot.lane.b32.xlu0 %v195, 32
        %v321 = vpop.permute.xlu0 %320
        %322 = vrot.lane.b32.xlu0 %v171, 32
        %v323 = vpop.permute.xlu0 %322
        %324 = vrot.lane.b32.xlu0 %v196, 32
        %v325 = vpop.permute.xlu0 %324
        %326 = vrot.lane.b32.xlu0 %v172, 32
        %v327 = vpop.permute.xlu0 %326
        %328 = vrot.lane.b32.xlu0 %v197, 32
        %v329 = vpop.permute.xlu0 %328
        %330 = vrot.lane.b32.xlu0 %v173, 32
        %v331 = vpop.permute.xlu0 %330
        %332 = vrot.lane.b32.xlu0 %v198, 32
        %v333 = vpop.permute.xlu0 %332
        %vm334 = vcmp.lt.s32.totalorder %v175, 32
        %v335 = vsel %vm334, %v331, %v333
        %v336 = vsel %vm334, %v329, %v331
        %v337 = vsel %vm334, %v327, %v329
        %v338 = vsel %vm334, %v325, %v327
        %v339 = vsel %vm334, %v323, %v325
        %v340 = vsel %vm334, %v321, %v323
        %v341 = vsel %vm334, %v319, %v321
        %v342 = vsel %vm334, %v333, %v319
        %vm343 = vcmp.ge.s32.totalorder %v183, 0
        %vm344 = vcmp.ge.s32.totalorder %v184, 0
        %vm345 = vcmp.ge.s32.totalorder %v185, 0
        %vm346 = vcmp.ge.s32.totalorder %v186, 0
        %vm347 = vcmp.ge.s32.totalorder %v187, 0
        %vm348 = vcmp.ge.s32.totalorder %v188, 0
        %vm349 = vcmp.ge.s32.totalorder %v189, 0
        %vm350 = vcmp.ge.s32.totalorder %v190, 0
        %vm351 = vmand %vm252, %vm343
        %vm352 = vmand %vm253, %vm344
        %vm353 = vmand %vm254, %vm345
        %vm354 = vmand %vm255, %vm346
        %vm355 = vmand %vm256, %vm347
        %vm356 = vmand %vm257, %vm348
        %vm357 = vmand %vm258, %vm349
        %vm358 = vmand %vm259, %vm350
        %vm359 = vcmp.lt.s32.totalorder %v183, 32
        %vm360 = vcmp.lt.s32.totalorder %v184, 32
        %vm361 = vcmp.lt.s32.totalorder %v185, 32
        %vm362 = vcmp.lt.s32.totalorder %v186, 32
        %vm363 = vcmp.lt.s32.totalorder %v187, 32
        %vm364 = vcmp.lt.s32.totalorder %v188, 32
        %vm365 = vcmp.lt.s32.totalorder %v189, 32
        %vm366 = vcmp.lt.s32.totalorder %v190, 32
        %vm367 = vmand %vm351, %vm359
        %vm368 = vmand %vm352, %vm360
        %vm369 = vmand %vm353, %vm361
        %vm370 = vmand %vm354, %vm362
        %vm371 = vmand %vm355, %vm363
        %vm372 = vmand %vm356, %vm364
        %vm373 = vmand %vm357, %vm365
        %vm374 = vmand %vm358, %vm366
        %v375 = vsel %vm367, %v342, 0.0
        %v376 = vsel %vm368, %v341, 0.0
        %v377 = vsel %vm369, %v340, 0.0
        %v378 = vsel %vm370, %v339, 0.0
        %v379 = vsel %vm371, %v338, 0.0
        %v380 = vsel %vm372, %v337, 0.0
        %v381 = vsel %vm373, %v336, 0.0
        %v382 = vsel %vm374, %v335, 0.0
        %v383 = vpack.c.bf16 %v375, %v375
        %v384 = vpack.c.bf16 %v376, %v376
        %v385 = vpack.c.bf16 %v377, %v377
        %v386 = vpack.c.bf16 %v378, %v378
        %v387 = vpack.c.bf16 %v379, %v379
        %v388 = vpack.c.bf16 %v380, %v380
        %v389 = vpack.c.bf16 %v381, %v381
        %v390 = vpack.c.bf16 %v382, %v382
        %s391 = scalar_lea.vmem %s1, 8
        %v392 = vld [vmem:[%s391] sm:$0xf]
        %v393 = vld [vmem:[%s391 + $0x4] sm:$0xf]
        %v396 = vunpack.c.l.b16 %v392
        %v397 = vunpack.c.l.b16 %v393
        %v398 = vpack.c.b16 %v397, %v396
        %vm399 = vcmask 23552
        %v401 = vsel %vm399, %v398, 0
        %vm403 = vcmask 1040384
        %vm404 = vcmask 1041408
        %v405 = vsel %vm403, 4294967295, 65535
        %v406 = vsel %vm404, %v405, 0
        %v408 = vand.u32 %v383, %v406
        %v411 = vand.u32 %v384, %v406
        %v414 = vand.u32 %v385, %v406
        %v417 = vand.u32 %v386, %v406
        %v420 = vand.u32 %v387, %v406
        %v423 = vand.u32 %v388, %v406
        %v426 = vand.u32 %v389, %v406
        %v429 = vand.u32 %v390, %v406
        %431 = vmatprep.subr.bf16.mxu0 %v411
        %432 = vmatpush1.bf16.msra.mxu0 %v408
        %433 = vmatprep.subr.bf16.mxu0 0
        %434 = vmatpush1.bf16.msra.mxu0 0
        %435 = vmatprep.subr.bf16.mxu0 0
        %436 = vmatpush1.bf16.msra.mxu0 0
        %437 = vmatprep.subr.bf16.mxu0 0
        %438 = vmatpush1.bf16.msra.mxu0 0
        %439 = vmatprep.subr.bf16.mxu0 0
        %440 = vmatpush1.bf16.msra.mxu0 0
        %441 = vmatprep.subr.bf16.mxu0 0
        %442 = vmatpush1.bf16.msra.mxu0 0
        %443 = vmatprep.subr.bf16.mxu0 0
        %444 = vmatpush1.bf16.msra.mxu0 0
        %445 = vmatprep.subr.bf16.mxu0 0
        %446 = vmatpush1.bf16.msra.mxu0 0
        %447 = vmatprep.subr.bf16.mxu0 0
        %448 = vmatpush1.bf16.msra.mxu0 0
        %449 = vmatprep.subr.bf16.mxu0 0
        %450 = vmatpush1.bf16.msra.mxu0 0
        %451 = vmatprep.subr.bf16.mxu0 0
        %452 = vmatpush1.bf16.msra.mxu0 0
        %453 = vmatprep.subr.bf16.mxu0 0
        %454 = vmatpush1.bf16.msra.mxu0 0
        %455 = vmatprep.subr.bf16.mxu0 0
        %456 = vmatpush1.bf16.msra.mxu0 0
        %457 = vmatprep.subr.bf16.mxu0 0
        %458 = vmatpush1.bf16.msra.mxu0 0
        %459 = vmatprep.subr.bf16.mxu0 0
        %460 = vmatpush1.bf16.msra.mxu0 0
        %461 = vmatprep.subr.bf16.mxu0 0
        %462 = vmatpush1.bf16.msra.mxu0 0
        %463 = vmatprep.mubr.bf16.mxu0 0
        %464 = vmatmul.mubr.bf16.gmra.mrb[0].mxu0 %v401
        %v465 = vpop.f32.mrb[0].mxu0
        %v466 = vadd.f32 0.0, %v465
        %v467 = vpop.f32.mrb[0].mxu0
        %v468 = vadd.f32 0.0, %v467
        %v469 = vpop.f32.mrb[0].mxu0
        %v470 = vadd.f32 0.0, %v469
        %v471 = vpop.f32.mrb[0].mxu0
        %v472 = vadd.f32 0.0, %v471
        %473 = vdwg.mxu0
        %474 = vmatprep.subr.bf16.mxu0 %v417
        %475 = vmatpush1.bf16.msra.mxu0 %v414
        %476 = vmatprep.subr.bf16.mxu0 0
        %477 = vmatpush1.bf16.msra.mxu0 0
        %478 = vmatprep.subr.bf16.mxu0 0
        %479 = vmatpush1.bf16.msra.mxu0 0
        %480 = vmatprep.subr.bf16.mxu0 0
        %481 = vmatpush1.bf16.msra.mxu0 0
        %482 = vmatprep.subr.bf16.mxu0 0
        %483 = vmatpush1.bf16.msra.mxu0 0
        %484 = vmatprep.subr.bf16.mxu0 0
        %485 = vmatpush1.bf16.msra.mxu0 0
        %486 = vmatprep.subr.bf16.mxu0 0
        %487 = vmatpush1.bf16.msra.mxu0 0
        %488 = vmatprep.subr.bf16.mxu0 0
        %489 = vmatpush1.bf16.msra.mxu0 0
        %490 = vmatprep.subr.bf16.mxu0 0
        %491 = vmatpush1.bf16.msra.mxu0 0
        %492 = vmatprep.subr.bf16.mxu0 0
        %493 = vmatpush1.bf16.msra.mxu0 0
        %494 = vmatprep.subr.bf16.mxu0 0
        %495 = vmatpush1.bf16.msra.mxu0 0
        %496 = vmatprep.subr.bf16.mxu0 0
        %497 = vmatpush1.bf16.msra.mxu0 0
        %498 = vmatprep.subr.bf16.mxu0 0
        %499 = vmatpush1.bf16.msra.mxu0 0
        %500 = vmatprep.subr.bf16.mxu0 0
        %501 = vmatpush1.bf16.msra.mxu0 0
        %502 = vmatprep.subr.bf16.mxu0 0
        %503 = vmatpush1.bf16.msra.mxu0 0
        %504 = vmatprep.subr.bf16.mxu0 0
        %505 = vmatpush1.bf16.msra.mxu0 0
        %506 = vmatprep.mubr.bf16.mxu0 0
        %507 = vmatmul.mubr.bf16.gmra.mrb[0].mxu0 %v401
        %v508 = vpop.f32.mrb[0].mxu0
        %v509 = vadd.f32 0.0, %v508
        %v510 = vpop.f32.mrb[0].mxu0
        %v511 = vadd.f32 0.0, %v510
        %v512 = vpop.f32.mrb[0].mxu0
        %v513 = vadd.f32 0.0, %v512
        %v514 = vpop.f32.mrb[0].mxu0
        %v515 = vadd.f32 0.0, %v514
        %516 = vdwg.mxu0
        %517 = vmatprep.subr.bf16.mxu0 %v423
        %518 = vmatpush1.bf16.msra.mxu0 %v420
        %519 = vmatprep.subr.bf16.mxu0 0
        %520 = vmatpush1.bf16.msra.mxu0 0
        %521 = vmatprep.subr.bf16.mxu0 0
        %522 = vmatpush1.bf16.msra.mxu0 0
        %523 = vmatprep.subr.bf16.mxu0 0
        %524 = vmatpush1.bf16.msra.mxu0 0
        %525 = vmatprep.subr.bf16.mxu0 0
        %526 = vmatpush1.bf16.msra.mxu0 0
        %527 = vmatprep.subr.bf16.mxu0 0
        %528 = vmatpush1.bf16.msra.mxu0 0
        %529 = vmatprep.subr.bf16.mxu0 0
        %530 = vmatpush1.bf16.msra.mxu0 0
        %531 = vmatprep.subr.bf16.mxu0 0
        %532 = vmatpush1.bf16.msra.mxu0 0
        %533 = vmatprep.subr.bf16.mxu0 0
        %534 = vmatpush1.bf16.msra.mxu0 0
        %535 = vmatprep.subr.bf16.mxu0 0
        %536 = vmatpush1.bf16.msra.mxu0 0
        %537 = vmatprep.subr.bf16.mxu0 0
        %538 = vmatpush1.bf16.msra.mxu0 0
        %539 = vmatprep.subr.bf16.mxu0 0
        %540 = vmatpush1.bf16.msra.mxu0 0
        %541 = vmatprep.subr.bf16.mxu0 0
        %542 = vmatpush1.bf16.msra.mxu0 0
        %543 = vmatprep.subr.bf16.mxu0 0
        %544 = vmatpush1.bf16.msra.mxu0 0
        %545 = vmatprep.subr.bf16.mxu0 0
        %546 = vmatpush1.bf16.msra.mxu0 0
        %547 = vmatprep.subr.bf16.mxu0 0
        %548 = vmatpush1.bf16.msra.mxu0 0
        %549 = vmatprep.mubr.bf16.mxu0 0
        %550 = vmatmul.mubr.bf16.gmra.mrb[0].mxu0 %v401
        %v551 = vpop.f32.mrb[0].mxu0
        %v552 = vadd.f32 0.0, %v551
        %v553 = vpop.f32.mrb[0].mxu0
        %v554 = vadd.f32 0.0, %v553
        %v555 = vpop.f32.mrb[0].mxu0
        %v556 = vadd.f32 0.0, %v555
        %v557 = vpop.f32.mrb[0].mxu0
        %v558 = vadd.f32 0.0, %v557
        %559 = vdwg.mxu0
        %560 = vmatprep.subr.bf16.mxu0 %v429
        %561 = vmatpush1.bf16.msra.mxu0 %v426
        %562 = vmatprep.subr.bf16.mxu0 0
        %563 = vmatpush1.bf16.msra.mxu0 0
        %564 = vmatprep.subr.bf16.mxu0 0
        %565 = vmatpush1.bf16.msra.mxu0 0
        %566 = vmatprep.subr.bf16.mxu0 0
        %567 = vmatpush1.bf16.msra.mxu0 0
        %568 = vmatprep.subr.bf16.mxu0 0
        %569 = vmatpush1.bf16.msra.mxu0 0
        %570 = vmatprep.subr.bf16.mxu0 0
        %571 = vmatpush1.bf16.msra.mxu0 0
        %572 = vmatprep.subr.bf16.mxu0 0
        %573 = vmatpush1.bf16.msra.mxu0 0
        %574 = vmatprep.subr.bf16.mxu0 0
        %575 = vmatpush1.bf16.msra.mxu0 0
        %576 = vmatprep.subr.bf16.mxu0 0
        %577 = vmatpush1.bf16.msra.mxu0 0
        %578 = vmatprep.subr.bf16.mxu0 0
        %579 = vmatpush1.bf16.msra.mxu0 0
        %580 = vmatprep.subr.bf16.mxu0 0
        %581 = vmatpush1.bf16.msra.mxu0 0
        %582 = vmatprep.subr.bf16.mxu0 0
        %583 = vmatpush1.bf16.msra.mxu0 0
        %584 = vmatprep.subr.bf16.mxu0 0
        %585 = vmatpush1.bf16.msra.mxu0 0
        %586 = vmatprep.subr.bf16.mxu0 0
        %587 = vmatpush1.bf16.msra.mxu0 0
        %588 = vmatprep.subr.bf16.mxu0 0
        %589 = vmatpush1.bf16.msra.mxu0 0
        %590 = vmatprep.subr.bf16.mxu0 0
        %591 = vmatpush1.bf16.msra.mxu0 0
        %592 = vmatprep.mubr.bf16.mxu0 0
        %593 = vmatmul.mubr.bf16.gmra.mrb[0].mxu0 %v401
        %v594 = vpop.f32.mrb[0].mxu0
        %v595 = vadd.f32 0.0, %v594
        %v596 = vpop.f32.mrb[0].mxu0
        %v597 = vadd.f32 0.0, %v596
        %v598 = vpop.f32.mrb[0].mxu0
        %v599 = vadd.f32 0.0, %v598
        %v600 = vpop.f32.mrb[0].mxu0
        %v601 = vadd.f32 0.0, %v600
        %602 = vdwg.mxu0
        %v605 = vunpack.c.l.b16 %v316
        %v606 = vunpack.c.l.b16 %v317
        %v607 = vpack.c.b16 %v606, %v605
        %v609 = vsel %vm399, %v607, 0
        %v612 = vand.u32 %v308, %v406
        %v615 = vand.u32 %v309, %v406
        %v618 = vand.u32 %v310, %v406
        %v621 = vand.u32 %v311, %v406
        %v624 = vand.u32 %v312, %v406
        %v627 = vand.u32 %v313, %v406
        %v630 = vand.u32 %v314, %v406
        %v633 = vand.u32 %v315, %v406
        %635 = vmatprep.subr.bf16.mxu0 %v615
        %636 = vmatpush1.bf16.msra.mxu0 %v612
        %637 = vmatprep.subr.bf16.mxu0 0
        %638 = vmatpush1.bf16.msra.mxu0 0
        %639 = vmatprep.subr.bf16.mxu0 0
        %640 = vmatpush1.bf16.msra.mxu0 0
        %641 = vmatprep.subr.bf16.mxu0 0
        %642 = vmatpush1.bf16.msra.mxu0 0
        %643 = vmatprep.subr.bf16.mxu0 0
        %644 = vmatpush1.bf16.msra.mxu0 0
        %645 = vmatprep.subr.bf16.mxu0 0
        %646 = vmatpush1.bf16.msra.mxu0 0
        %647 = vmatprep.subr.bf16.mxu0 0
        %648 = vmatpush1.bf16.msra.mxu0 0
        %649 = vmatprep.subr.bf16.mxu0 0
        %650 = vmatpush1.bf16.msra.mxu0 0
        %651 = vmatprep.subr.bf16.mxu0 0
        %652 = vmatpush1.bf16.msra.mxu0 0
        %653 = vmatprep.subr.bf16.mxu0 0
        %654 = vmatpush1.bf16.msra.mxu0 0
        %655 = vmatprep.subr.bf16.mxu0 0
        %656 = vmatpush1.bf16.msra.mxu0 0
        %657 = vmatprep.subr.bf16.mxu0 0
        %658 = vmatpush1.bf16.msra.mxu0 0
        %659 = vmatprep.subr.bf16.mxu0 0
        %660 = vmatpush1.bf16.msra.mxu0 0
        %661 = vmatprep.subr.bf16.mxu0 0
        %662 = vmatpush1.bf16.msra.mxu0 0
        %663 = vmatprep.subr.bf16.mxu0 0
        %664 = vmatpush1.bf16.msra.mxu0 0
        %665 = vmatprep.subr.bf16.mxu0 0
        %666 = vmatpush1.bf16.msra.mxu0 0
        %667 = vmatprep.mubr.bf16.mxu0 0
        %668 = vmatmul.mubr.bf16.gmra.mrb[0].mxu0 %v609
        %v669 = vpop.f32.mrb[0].mxu0
        %v670 = vadd.f32 %v466, %v669
        %v671 = vpop.f32.mrb[0].mxu0
        %v672 = vadd.f32 %v468, %v671
        %v673 = vpop.f32.mrb[0].mxu0
        %v674 = vadd.f32 %v470, %v673
        %v675 = vpop.f32.mrb[0].mxu0
        %v676 = vadd.f32 %v472, %v675
        %677 = vdwg.mxu0
        %678 = vmatprep.subr.bf16.mxu0 %v621
        %679 = vmatpush1.bf16.msra.mxu0 %v618
        %680 = vmatprep.subr.bf16.mxu0 0
        %681 = vmatpush1.bf16.msra.mxu0 0
        %682 = vmatprep.subr.bf16.mxu0 0
        %683 = vmatpush1.bf16.msra.mxu0 0
        %684 = vmatprep.subr.bf16.mxu0 0
        %685 = vmatpush1.bf16.msra.mxu0 0
        %686 = vmatprep.subr.bf16.mxu0 0
        %687 = vmatpush1.bf16.msra.mxu0 0
        %688 = vmatprep.subr.bf16.mxu0 0
        %689 = vmatpush1.bf16.msra.mxu0 0
        %690 = vmatprep.subr.bf16.mxu0 0
        %691 = vmatpush1.bf16.msra.mxu0 0
        %692 = vmatprep.subr.bf16.mxu0 0
        %693 = vmatpush1.bf16.msra.mxu0 0
        %694 = vmatprep.subr.bf16.mxu0 0
        %695 = vmatpush1.bf16.msra.mxu0 0
        %696 = vmatprep.subr.bf16.mxu0 0
        %697 = vmatpush1.bf16.msra.mxu0 0
        %698 = vmatprep.subr.bf16.mxu0 0
        %699 = vmatpush1.bf16.msra.mxu0 0
        %700 = vmatprep.subr.bf16.mxu0 0
        %701 = vmatpush1.bf16.msra.mxu0 0
        %702 = vmatprep.subr.bf16.mxu0 0
        %703 = vmatpush1.bf16.msra.mxu0 0
        %704 = vmatprep.subr.bf16.mxu0 0
        %705 = vmatpush1.bf16.msra.mxu0 0
        %706 = vmatprep.subr.bf16.mxu0 0
        %707 = vmatpush1.bf16.msra.mxu0 0
        %708 = vmatprep.subr.bf16.mxu0 0
        %709 = vmatpush1.bf16.msra.mxu0 0
        %710 = vmatprep.mubr.bf16.mxu0 0
        %711 = vmatmul.mubr.bf16.gmra.mrb[0].mxu0 %v609
        %v712 = vpop.f32.mrb[0].mxu0
        %v713 = vadd.f32 %v509, %v712
        %v714 = vpop.f32.mrb[0].mxu0
        %v715 = vadd.f32 %v511, %v714
        %v716 = vpop.f32.mrb[0].mxu0
        %v717 = vadd.f32 %v513, %v716
        %v718 = vpop.f32.mrb[0].mxu0
        %v719 = vadd.f32 %v515, %v718
        %720 = vdwg.mxu0
        %721 = vmatprep.subr.bf16.mxu0 %v627
        %722 = vmatpush1.bf16.msra.mxu0 %v624
        %723 = vmatprep.subr.bf16.mxu0 0
        %724 = vmatpush1.bf16.msra.mxu0 0
        %725 = vmatprep.subr.bf16.mxu0 0
        %726 = vmatpush1.bf16.msra.mxu0 0
        %727 = vmatprep.subr.bf16.mxu0 0
        %728 = vmatpush1.bf16.msra.mxu0 0
        %729 = vmatprep.subr.bf16.mxu0 0
        %730 = vmatpush1.bf16.msra.mxu0 0
        %731 = vmatprep.subr.bf16.mxu0 0
        %732 = vmatpush1.bf16.msra.mxu0 0
        %733 = vmatprep.subr.bf16.mxu0 0
        %734 = vmatpush1.bf16.msra.mxu0 0
        %735 = vmatprep.subr.bf16.mxu0 0
        %736 = vmatpush1.bf16.msra.mxu0 0
        %737 = vmatprep.subr.bf16.mxu0 0
        %738 = vmatpush1.bf16.msra.mxu0 0
        %739 = vmatprep.subr.bf16.mxu0 0
        %740 = vmatpush1.bf16.msra.mxu0 0
        %741 = vmatprep.subr.bf16.mxu0 0
        %742 = vmatpush1.bf16.msra.mxu0 0
        %743 = vmatprep.subr.bf16.mxu0 0
        %744 = vmatpush1.bf16.msra.mxu0 0
        %745 = vmatprep.subr.bf16.mxu0 0
        %746 = vmatpush1.bf16.msra.mxu0 0
        %747 = vmatprep.subr.bf16.mxu0 0
        %748 = vmatpush1.bf16.msra.mxu0 0
        %749 = vmatprep.subr.bf16.mxu0 0
        %750 = vmatpush1.bf16.msra.mxu0 0
        %751 = vmatprep.subr.bf16.mxu0 0
        %752 = vmatpush1.bf16.msra.mxu0 0
        %753 = vmatprep.mubr.bf16.mxu0 0
        %754 = vmatmul.mubr.bf16.gmra.mrb[0].mxu0 %v609
        %v755 = vpop.f32.mrb[0].mxu0
        %v756 = vadd.f32 %v552, %v755
        %v757 = vpop.f32.mrb[0].mxu0
        %v758 = vadd.f32 %v554, %v757
        %v759 = vpop.f32.mrb[0].mxu0
        %v760 = vadd.f32 %v556, %v759
        %v761 = vpop.f32.mrb[0].mxu0
        %v762 = vadd.f32 %v558, %v761
        %763 = vdwg.mxu0
        %764 = vmatprep.subr.bf16.mxu0 %v633
        %765 = vmatpush1.bf16.msra.mxu0 %v630
        %766 = vmatprep.subr.bf16.mxu0 0
        %767 = vmatpush1.bf16.msra.mxu0 0
        %768 = vmatprep.subr.bf16.mxu0 0
        %769 = vmatpush1.bf16.msra.mxu0 0
        %770 = vmatprep.subr.bf16.mxu0 0
        %771 = vmatpush1.bf16.msra.mxu0 0
        %772 = vmatprep.subr.bf16.mxu0 0
        %773 = vmatpush1.bf16.msra.mxu0 0
        %774 = vmatprep.subr.bf16.mxu0 0
        %775 = vmatpush1.bf16.msra.mxu0 0
        %776 = vmatprep.subr.bf16.mxu0 0
        %777 = vmatpush1.bf16.msra.mxu0 0
        %778 = vmatprep.subr.bf16.mxu0 0
        %779 = vmatpush1.bf16.msra.mxu0 0
        %780 = vmatprep.subr.bf16.mxu0 0
        %781 = vmatpush1.bf16.msra.mxu0 0
        %782 = vmatprep.subr.bf16.mxu0 0
        %783 = vmatpush1.bf16.msra.mxu0 0
        %784 = vmatprep.subr.bf16.mxu0 0
        %785 = vmatpush1.bf16.msra.mxu0 0
        %786 = vmatprep.subr.bf16.mxu0 0
        %787 = vmatpush1.bf16.msra.mxu0 0
        %788 = vmatprep.subr.bf16.mxu0 0
        %789 = vmatpush1.bf16.msra.mxu0 0
        %790 = vmatprep.subr.bf16.mxu0 0
        %791 = vmatpush1.bf16.msra.mxu0 0
        %792 = vmatprep.subr.bf16.mxu0 0
        %793 = vmatpush1.bf16.msra.mxu0 0
        %794 = vmatprep.subr.bf16.mxu0 0
        %795 = vmatpush1.bf16.msra.mxu0 0
        %796 = vmatprep.mubr.bf16.mxu0 0
        %797 = vmatmul.mubr.bf16.gmra.mrb[0].mxu0 %v609
        %v798 = vpop.f32.mrb[0].mxu0
        %v799 = vadd.f32 %v595, %v798
        %v800 = vpop.f32.mrb[0].mxu0
        %v801 = vadd.f32 %v597, %v800
        %v802 = vpop.f32.mrb[0].mxu0
        %v803 = vadd.f32 %v599, %v802
        %v804 = vpop.f32.mrb[0].mxu0
        %v805 = vadd.f32 %v601, %v804
        %806 = vdwg.mxu0
        %807 = vrot.lane.b32.xlu0 %v170, 31
        %v808 = vpop.permute.xlu0 %807
        %809 = vrot.lane.b32.xlu0 %v195, 31
        %v810 = vpop.permute.xlu0 %809
        %811 = vrot.lane.b32.xlu0 %v171, 31
        %v812 = vpop.permute.xlu0 %811
        %813 = vrot.lane.b32.xlu0 %v196, 31
        %v814 = vpop.permute.xlu0 %813
        %815 = vrot.lane.b32.xlu0 %v172, 31
        %v816 = vpop.permute.xlu0 %815
        %817 = vrot.lane.b32.xlu0 %v197, 31
        %v818 = vpop.permute.xlu0 %817
        %819 = vrot.lane.b32.xlu0 %v173, 31
        %v820 = vpop.permute.xlu0 %819
        %821 = vrot.lane.b32.xlu0 %v198, 31
        %v822 = vpop.permute.xlu0 %821
        %vm823 = vcmp.lt.s32.totalorder %v175, 31
        %v824 = vsel %vm823, %v820, %v822
        %v825 = vsel %vm823, %v818, %v820
        %v826 = vsel %vm823, %v816, %v818
        %v827 = vsel %vm823, %v814, %v816
        %v828 = vsel %vm823, %v812, %v814
        %v829 = vsel %vm823, %v810, %v812
        %v830 = vsel %vm823, %v808, %v810
        %v831 = vsel %vm823, %v822, %v808
        %v832 = vadd.s32 %v183, 1
        %v833 = vadd.s32 %v184, 1
        %v834 = vadd.s32 %v185, 1
        %v835 = vadd.s32 %v186, 1
        %v836 = vadd.s32 %v187, 1
        %v837 = vadd.s32 %v188, 1
        %v838 = vadd.s32 %v189, 1
        %v839 = vadd.s32 %v190, 1
        %vm840 = vcmp.ge.s32.totalorder %v832, 0
        %vm841 = vcmp.ge.s32.totalorder %v833, 0
        %vm842 = vcmp.ge.s32.totalorder %v834, 0
        %vm843 = vcmp.ge.s32.totalorder %v835, 0
        %vm844 = vcmp.ge.s32.totalorder %v836, 0
        %vm845 = vcmp.ge.s32.totalorder %v837, 0
        %vm846 = vcmp.ge.s32.totalorder %v838, 0
        %vm847 = vcmp.ge.s32.totalorder %v839, 0
        %vm848 = vmand %vm252, %vm840
        %vm849 = vmand %vm253, %vm841
        %vm850 = vmand %vm254, %vm842
        %vm851 = vmand %vm255, %vm843
        %vm852 = vmand %vm256, %vm844
        %vm853 = vmand %vm257, %vm845
        %vm854 = vmand %vm258, %vm846
        %vm855 = vmand %vm259, %vm847
        %vm856 = vcmp.lt.s32.totalorder %v832, 32
        %vm857 = vcmp.lt.s32.totalorder %v833, 32
        %vm858 = vcmp.lt.s32.totalorder %v834, 32
        %vm859 = vcmp.lt.s32.totalorder %v835, 32
        %vm860 = vcmp.lt.s32.totalorder %v836, 32
        %vm861 = vcmp.lt.s32.totalorder %v837, 32
        %vm862 = vcmp.lt.s32.totalorder %v838, 32
        %vm863 = vcmp.lt.s32.totalorder %v839, 32
        %vm864 = vmand %vm848, %vm856
        %vm865 = vmand %vm849, %vm857
        %vm866 = vmand %vm850, %vm858
        %vm867 = vmand %vm851, %vm859
        %vm868 = vmand %vm852, %vm860
        %vm869 = vmand %vm853, %vm861
        %vm870 = vmand %vm854, %vm862
        %vm871 = vmand %vm855, %vm863
        %v872 = vsel %vm864, %v831, 0.0
        %v873 = vsel %vm865, %v830, 0.0
        %v874 = vsel %vm866, %v829, 0.0
        %v875 = vsel %vm867, %v828, 0.0
        %v876 = vsel %vm868, %v827, 0.0
        %v877 = vsel %vm869, %v826, 0.0
        %v878 = vsel %vm870, %v825, 0.0
        %v879 = vsel %vm871, %v824, 0.0
        %v880 = vpack.c.bf16 %v872, %v872
        %v881 = vpack.c.bf16 %v873, %v873
        %v882 = vpack.c.bf16 %v874, %v874
        %v883 = vpack.c.bf16 %v875, %v875
        %v884 = vpack.c.bf16 %v876, %v876
        %v885 = vpack.c.bf16 %v877, %v877
        %v886 = vpack.c.bf16 %v878, %v878
        %v887 = vpack.c.bf16 %v879, %v879
        %s888 = scalar_lea.vmem %s1, 16
        %v889 = vld [vmem:[%s888] sm:$0xf]
        %v890 = vld [vmem:[%s888 + $0x4] sm:$0xf]
        %v893 = vunpack.c.l.b16 %v889
        %v894 = vunpack.c.l.b16 %v890
        %v895 = vpack.c.b16 %v894, %v893
        %v897 = vsel %vm399, %v895, 0
        %v900 = vand.u32 %v880, %v406
        %v903 = vand.u32 %v881, %v406
        %v906 = vand.u32 %v882, %v406
        %v909 = vand.u32 %v883, %v406
        %v912 = vand.u32 %v884, %v406
        %v915 = vand.u32 %v885, %v406
        %v918 = vand.u32 %v886, %v406
        %v921 = vand.u32 %v887, %v406
        %923 = vmatprep.subr.bf16.mxu0 %v903
        %924 = vmatpush1.bf16.msra.mxu0 %v900
        %925 = vmatprep.subr.bf16.mxu0 0
        %926 = vmatpush1.bf16.msra.mxu0 0
        %927 = vmatprep.subr.bf16.mxu0 0
        %928 = vmatpush1.bf16.msra.mxu0 0
        %929 = vmatprep.subr.bf16.mxu0 0
        %930 = vmatpush1.bf16.msra.mxu0 0
        %931 = vmatprep.subr.bf16.mxu0 0
        %932 = vmatpush1.bf16.msra.mxu0 0
        %933 = vmatprep.subr.bf16.mxu0 0
        %934 = vmatpush1.bf16.msra.mxu0 0
        %935 = vmatprep.subr.bf16.mxu0 0
        %936 = vmatpush1.bf16.msra.mxu0 0
        %937 = vmatprep.subr.bf16.mxu0 0
        %938 = vmatpush1.bf16.msra.mxu0 0
        %939 = vmatprep.subr.bf16.mxu0 0
        %940 = vmatpush1.bf16.msra.mxu0 0
        %941 = vmatprep.subr.bf16.mxu0 0
        %942 = vmatpush1.bf16.msra.mxu0 0
        %943 = vmatprep.subr.bf16.mxu0 0
        %944 = vmatpush1.bf16.msra.mxu0 0
        %945 = vmatprep.subr.bf16.mxu0 0
        %946 = vmatpush1.bf16.msra.mxu0 0
        %947 = vmatprep.subr.bf16.mxu0 0
        %948 = vmatpush1.bf16.msra.mxu0 0
        %949 = vmatprep.subr.bf16.mxu0 0
        %950 = vmatpush1.bf16.msra.mxu0 0
        %951 = vmatprep.subr.bf16.mxu0 0
        %952 = vmatpush1.bf16.msra.mxu0 0
        %953 = vmatprep.subr.bf16.mxu0 0
        %954 = vmatpush1.bf16.msra.mxu0 0
        %955 = vmatprep.mubr.bf16.mxu0 0
        %956 = vmatmul.mubr.bf16.gmra.mrb[0].mxu0 %v897
        %v957 = vpop.f32.mrb[0].mxu0
        %v958 = vadd.f32 0.0, %v957
        %v959 = vpop.f32.mrb[0].mxu0
        %v960 = vadd.f32 0.0, %v959
        %v961 = vpop.f32.mrb[0].mxu0
        %v962 = vadd.f32 0.0, %v961
        %v963 = vpop.f32.mrb[0].mxu0
        %v964 = vadd.f32 0.0, %v963
        %965 = vdwg.mxu0
        %966 = vmatprep.subr.bf16.mxu0 %v909
        %967 = vmatpush1.bf16.msra.mxu0 %v906
        %968 = vmatprep.subr.bf16.mxu0 0
        %969 = vmatpush1.bf16.msra.mxu0 0
        %970 = vmatprep.subr.bf16.mxu0 0
        %971 = vmatpush1.bf16.msra.mxu0 0
        %972 = vmatprep.subr.bf16.mxu0 0
        %973 = vmatpush1.bf16.msra.mxu0 0
        %974 = vmatprep.subr.bf16.mxu0 0
        %975 = vmatpush1.bf16.msra.mxu0 0
        %976 = vmatprep.subr.bf16.mxu0 0
        %977 = vmatpush1.bf16.msra.mxu0 0
        %978 = vmatprep.subr.bf16.mxu0 0
        %979 = vmatpush1.bf16.msra.mxu0 0
        %980 = vmatprep.subr.bf16.mxu0 0
        %981 = vmatpush1.bf16.msra.mxu0 0
        %982 = vmatprep.subr.bf16.mxu0 0
        %983 = vmatpush1.bf16.msra.mxu0 0
        %984 = vmatprep.subr.bf16.mxu0 0
        %985 = vmatpush1.bf16.msra.mxu0 0
        %986 = vmatprep.subr.bf16.mxu0 0
        %987 = vmatpush1.bf16.msra.mxu0 0
        %988 = vmatprep.subr.bf16.mxu0 0
        %989 = vmatpush1.bf16.msra.mxu0 0
        %990 = vmatprep.subr.bf16.mxu0 0
        %991 = vmatpush1.bf16.msra.mxu0 0
        %992 = vmatprep.subr.bf16.mxu0 0
        %993 = vmatpush1.bf16.msra.mxu0 0
        %994 = vmatprep.subr.bf16.mxu0 0
        %995 = vmatpush1.bf16.msra.mxu0 0
        %996 = vmatprep.subr.bf16.mxu0 0
        %997 = vmatpush1.bf16.msra.mxu0 0
        %998 = vmatprep.mubr.bf16.mxu0 0
        %999 = vmatmul.mubr.bf16.gmra.mrb[0].mxu0 %v897
        %v1000 = vpop.f32.mrb[0].mxu0
        %v1001 = vadd.f32 0.0, %v1000
        %v1002 = vpop.f32.mrb[0].mxu0
        %v1003 = vadd.f32 0.0, %v1002
        %v1004 = vpop.f32.mrb[0].mxu0
        %v1005 = vadd.f32 0.0, %v1004
        %v1006 = vpop.f32.mrb[0].mxu0
        %v1007 = vadd.f32 0.0, %v1006
        %1008 = vdwg.mxu0
        %1009 = vmatprep.subr.bf16.mxu0 %v915
        %1010 = vmatpush1.bf16.msra.mxu0 %v912
        %1011 = vmatprep.subr.bf16.mxu0 0
        %1012 = vmatpush1.bf16.msra.mxu0 0
        %1013 = vmatprep.subr.bf16.mxu0 0
        %1014 = vmatpush1.bf16.msra.mxu0 0
        %1015 = vmatprep.subr.bf16.mxu0 0
        %1016 = vmatpush1.bf16.msra.mxu0 0
        %1017 = vmatprep.subr.bf16.mxu0 0
        %1018 = vmatpush1.bf16.msra.mxu0 0
        %1019 = vmatprep.subr.bf16.mxu0 0
        %1020 = vmatpush1.bf16.msra.mxu0 0
        %1021 = vmatprep.subr.bf16.mxu0 0
        %1022 = vmatpush1.bf16.msra.mxu0 0
        %1023 = vmatprep.subr.bf16.mxu0 0
        %1024 = vmatpush1.bf16.msra.mxu0 0
        %1025 = vmatprep.subr.bf16.mxu0 0
        %1026 = vmatpush1.bf16.msra.mxu0 0
        %1027 = vmatprep.subr.bf16.mxu0 0
        %1028 = vmatpush1.bf16.msra.mxu0 0
        %1029 = vmatprep.subr.bf16.mxu0 0
        %1030 = vmatpush1.bf16.msra.mxu0 0
        %1031 = vmatprep.subr.bf16.mxu0 0
        %1032 = vmatpush1.bf16.msra.mxu0 0
        %1033 = vmatprep.subr.bf16.mxu0 0
        %1034 = vmatpush1.bf16.msra.mxu0 0
        %1035 = vmatprep.subr.bf16.mxu0 0
        %1036 = vmatpush1.bf16.msra.mxu0 0
        %1037 = vmatprep.subr.bf16.mxu0 0
        %1038 = vmatpush1.bf16.msra.mxu0 0
        %1039 = vmatprep.subr.bf16.mxu0 0
        %1040 = vmatpush1.bf16.msra.mxu0 0
        %1041 = vmatprep.mubr.bf16.mxu0 0
        %1042 = vmatmul.mubr.bf16.gmra.mrb[0].mxu0 %v897
        %v1043 = vpop.f32.mrb[0].mxu0
        %v1044 = vadd.f32 0.0, %v1043
        %v1045 = vpop.f32.mrb[0].mxu0
        %v1046 = vadd.f32 0.0, %v1045
        %v1047 = vpop.f32.mrb[0].mxu0
        %v1048 = vadd.f32 0.0, %v1047
        %v1049 = vpop.f32.mrb[0].mxu0
        %v1050 = vadd.f32 0.0, %v1049
        %1051 = vdwg.mxu0
        %1052 = vmatprep.subr.bf16.mxu0 %v921
        %1053 = vmatpush1.bf16.msra.mxu0 %v918
        %1054 = vmatprep.subr.bf16.mxu0 0
        %1055 = vmatpush1.bf16.msra.mxu0 0
        %1056 = vmatprep.subr.bf16.mxu0 0
        %1057 = vmatpush1.bf16.msra.mxu0 0
        %1058 = vmatprep.subr.bf16.mxu0 0
        %1059 = vmatpush1.bf16.msra.mxu0 0
        %1060 = vmatprep.subr.bf16.mxu0 0
        %1061 = vmatpush1.bf16.msra.mxu0 0
        %1062 = vmatprep.subr.bf16.mxu0 0
        %1063 = vmatpush1.bf16.msra.mxu0 0
        %1064 = vmatprep.subr.bf16.mxu0 0
        %1065 = vmatpush1.bf16.msra.mxu0 0
        %1066 = vmatprep.subr.bf16.mxu0 0
        %1067 = vmatpush1.bf16.msra.mxu0 0
        %1068 = vmatprep.subr.bf16.mxu0 0
        %1069 = vmatpush1.bf16.msra.mxu0 0
        %1070 = vmatprep.subr.bf16.mxu0 0
        %1071 = vmatpush1.bf16.msra.mxu0 0
        %1072 = vmatprep.subr.bf16.mxu0 0
        %1073 = vmatpush1.bf16.msra.mxu0 0
        %1074 = vmatprep.subr.bf16.mxu0 0
        %1075 = vmatpush1.bf16.msra.mxu0 0
        %1076 = vmatprep.subr.bf16.mxu0 0
        %1077 = vmatpush1.bf16.msra.mxu0 0
        %1078 = vmatprep.subr.bf16.mxu0 0
        %1079 = vmatpush1.bf16.msra.mxu0 0
        %1080 = vmatprep.subr.bf16.mxu0 0
        %1081 = vmatpush1.bf16.msra.mxu0 0
        %1082 = vmatprep.subr.bf16.mxu0 0
        %1083 = vmatpush1.bf16.msra.mxu0 0
        %1084 = vmatprep.mubr.bf16.mxu0 0
        %1085 = vmatmul.mubr.bf16.gmra.mrb[0].mxu0 %v897
        %v1086 = vpop.f32.mrb[0].mxu0
        %v1087 = vadd.f32 0.0, %v1086
        %v1088 = vpop.f32.mrb[0].mxu0
        %v1089 = vadd.f32 0.0, %v1088
        %v1090 = vpop.f32.mrb[0].mxu0
        %v1091 = vadd.f32 0.0, %v1090
        %v1092 = vpop.f32.mrb[0].mxu0
        %v1093 = vadd.f32 0.0, %v1092
        %1094 = vdwg.mxu0
        %v1095 = vadd.f32 %v670, %v958
        %v1096 = vadd.f32 %v672, %v960
        %v1097 = vadd.f32 %v713, %v1001
        %v1098 = vadd.f32 %v715, %v1003
        %v1099 = vadd.f32 %v756, %v1044
        %v1100 = vadd.f32 %v758, %v1046
        %v1101 = vadd.f32 %v799, %v1087
        %v1102 = vadd.f32 %v801, %v1089
        %v1103 = vadd.f32 %v674, %v962
        %v1104 = vadd.f32 %v676, %v964
        %v1105 = vadd.f32 %v717, %v1005
        %v1106 = vadd.f32 %v719, %v1007
        %v1107 = vadd.f32 %v760, %v1048
        %v1108 = vadd.f32 %v762, %v1050
        %v1109 = vadd.f32 %v803, %v1091
        %v1110 = vadd.f32 %v805, %v1093
        %1111 = vrot.lane.b32.xlu0 %v170, 1
        %v1112 = vpop.permute.xlu0 %1111
        %1113 = vrot.lane.b32.xlu0 %v195, 1
        %v1114 = vpop.permute.xlu0 %1113
        %1115 = vrot.lane.b32.xlu0 %v171, 1
        %v1116 = vpop.permute.xlu0 %1115
        %1117 = vrot.lane.b32.xlu0 %v196, 1
        %v1118 = vpop.permute.xlu0 %1117
        %1119 = vrot.lane.b32.xlu0 %v172, 1
        %v1120 = vpop.permute.xlu0 %1119
        %1121 = vrot.lane.b32.xlu0 %v197, 1
        %v1122 = vpop.permute.xlu0 %1121
        %1123 = vrot.lane.b32.xlu0 %v173, 1
        %v1124 = vpop.permute.xlu0 %1123
        %1125 = vrot.lane.b32.xlu0 %v198, 1
        %v1126 = vpop.permute.xlu0 %1125
        %vm1127 = vcmp.lt.s32.totalorder %v175, 1
        %v1128 = vsel %vm1127, %v1124, %v1126
        %v1129 = vsel %vm1127, %v1122, %v1124
        %v1130 = vsel %vm1127, %v1120, %v1122
        %v1131 = vsel %vm1127, %v1118, %v1120
        %v1132 = vsel %vm1127, %v1116, %v1118
        %v1133 = vsel %vm1127, %v1114, %v1116
        %v1134 = vsel %vm1127, %v1112, %v1114
        %v1135 = vsel %vm1127, %v1126, %v1112
        %vm1136 = vcmp.ge.s32.totalorder %v175, 0
        %vm1137 = vcmp.ge.s32.totalorder %v176, 0
        %vm1138 = vcmp.ge.s32.totalorder %v177, 0
        %vm1139 = vcmp.ge.s32.totalorder %v178, 0
        %vm1140 = vcmp.ge.s32.totalorder %v179, 0
        %vm1141 = vcmp.ge.s32.totalorder %v180, 0
        %vm1142 = vcmp.ge.s32.totalorder %v181, 0
        %vm1143 = vcmp.ge.s32.totalorder %v182, 0
        %vm1144 = vcmp.lt.s32.totalorder %v175, 1024
        %vm1145 = vcmp.lt.s32.totalorder %v176, 1024
        %vm1146 = vcmp.lt.s32.totalorder %v177, 1024
        %vm1147 = vcmp.lt.s32.totalorder %v178, 1024
        %vm1148 = vcmp.lt.s32.totalorder %v179, 1024
        %vm1149 = vcmp.lt.s32.totalorder %v180, 1024
        %vm1150 = vcmp.lt.s32.totalorder %v181, 1024
        %vm1151 = vcmp.lt.s32.totalorder %v182, 1024
        %vm1152 = vmand %vm1136, %vm1144
        %vm1153 = vmand %vm1137, %vm1145
        %vm1154 = vmand %vm1138, %vm1146
        %vm1155 = vmand %vm1139, %vm1147
        %vm1156 = vmand %vm1140, %vm1148
        %vm1157 = vmand %vm1141, %vm1149
        %vm1158 = vmand %vm1142, %vm1150
        %vm1159 = vmand %vm1143, %vm1151
        %vm1160 = vmand %vm1152, %vm268
        %vm1161 = vmand %vm1153, %vm269
        %vm1162 = vmand %vm1154, %vm270
        %vm1163 = vmand %vm1155, %vm271
        %vm1164 = vmand %vm1156, %vm272
        %vm1165 = vmand %vm1157, %vm273
        %vm1166 = vmand %vm1158, %vm274
        %vm1167 = vmand %vm1159, %vm275
        %vm1168 = vmand %vm1160, %vm284
        %vm1169 = vmand %vm1161, %vm285
        %vm1170 = vmand %vm1162, %vm286
        %vm1171 = vmand %vm1163, %vm287
        %vm1172 = vmand %vm1164, %vm288
        %vm1173 = vmand %vm1165, %vm289
        %vm1174 = vmand %vm1166, %vm290
        %vm1175 = vmand %vm1167, %vm291
        %v1176 = vsel %vm1168, %v1135, 0.0
        %v1177 = vsel %vm1169, %v1134, 0.0
        %v1178 = vsel %vm1170, %v1133, 0.0
        %v1179 = vsel %vm1171, %v1132, 0.0
        %v1180 = vsel %vm1172, %v1131, 0.0
        %v1181 = vsel %vm1173, %v1130, 0.0
        %v1182 = vsel %vm1174, %v1129, 0.0
        %v1183 = vsel %vm1175, %v1128, 0.0
        %v1184 = vpack.c.bf16 %v1176, %v1176
        %v1185 = vpack.c.bf16 %v1177, %v1177
        %v1186 = vpack.c.bf16 %v1178, %v1178
        %v1187 = vpack.c.bf16 %v1179, %v1179
        %v1188 = vpack.c.bf16 %v1180, %v1180
        %v1189 = vpack.c.bf16 %v1181, %v1181
        %v1190 = vpack.c.bf16 %v1182, %v1182
        %v1191 = vpack.c.bf16 %v1183, %v1183
        %s1192 = scalar_lea.vmem %s1, 24
        %v1193 = vld [vmem:[%s1192] sm:$0xf]
        %v1194 = vld [vmem:[%s1192 + $0x4] sm:$0xf]
        %v1197 = vunpack.c.l.b16 %v1193
        %v1198 = vunpack.c.l.b16 %v1194
        %v1199 = vpack.c.b16 %v1198, %v1197
        %v1201 = vsel %vm399, %v1199, 0
        %v1204 = vand.u32 %v1184, %v406
        %v1207 = vand.u32 %v1185, %v406
        %v1210 = vand.u32 %v1186, %v406
        %v1213 = vand.u32 %v1187, %v406
        %v1216 = vand.u32 %v1188, %v406
        %v1219 = vand.u32 %v1189, %v406
        %v1222 = vand.u32 %v1190, %v406
        %v1225 = vand.u32 %v1191, %v406
        %1227 = vmatprep.subr.bf16.mxu0 %v1207
        %1228 = vmatpush1.bf16.msra.mxu0 %v1204
        %1229 = vmatprep.subr.bf16.mxu0 0
        %1230 = vmatpush1.bf16.msra.mxu0 0
        %1231 = vmatprep.subr.bf16.mxu0 0
        %1232 = vmatpush1.bf16.msra.mxu0 0
        %1233 = vmatprep.subr.bf16.mxu0 0
        %1234 = vmatpush1.bf16.msra.mxu0 0
        %1235 = vmatprep.subr.bf16.mxu0 0
        %1236 = vmatpush1.bf16.msra.mxu0 0
        %1237 = vmatprep.subr.bf16.mxu0 0
        %1238 = vmatpush1.bf16.msra.mxu0 0
        %1239 = vmatprep.subr.bf16.mxu0 0
        %1240 = vmatpush1.bf16.msra.mxu0 0
        %1241 = vmatprep.subr.bf16.mxu0 0
        %1242 = vmatpush1.bf16.msra.mxu0 0
        %1243 = vmatprep.subr.bf16.mxu0 0
        %1244 = vmatpush1.bf16.msra.mxu0 0
        %1245 = vmatprep.subr.bf16.mxu0 0
        %1246 = vmatpush1.bf16.msra.mxu0 0
        %1247 = vmatprep.subr.bf16.mxu0 0
        %1248 = vmatpush1.bf16.msra.mxu0 0
        %1249 = vmatprep.subr.bf16.mxu0 0
        %1250 = vmatpush1.bf16.msra.mxu0 0
        %1251 = vmatprep.subr.bf16.mxu0 0
        %1252 = vmatpush1.bf16.msra.mxu0 0
        %1253 = vmatprep.subr.bf16.mxu0 0
        %1254 = vmatpush1.bf16.msra.mxu0 0
        %1255 = vmatprep.subr.bf16.mxu0 0
        %1256 = vmatpush1.bf16.msra.mxu0 0
        %1257 = vmatprep.subr.bf16.mxu0 0
        %1258 = vmatpush1.bf16.msra.mxu0 0
        %1259 = vmatprep.mubr.bf16.mxu0 0
        %1260 = vmatmul.mubr.bf16.gmra.mrb[0].mxu0 %v1201
        %v1261 = vpop.f32.mrb[0].mxu0
        %v1262 = vadd.f32 0.0, %v1261
        %v1263 = vpop.f32.mrb[0].mxu0
        %v1264 = vadd.f32 0.0, %v1263
        %v1265 = vpop.f32.mrb[0].mxu0
        %v1266 = vadd.f32 0.0, %v1265
        %v1267 = vpop.f32.mrb[0].mxu0
        %v1268 = vadd.f32 0.0, %v1267
        %1269 = vdwg.mxu0
        %1270 = vmatprep.subr.bf16.mxu0 %v1213
        %1271 = vmatpush1.bf16.msra.mxu0 %v1210
        %1272 = vmatprep.subr.bf16.mxu0 0
        %1273 = vmatpush1.bf16.msra.mxu0 0
        %1274 = vmatprep.subr.bf16.mxu0 0
        %1275 = vmatpush1.bf16.msra.mxu0 0
        %1276 = vmatprep.subr.bf16.mxu0 0
        %1277 = vmatpush1.bf16.msra.mxu0 0
        %1278 = vmatprep.subr.bf16.mxu0 0
        %1279 = vmatpush1.bf16.msra.mxu0 0
        %1280 = vmatprep.subr.bf16.mxu0 0
        %1281 = vmatpush1.bf16.msra.mxu0 0
        %1282 = vmatprep.subr.bf16.mxu0 0
        %1283 = vmatpush1.bf16.msra.mxu0 0
        %1284 = vmatprep.subr.bf16.mxu0 0
        %1285 = vmatpush1.bf16.msra.mxu0 0
        %1286 = vmatprep.subr.bf16.mxu0 0
        %1287 = vmatpush1.bf16.msra.mxu0 0
        %1288 = vmatprep.subr.bf16.mxu0 0
        %1289 = vmatpush1.bf16.msra.mxu0 0
        %1290 = vmatprep.subr.bf16.mxu0 0
        %1291 = vmatpush1.bf16.msra.mxu0 0
        %1292 = vmatprep.subr.bf16.mxu0 0
        %1293 = vmatpush1.bf16.msra.mxu0 0
        %1294 = vmatprep.subr.bf16.mxu0 0
        %1295 = vmatpush1.bf16.msra.mxu0 0
        %1296 = vmatprep.subr.bf16.mxu0 0
        %1297 = vmatpush1.bf16.msra.mxu0 0
        %1298 = vmatprep.subr.bf16.mxu0 0
        %1299 = vmatpush1.bf16.msra.mxu0 0
        %1300 = vmatprep.subr.bf16.mxu0 0
        %1301 = vmatpush1.bf16.msra.mxu0 0
        %1302 = vmatprep.mubr.bf16.mxu0 0
        %1303 = vmatmul.mubr.bf16.gmra.mrb[0].mxu0 %v1201
        %v1304 = vpop.f32.mrb[0].mxu0
        %v1305 = vadd.f32 0.0, %v1304
        %v1306 = vpop.f32.mrb[0].mxu0
        %v1307 = vadd.f32 0.0, %v1306
        %v1308 = vpop.f32.mrb[0].mxu0
        %v1309 = vadd.f32 0.0, %v1308
        %v1310 = vpop.f32.mrb[0].mxu0
        %v1311 = vadd.f32 0.0, %v1310
        %1312 = vdwg.mxu0
        %1313 = vmatprep.subr.bf16.mxu0 %v1219
        %1314 = vmatpush1.bf16.msra.mxu0 %v1216
        %1315 = vmatprep.subr.bf16.mxu0 0
        %1316 = vmatpush1.bf16.msra.mxu0 0
        %1317 = vmatprep.subr.bf16.mxu0 0
        %1318 = vmatpush1.bf16.msra.mxu0 0
        %1319 = vmatprep.subr.bf16.mxu0 0
        %1320 = vmatpush1.bf16.msra.mxu0 0
        %1321 = vmatprep.subr.bf16.mxu0 0
        %1322 = vmatpush1.bf16.msra.mxu0 0
        %1323 = vmatprep.subr.bf16.mxu0 0
        %1324 = vmatpush1.bf16.msra.mxu0 0
        %1325 = vmatprep.subr.bf16.mxu0 0
        %1326 = vmatpush1.bf16.msra.mxu0 0
        %1327 = vmatprep.subr.bf16.mxu0 0
        %1328 = vmatpush1.bf16.msra.mxu0 0
        %1329 = vmatprep.subr.bf16.mxu0 0
        %1330 = vmatpush1.bf16.msra.mxu0 0
        %1331 = vmatprep.subr.bf16.mxu0 0
        %1332 = vmatpush1.bf16.msra.mxu0 0
        %1333 = vmatprep.subr.bf16.mxu0 0
        %1334 = vmatpush1.bf16.msra.mxu0 0
        %1335 = vmatprep.subr.bf16.mxu0 0
        %1336 = vmatpush1.bf16.msra.mxu0 0
        %1337 = vmatprep.subr.bf16.mxu0 0
        %1338 = vmatpush1.bf16.msra.mxu0 0
        %1339 = vmatprep.subr.bf16.mxu0 0
        %1340 = vmatpush1.bf16.msra.mxu0 0
        %1341 = vmatprep.subr.bf16.mxu0 0
        %1342 = vmatpush1.bf16.msra.mxu0 0
        %1343 = vmatprep.subr.bf16.mxu0 0
        %1344 = vmatpush1.bf16.msra.mxu0 0
        %1345 = vmatprep.mubr.bf16.mxu0 0
        %1346 = vmatmul.mubr.bf16.gmra.mrb[0].mxu0 %v1201
        %v1347 = vpop.f32.mrb[0].mxu0
        %v1348 = vadd.f32 0.0, %v1347
        %v1349 = vpop.f32.mrb[0].mxu0
        %v1350 = vadd.f32 0.0, %v1349
        %v1351 = vpop.f32.mrb[0].mxu0
        %v1352 = vadd.f32 0.0, %v1351
        %v1353 = vpop.f32.mrb[0].mxu0
        %v1354 = vadd.f32 0.0, %v1353
        %1355 = vdwg.mxu0
        %1356 = vmatprep.subr.bf16.mxu0 %v1225
        %1357 = vmatpush1.bf16.msra.mxu0 %v1222
        %1358 = vmatprep.subr.bf16.mxu0 0
        %1359 = vmatpush1.bf16.msra.mxu0 0
        %1360 = vmatprep.subr.bf16.mxu0 0
        %1361 = vmatpush1.bf16.msra.mxu0 0
        %1362 = vmatprep.subr.bf16.mxu0 0
        %1363 = vmatpush1.bf16.msra.mxu0 0
        %1364 = vmatprep.subr.bf16.mxu0 0
        %1365 = vmatpush1.bf16.msra.mxu0 0
        %1366 = vmatprep.subr.bf16.mxu0 0
        %1367 = vmatpush1.bf16.msra.mxu0 0
        %1368 = vmatprep.subr.bf16.mxu0 0
        %1369 = vmatpush1.bf16.msra.mxu0 0
        %1370 = vmatprep.subr.bf16.mxu0 0
        %1371 = vmatpush1.bf16.msra.mxu0 0
        %1372 = vmatprep.subr.bf16.mxu0 0
        %1373 = vmatpush1.bf16.msra.mxu0 0
        %1374 = vmatprep.subr.bf16.mxu0 0
        %1375 = vmatpush1.bf16.msra.mxu0 0
        %1376 = vmatprep.subr.bf16.mxu0 0
        %1377 = vmatpush1.bf16.msra.mxu0 0
        %1378 = vmatprep.subr.bf16.mxu0 0
        %1379 = vmatpush1.bf16.msra.mxu0 0
        %1380 = vmatprep.subr.bf16.mxu0 0
        %1381 = vmatpush1.bf16.msra.mxu0 0
        %1382 = vmatprep.subr.bf16.mxu0 0
        %1383 = vmatpush1.bf16.msra.mxu0 0
        %1384 = vmatprep.subr.bf16.mxu0 0
        %1385 = vmatpush1.bf16.msra.mxu0 0
        %1386 = vmatprep.subr.bf16.mxu0 0
        %1387 = vmatpush1.bf16.msra.mxu0 0
        %1388 = vmatprep.mubr.bf16.mxu0 0
        %1389 = vmatmul.mubr.bf16.gmra.mrb[0].mxu0 %v1201
        %v1390 = vpop.f32.mrb[0].mxu0
        %v1391 = vadd.f32 0.0, %v1390
        %v1392 = vpop.f32.mrb[0].mxu0
        %v1393 = vadd.f32 0.0, %v1392
        %v1394 = vpop.f32.mrb[0].mxu0
        %v1395 = vadd.f32 0.0, %v1394
        %v1396 = vpop.f32.mrb[0].mxu0
        %v1397 = vadd.f32 0.0, %v1396
        %1398 = vdwg.mxu0
        %v1399 = vadd.f32 %v1095, %v1262
        %v1400 = vadd.f32 %v1096, %v1264
        %v1401 = vadd.f32 %v1097, %v1305
        %v1402 = vadd.f32 %v1098, %v1307
        %v1403 = vadd.f32 %v1099, %v1348
        %v1404 = vadd.f32 %v1100, %v1350
        %v1405 = vadd.f32 %v1101, %v1391
        %v1406 = vadd.f32 %v1102, %v1393
        %v1407 = vadd.f32 %v1103, %v1266
        %v1408 = vadd.f32 %v1104, %v1268
        %v1409 = vadd.f32 %v1105, %v1309
        %v1410 = vadd.f32 %v1106, %v1311
        %v1411 = vadd.f32 %v1107, %v1352
        %v1412 = vadd.f32 %v1108, %v1354
        %v1413 = vadd.f32 %v1109, %v1395
        %v1414 = vadd.f32 %v1110, %v1397
        %vm1415 = vmand %vm1152, %vm343
        %vm1416 = vmand %vm1153, %vm344
        %vm1417 = vmand %vm1154, %vm345
        %vm1418 = vmand %vm1155, %vm346
        %vm1419 = vmand %vm1156, %vm347
        %vm1420 = vmand %vm1157, %vm348
        %vm1421 = vmand %vm1158, %vm349
        %vm1422 = vmand %vm1159, %vm350
        %vm1423 = vmand %vm1415, %vm359
        %vm1424 = vmand %vm1416, %vm360
        %vm1425 = vmand %vm1417, %vm361
        %vm1426 = vmand %vm1418, %vm362
        %vm1427 = vmand %vm1419, %vm363
        %vm1428 = vmand %vm1420, %vm364
        %vm1429 = vmand %vm1421, %vm365
        %vm1430 = vmand %vm1422, %vm366
        %v1431 = vsel %vm1423, %v170, 0.0
        %v1432 = vsel %vm1424, %v195, 0.0
        %v1433 = vsel %vm1425, %v171, 0.0
        %v1434 = vsel %vm1426, %v196, 0.0
        %v1435 = vsel %vm1427, %v172, 0.0
        %v1436 = vsel %vm1428, %v197, 0.0
        %v1437 = vsel %vm1429, %v173, 0.0
        %v1438 = vsel %vm1430, %v198, 0.0
        %v1439 = vpack.c.bf16 %v1431, %v1431
        %v1440 = vpack.c.bf16 %v1432, %v1432
        %v1441 = vpack.c.bf16 %v1433, %v1433
        %v1442 = vpack.c.bf16 %v1434, %v1434
        %v1443 = vpack.c.bf16 %v1435, %v1435
        %v1444 = vpack.c.bf16 %v1436, %v1436
        %v1445 = vpack.c.bf16 %v1437, %v1437
        %v1446 = vpack.c.bf16 %v1438, %v1438
        %s1447 = scalar_lea.vmem %s1, 32
        %v1448 = vld [vmem:[%s1447] sm:$0xf]
        %v1449 = vld [vmem:[%s1447 + $0x4] sm:$0xf]
        %v1452 = vunpack.c.l.b16 %v1448
        %v1453 = vunpack.c.l.b16 %v1449
        %v1454 = vpack.c.b16 %v1453, %v1452
        %v1456 = vsel %vm399, %v1454, 0
        %v1459 = vand.u32 %v1439, %v406
        %v1462 = vand.u32 %v1440, %v406
        %v1465 = vand.u32 %v1441, %v406
        %v1468 = vand.u32 %v1442, %v406
        %v1471 = vand.u32 %v1443, %v406
        %v1474 = vand.u32 %v1444, %v406
        %v1477 = vand.u32 %v1445, %v406
        %v1480 = vand.u32 %v1446, %v406
        %1482 = vmatprep.subr.bf16.mxu0 %v1462
        %1483 = vmatpush1.bf16.msra.mxu0 %v1459
        %1484 = vmatprep.subr.bf16.mxu0 0
        %1485 = vmatpush1.bf16.msra.mxu0 0
        %1486 = vmatprep.subr.bf16.mxu0 0
        %1487 = vmatpush1.bf16.msra.mxu0 0
        %1488 = vmatprep.subr.bf16.mxu0 0
        %1489 = vmatpush1.bf16.msra.mxu0 0
        %1490 = vmatprep.subr.bf16.mxu0 0
        %1491 = vmatpush1.bf16.msra.mxu0 0
        %1492 = vmatprep.subr.bf16.mxu0 0
        %1493 = vmatpush1.bf16.msra.mxu0 0
        %1494 = vmatprep.subr.bf16.mxu0 0
        %1495 = vmatpush1.bf16.msra.mxu0 0
        %1496 = vmatprep.subr.bf16.mxu0 0
        %1497 = vmatpush1.bf16.msra.mxu0 0
        %1498 = vmatprep.subr.bf16.mxu0 0
        %1499 = vmatpush1.bf16.msra.mxu0 0
        %1500 = vmatprep.subr.bf16.mxu0 0
        %1501 = vmatpush1.bf16.msra.mxu0 0
        %1502 = vmatprep.subr.bf16.mxu0 0
        %1503 = vmatpush1.bf16.msra.mxu0 0
        %1504 = vmatprep.subr.bf16.mxu0 0
        %1505 = vmatpush1.bf16.msra.mxu0 0
        %1506 = vmatprep.subr.bf16.mxu0 0
        %1507 = vmatpush1.bf16.msra.mxu0 0
        %1508 = vmatprep.subr.bf16.mxu0 0
        %1509 = vmatpush1.bf16.msra.mxu0 0
        %1510 = vmatprep.subr.bf16.mxu0 0
        %1511 = vmatpush1.bf16.msra.mxu0 0
        %1512 = vmatprep.subr.bf16.mxu0 0
        %1513 = vmatpush1.bf16.msra.mxu0 0
        %1514 = vmatprep.mubr.bf16.mxu0 0
        %1515 = vmatmul.mubr.bf16.gmra.mrb[0].mxu0 %v1456
        %v1516 = vpop.f32.mrb[0].mxu0
        %v1517 = vadd.f32 0.0, %v1516
        %v1518 = vpop.f32.mrb[0].mxu0
        %v1519 = vadd.f32 0.0, %v1518
        %v1520 = vpop.f32.mrb[0].mxu0
        %v1521 = vadd.f32 0.0, %v1520
        %v1522 = vpop.f32.mrb[0].mxu0
        %v1523 = vadd.f32 0.0, %v1522
        %1524 = vdwg.mxu0
        %1525 = vmatprep.subr.bf16.mxu0 %v1468
        %1526 = vmatpush1.bf16.msra.mxu0 %v1465
        %1527 = vmatprep.subr.bf16.mxu0 0
        %1528 = vmatpush1.bf16.msra.mxu0 0
        %1529 = vmatprep.subr.bf16.mxu0 0
        %1530 = vmatpush1.bf16.msra.mxu0 0
        %1531 = vmatprep.subr.bf16.mxu0 0
        %1532 = vmatpush1.bf16.msra.mxu0 0
        %1533 = vmatprep.subr.bf16.mxu0 0
        %1534 = vmatpush1.bf16.msra.mxu0 0
        %1535 = vmatprep.subr.bf16.mxu0 0
        %1536 = vmatpush1.bf16.msra.mxu0 0
        %1537 = vmatprep.subr.bf16.mxu0 0
        %1538 = vmatpush1.bf16.msra.mxu0 0
        %1539 = vmatprep.subr.bf16.mxu0 0
        %1540 = vmatpush1.bf16.msra.mxu0 0
        %1541 = vmatprep.subr.bf16.mxu0 0
        %1542 = vmatpush1.bf16.msra.mxu0 0
        %1543 = vmatprep.subr.bf16.mxu0 0
        %1544 = vmatpush1.bf16.msra.mxu0 0
        %1545 = vmatprep.subr.bf16.mxu0 0
        %1546 = vmatpush1.bf16.msra.mxu0 0
        %1547 = vmatprep.subr.bf16.mxu0 0
        %1548 = vmatpush1.bf16.msra.mxu0 0
        %1549 = vmatprep.subr.bf16.mxu0 0
        %1550 = vmatpush1.bf16.msra.mxu0 0
        %1551 = vmatprep.subr.bf16.mxu0 0
        %1552 = vmatpush1.bf16.msra.mxu0 0
        %1553 = vmatprep.subr.bf16.mxu0 0
        %1554 = vmatpush1.bf16.msra.mxu0 0
        %1555 = vmatprep.subr.bf16.mxu0 0
        %1556 = vmatpush1.bf16.msra.mxu0 0
        %1557 = vmatprep.mubr.bf16.mxu0 0
        %1558 = vmatmul.mubr.bf16.gmra.mrb[0].mxu0 %v1456
        %v1559 = vpop.f32.mrb[0].mxu0
        %v1560 = vadd.f32 0.0, %v1559
        %v1561 = vpop.f32.mrb[0].mxu0
        %v1562 = vadd.f32 0.0, %v1561
        %v1563 = vpop.f32.mrb[0].mxu0
        %v1564 = vadd.f32 0.0, %v1563
        %v1565 = vpop.f32.mrb[0].mxu0
        %v1566 = vadd.f32 0.0, %v1565
        %1567 = vdwg.mxu0
        %1568 = vmatprep.subr.bf16.mxu0 %v1474
        %1569 = vmatpush1.bf16.msra.mxu0 %v1471
        %1570 = vmatprep.subr.bf16.mxu0 0
        %1571 = vmatpush1.bf16.msra.mxu0 0
        %1572 = vmatprep.subr.bf16.mxu0 0
        %1573 = vmatpush1.bf16.msra.mxu0 0
        %1574 = vmatprep.subr.bf16.mxu0 0
        %1575 = vmatpush1.bf16.msra.mxu0 0
        %1576 = vmatprep.subr.bf16.mxu0 0
        %1577 = vmatpush1.bf16.msra.mxu0 0
        %1578 = vmatprep.subr.bf16.mxu0 0
        %1579 = vmatpush1.bf16.msra.mxu0 0
        %1580 = vmatprep.subr.bf16.mxu0 0
        %1581 = vmatpush1.bf16.msra.mxu0 0
        %1582 = vmatprep.subr.bf16.mxu0 0
        %1583 = vmatpush1.bf16.msra.mxu0 0
        %1584 = vmatprep.subr.bf16.mxu0 0
        %1585 = vmatpush1.bf16.msra.mxu0 0
        %1586 = vmatprep.subr.bf16.mxu0 0
        %1587 = vmatpush1.bf16.msra.mxu0 0
        %1588 = vmatprep.subr.bf16.mxu0 0
        %1589 = vmatpush1.bf16.msra.mxu0 0
        %1590 = vmatprep.subr.bf16.mxu0 0
        %1591 = vmatpush1.bf16.msra.mxu0 0
        %1592 = vmatprep.subr.bf16.mxu0 0
        %1593 = vmatpush1.bf16.msra.mxu0 0
        %1594 = vmatprep.subr.bf16.mxu0 0
        %1595 = vmatpush1.bf16.msra.mxu0 0
        %1596 = vmatprep.subr.bf16.mxu0 0
        %1597 = vmatpush1.bf16.msra.mxu0 0
        %1598 = vmatprep.subr.bf16.mxu0 0
        %1599 = vmatpush1.bf16.msra.mxu0 0
        %1600 = vmatprep.mubr.bf16.mxu0 0
        %1601 = vmatmul.mubr.bf16.gmra.mrb[0].mxu0 %v1456
        %v1602 = vpop.f32.mrb[0].mxu0
        %v1603 = vadd.f32 0.0, %v1602
        %v1604 = vpop.f32.mrb[0].mxu0
        %v1605 = vadd.f32 0.0, %v1604
        %v1606 = vpop.f32.mrb[0].mxu0
        %v1607 = vadd.f32 0.0, %v1606
        %v1608 = vpop.f32.mrb[0].mxu0
        %v1609 = vadd.f32 0.0, %v1608
        %1610 = vdwg.mxu0
        %1611 = vmatprep.subr.bf16.mxu0 %v1480
        %1612 = vmatpush1.bf16.msra.mxu0 %v1477
        %1613 = vmatprep.subr.bf16.mxu0 0
        %1614 = vmatpush1.bf16.msra.mxu0 0
        %1615 = vmatprep.subr.bf16.mxu0 0
        %1616 = vmatpush1.bf16.msra.mxu0 0
        %1617 = vmatprep.subr.bf16.mxu0 0
        %1618 = vmatpush1.bf16.msra.mxu0 0
        %1619 = vmatprep.subr.bf16.mxu0 0
        %1620 = vmatpush1.bf16.msra.mxu0 0
        %1621 = vmatprep.subr.bf16.mxu0 0
        %1622 = vmatpush1.bf16.msra.mxu0 0
        %1623 = vmatprep.subr.bf16.mxu0 0
        %1624 = vmatpush1.bf16.msra.mxu0 0
        %1625 = vmatprep.subr.bf16.mxu0 0
        %1626 = vmatpush1.bf16.msra.mxu0 0
        %1627 = vmatprep.subr.bf16.mxu0 0
        %1628 = vmatpush1.bf16.msra.mxu0 0
        %1629 = vmatprep.subr.bf16.mxu0 0
        %1630 = vmatpush1.bf16.msra.mxu0 0
        %1631 = vmatprep.subr.bf16.mxu0 0
        %1632 = vmatpush1.bf16.msra.mxu0 0
        %1633 = vmatprep.subr.bf16.mxu0 0
        %1634 = vmatpush1.bf16.msra.mxu0 0
        %1635 = vmatprep.subr.bf16.mxu0 0
        %1636 = vmatpush1.bf16.msra.mxu0 0
        %1637 = vmatprep.subr.bf16.mxu0 0
        %1638 = vmatpush1.bf16.msra.mxu0 0
        %1639 = vmatprep.subr.bf16.mxu0 0
        %1640 = vmatpush1.bf16.msra.mxu0 0
        %1641 = vmatprep.subr.bf16.mxu0 0
        %1642 = vmatpush1.bf16.msra.mxu0 0
        %1643 = vmatprep.mubr.bf16.mxu0 0
        %1644 = vmatmul.mubr.bf16.gmra.mrb[0].mxu0 %v1456
        %v1645 = vpop.f32.mrb[0].mxu0
        %v1646 = vadd.f32 0.0, %v1645
        %v1647 = vpop.f32.mrb[0].mxu0
        %v1648 = vadd.f32 0.0, %v1647
        %v1649 = vpop.f32.mrb[0].mxu0
        %v1650 = vadd.f32 0.0, %v1649
        %v1651 = vpop.f32.mrb[0].mxu0
        %v1652 = vadd.f32 0.0, %v1651
        %1653 = vdwg.mxu0
        %v1654 = vadd.f32 %v1399, %v1517
        %v1655 = vadd.f32 %v1400, %v1519
        %v1656 = vadd.f32 %v1401, %v1560
        %v1657 = vadd.f32 %v1402, %v1562
        %v1658 = vadd.f32 %v1403, %v1603
        %v1659 = vadd.f32 %v1404, %v1605
        %v1660 = vadd.f32 %v1405, %v1646
        %v1661 = vadd.f32 %v1406, %v1648
        %v1662 = vadd.f32 %v1407, %v1521
        %v1663 = vadd.f32 %v1408, %v1523
        %v1664 = vadd.f32 %v1409, %v1564
        %v1665 = vadd.f32 %v1410, %v1566
        %v1666 = vadd.f32 %v1411, %v1607
        %v1667 = vadd.f32 %v1412, %v1609
        %v1668 = vadd.f32 %v1413, %v1650
        %v1669 = vadd.f32 %v1414, %v1652
        %1670 = vrot.lane.b32.xlu0 %v170, 127
        %v1671 = vpop.permute.xlu0 %1670
        %1672 = vrot.lane.b32.xlu0 %v195, 127
        %v1673 = vpop.permute.xlu0 %1672
        %1674 = vrot.lane.b32.xlu0 %v171, 127
        %v1675 = vpop.permute.xlu0 %1674
        %1676 = vrot.lane.b32.xlu0 %v196, 127
        %v1677 = vpop.permute.xlu0 %1676
        %1678 = vrot.lane.b32.xlu0 %v172, 127
        %v1679 = vpop.permute.xlu0 %1678
        %1680 = vrot.lane.b32.xlu0 %v197, 127
        %v1681 = vpop.permute.xlu0 %1680
        %1682 = vrot.lane.b32.xlu0 %v173, 127
        %v1683 = vpop.permute.xlu0 %1682
        %1684 = vrot.lane.b32.xlu0 %v198, 127
        %v1685 = vpop.permute.xlu0 %1684
        %vm1686 = vcmp.lt.s32.totalorder %v175, 127
        %v1687 = vsel %vm1686, %v1683, %v1685
        %v1688 = vsel %vm1686, %v1681, %v1683
        %v1689 = vsel %vm1686, %v1679, %v1681
        %v1690 = vsel %vm1686, %v1677, %v1679
        %v1691 = vsel %vm1686, %v1675, %v1677
        %v1692 = vsel %vm1686, %v1673, %v1675
        %v1693 = vsel %vm1686, %v1671, %v1673
        %v1694 = vsel %vm1686, %v1685, %v1671
        %vm1695 = vmand %vm1152, %vm840
        %vm1696 = vmand %vm1153, %vm841
        %vm1697 = vmand %vm1154, %vm842
        %vm1698 = vmand %vm1155, %vm843
        %vm1699 = vmand %vm1156, %vm844
        %vm1700 = vmand %vm1157, %vm845
        %vm1701 = vmand %vm1158, %vm846
        %vm1702 = vmand %vm1159, %vm847
        %vm1703 = vmand %vm1695, %vm856
        %vm1704 = vmand %vm1696, %vm857
        %vm1705 = vmand %vm1697, %vm858
        %vm1706 = vmand %vm1698, %vm859
        %vm1707 = vmand %vm1699, %vm860
        %vm1708 = vmand %vm1700, %vm861
        %vm1709 = vmand %vm1701, %vm862
        %vm1710 = vmand %vm1702, %vm863
        %v1711 = vsel %vm1703, %v1693, 0.0
        %v1712 = vsel %vm1704, %v1692, 0.0
        %v1713 = vsel %vm1705, %v1691, 0.0
        %v1714 = vsel %vm1706, %v1690, 0.0
        %v1715 = vsel %vm1707, %v1689, 0.0
        %v1716 = vsel %vm1708, %v1688, 0.0
        %v1717 = vsel %vm1709, %v1687, 0.0
        %v1718 = vsel %vm1710, %v1694, 0.0
        %v1719 = vpack.c.bf16 %v1711, %v1711
        %v1720 = vpack.c.bf16 %v1712, %v1712
        %v1721 = vpack.c.bf16 %v1713, %v1713
        %v1722 = vpack.c.bf16 %v1714, %v1714
        %v1723 = vpack.c.bf16 %v1715, %v1715
        %v1724 = vpack.c.bf16 %v1716, %v1716
        %v1725 = vpack.c.bf16 %v1717, %v1717
        %v1726 = vpack.c.bf16 %v1718, %v1718
        %s1727 = scalar_lea.vmem %s1, 40
        %v1728 = vld [vmem:[%s1727] sm:$0xf]
        %v1729 = vld [vmem:[%s1727 + $0x4] sm:$0xf]
        %v1732 = vunpack.c.l.b16 %v1728
        %v1733 = vunpack.c.l.b16 %v1729
        %v1734 = vpack.c.b16 %v1733, %v1732
        %v1736 = vsel %vm399, %v1734, 0
        %v1739 = vand.u32 %v1719, %v406
        %v1742 = vand.u32 %v1720, %v406
        %v1745 = vand.u32 %v1721, %v406
        %v1748 = vand.u32 %v1722, %v406
        %v1751 = vand.u32 %v1723, %v406
        %v1754 = vand.u32 %v1724, %v406
        %v1757 = vand.u32 %v1725, %v406
        %v1760 = vand.u32 %v1726, %v406
        %1762 = vmatprep.subr.bf16.mxu0 %v1742
        %1763 = vmatpush1.bf16.msra.mxu0 %v1739
        %1764 = vmatprep.subr.bf16.mxu0 0
        %1765 = vmatpush1.bf16.msra.mxu0 0
        %1766 = vmatprep.subr.bf16.mxu0 0
        %1767 = vmatpush1.bf16.msra.mxu0 0
        %1768 = vmatprep.subr.bf16.mxu0 0
        %1769 = vmatpush1.bf16.msra.mxu0 0
        %1770 = vmatprep.subr.bf16.mxu0 0
        %1771 = vmatpush1.bf16.msra.mxu0 0
        %1772 = vmatprep.subr.bf16.mxu0 0
        %1773 = vmatpush1.bf16.msra.mxu0 0
        %1774 = vmatprep.subr.bf16.mxu0 0
        %1775 = vmatpush1.bf16.msra.mxu0 0
        %1776 = vmatprep.subr.bf16.mxu0 0
        %1777 = vmatpush1.bf16.msra.mxu0 0
        %1778 = vmatprep.subr.bf16.mxu0 0
        %1779 = vmatpush1.bf16.msra.mxu0 0
        %1780 = vmatprep.subr.bf16.mxu0 0
        %1781 = vmatpush1.bf16.msra.mxu0 0
        %1782 = vmatprep.subr.bf16.mxu0 0
        %1783 = vmatpush1.bf16.msra.mxu0 0
        %1784 = vmatprep.subr.bf16.mxu0 0
        %1785 = vmatpush1.bf16.msra.mxu0 0
        %1786 = vmatprep.subr.bf16.mxu0 0
        %1787 = vmatpush1.bf16.msra.mxu0 0
        %1788 = vmatprep.subr.bf16.mxu0 0
        %1789 = vmatpush1.bf16.msra.mxu0 0
        %1790 = vmatprep.subr.bf16.mxu0 0
        %1791 = vmatpush1.bf16.msra.mxu0 0
        %1792 = vmatprep.subr.bf16.mxu0 0
        %1793 = vmatpush1.bf16.msra.mxu0 0
        %1794 = vmatprep.mubr.bf16.mxu0 0
        %1795 = vmatmul.mubr.bf16.gmra.mrb[0].mxu0 %v1736
        %v1796 = vpop.f32.mrb[0].mxu0
        %v1797 = vadd.f32 0.0, %v1796
        %v1798 = vpop.f32.mrb[0].mxu0
        %v1799 = vadd.f32 0.0, %v1798
        %v1800 = vpop.f32.mrb[0].mxu0
        %v1801 = vadd.f32 0.0, %v1800
        %v1802 = vpop.f32.mrb[0].mxu0
        %v1803 = vadd.f32 0.0, %v1802
        %1804 = vdwg.mxu0
        %1805 = vmatprep.subr.bf16.mxu0 %v1748
        %1806 = vmatpush1.bf16.msra.mxu0 %v1745
        %1807 = vmatprep.subr.bf16.mxu0 0
        %1808 = vmatpush1.bf16.msra.mxu0 0
        %1809 = vmatprep.subr.bf16.mxu0 0
        %1810 = vmatpush1.bf16.msra.mxu0 0
        %1811 = vmatprep.subr.bf16.mxu0 0
        %1812 = vmatpush1.bf16.msra.mxu0 0
        %1813 = vmatprep.subr.bf16.mxu0 0
        %1814 = vmatpush1.bf16.msra.mxu0 0
        %1815 = vmatprep.subr.bf16.mxu0 0
        %1816 = vmatpush1.bf16.msra.mxu0 0
        %1817 = vmatprep.subr.bf16.mxu0 0
        %1818 = vmatpush1.bf16.msra.mxu0 0
        %1819 = vmatprep.subr.bf16.mxu0 0
        %1820 = vmatpush1.bf16.msra.mxu0 0
        %1821 = vmatprep.subr.bf16.mxu0 0
        %1822 = vmatpush1.bf16.msra.mxu0 0
        %1823 = vmatprep.subr.bf16.mxu0 0
        %1824 = vmatpush1.bf16.msra.mxu0 0
        %1825 = vmatprep.subr.bf16.mxu0 0
        %1826 = vmatpush1.bf16.msra.mxu0 0
        %1827 = vmatprep.subr.bf16.mxu0 0
        %1828 = vmatpush1.bf16.msra.mxu0 0
        %1829 = vmatprep.subr.bf16.mxu0 0
        %1830 = vmatpush1.bf16.msra.mxu0 0
        %1831 = vmatprep.subr.bf16.mxu0 0
        %1832 = vmatpush1.bf16.msra.mxu0 0
        %1833 = vmatprep.subr.bf16.mxu0 0
        %1834 = vmatpush1.bf16.msra.mxu0 0
        %1835 = vmatprep.subr.bf16.mxu0 0
        %1836 = vmatpush1.bf16.msra.mxu0 0
        %1837 = vmatprep.mubr.bf16.mxu0 0
        %1838 = vmatmul.mubr.bf16.gmra.mrb[0].mxu0 %v1736
        %v1839 = vpop.f32.mrb[0].mxu0
        %v1840 = vadd.f32 0.0, %v1839
        %v1841 = vpop.f32.mrb[0].mxu0
        %v1842 = vadd.f32 0.0, %v1841
        %v1843 = vpop.f32.mrb[0].mxu0
        %v1844 = vadd.f32 0.0, %v1843
        %v1845 = vpop.f32.mrb[0].mxu0
        %v1846 = vadd.f32 0.0, %v1845
        %1847 = vdwg.mxu0
        %1848 = vmatprep.subr.bf16.mxu0 %v1754
        %1849 = vmatpush1.bf16.msra.mxu0 %v1751
        %1850 = vmatprep.subr.bf16.mxu0 0
        %1851 = vmatpush1.bf16.msra.mxu0 0
        %1852 = vmatprep.subr.bf16.mxu0 0
        %1853 = vmatpush1.bf16.msra.mxu0 0
        %1854 = vmatprep.subr.bf16.mxu0 0
        %1855 = vmatpush1.bf16.msra.mxu0 0
        %1856 = vmatprep.subr.bf16.mxu0 0
        %1857 = vmatpush1.bf16.msra.mxu0 0
        %1858 = vmatprep.subr.bf16.mxu0 0
        %1859 = vmatpush1.bf16.msra.mxu0 0
        %1860 = vmatprep.subr.bf16.mxu0 0
        %1861 = vmatpush1.bf16.msra.mxu0 0
        %1862 = vmatprep.subr.bf16.mxu0 0
        %1863 = vmatpush1.bf16.msra.mxu0 0
        %1864 = vmatprep.subr.bf16.mxu0 0
        %1865 = vmatpush1.bf16.msra.mxu0 0
        %1866 = vmatprep.subr.bf16.mxu0 0
        %1867 = vmatpush1.bf16.msra.mxu0 0
        %1868 = vmatprep.subr.bf16.mxu0 0
        %1869 = vmatpush1.bf16.msra.mxu0 0
        %1870 = vmatprep.subr.bf16.mxu0 0
        %1871 = vmatpush1.bf16.msra.mxu0 0
        %1872 = vmatprep.subr.bf16.mxu0 0
        %1873 = vmatpush1.bf16.msra.mxu0 0
        %1874 = vmatprep.subr.bf16.mxu0 0
        %1875 = vmatpush1.bf16.msra.mxu0 0
        %1876 = vmatprep.subr.bf16.mxu0 0
        %1877 = vmatpush1.bf16.msra.mxu0 0
        %1878 = vmatprep.subr.bf16.mxu0 0
        %1879 = vmatpush1.bf16.msra.mxu0 0
        %1880 = vmatprep.mubr.bf16.mxu0 0
        %1881 = vmatmul.mubr.bf16.gmra.mrb[0].mxu0 %v1736
        %v1882 = vpop.f32.mrb[0].mxu0
        %v1883 = vadd.f32 0.0, %v1882
        %v1884 = vpop.f32.mrb[0].mxu0
        %v1885 = vadd.f32 0.0, %v1884
        %v1886 = vpop.f32.mrb[0].mxu0
        %v1887 = vadd.f32 0.0, %v1886
        %v1888 = vpop.f32.mrb[0].mxu0
        %v1889 = vadd.f32 0.0, %v1888
        %1890 = vdwg.mxu0
        %1891 = vmatprep.subr.bf16.mxu0 %v1760
        %1892 = vmatpush1.bf16.msra.mxu0 %v1757
        %1893 = vmatprep.subr.bf16.mxu0 0
        %1894 = vmatpush1.bf16.msra.mxu0 0
        %1895 = vmatprep.subr.bf16.mxu0 0
        %1896 = vmatpush1.bf16.msra.mxu0 0
        %1897 = vmatprep.subr.bf16.mxu0 0
        %1898 = vmatpush1.bf16.msra.mxu0 0
        %1899 = vmatprep.subr.bf16.mxu0 0
        %1900 = vmatpush1.bf16.msra.mxu0 0
        %1901 = vmatprep.subr.bf16.mxu0 0
        %1902 = vmatpush1.bf16.msra.mxu0 0
        %1903 = vmatprep.subr.bf16.mxu0 0
        %1904 = vmatpush1.bf16.msra.mxu0 0
        %1905 = vmatprep.subr.bf16.mxu0 0
        %1906 = vmatpush1.bf16.msra.mxu0 0
        %1907 = vmatprep.subr.bf16.mxu0 0
        %1908 = vmatpush1.bf16.msra.mxu0 0
        %1909 = vmatprep.subr.bf16.mxu0 0
        %1910 = vmatpush1.bf16.msra.mxu0 0
        %1911 = vmatprep.subr.bf16.mxu0 0
        %1912 = vmatpush1.bf16.msra.mxu0 0
        %1913 = vmatprep.subr.bf16.mxu0 0
        %1914 = vmatpush1.bf16.msra.mxu0 0
        %1915 = vmatprep.subr.bf16.mxu0 0
        %1916 = vmatpush1.bf16.msra.mxu0 0
        %1917 = vmatprep.subr.bf16.mxu0 0
        %1918 = vmatpush1.bf16.msra.mxu0 0
        %1919 = vmatprep.subr.bf16.mxu0 0
        %1920 = vmatpush1.bf16.msra.mxu0 0
        %1921 = vmatprep.subr.bf16.mxu0 0
        %1922 = vmatpush1.bf16.msra.mxu0 0
        %1923 = vmatprep.mubr.bf16.mxu0 0
        %1924 = vmatmul.mubr.bf16.gmra.mrb[0].mxu0 %v1736
        %v1925 = vpop.f32.mrb[0].mxu0
        %v1926 = vadd.f32 0.0, %v1925
        %v1927 = vpop.f32.mrb[0].mxu0
        %v1928 = vadd.f32 0.0, %v1927
        %v1929 = vpop.f32.mrb[0].mxu0
        %v1930 = vadd.f32 0.0, %v1929
        %v1931 = vpop.f32.mrb[0].mxu0
        %v1932 = vadd.f32 0.0, %v1931
        %1933 = vdwg.mxu0
        %v1934 = vadd.f32 %v1654, %v1797
        %v1935 = vadd.f32 %v1655, %v1799
        %v1936 = vadd.f32 %v1656, %v1840
        %v1937 = vadd.f32 %v1657, %v1842
        %v1938 = vadd.f32 %v1658, %v1883
        %v1939 = vadd.f32 %v1659, %v1885
        %v1940 = vadd.f32 %v1660, %v1926
        %v1941 = vadd.f32 %v1661, %v1928
        %v1942 = vadd.f32 %v1662, %v1801
        %v1943 = vadd.f32 %v1663, %v1803
        %v1944 = vadd.f32 %v1664, %v1844
        %v1945 = vadd.f32 %v1665, %v1846
        %v1946 = vadd.f32 %v1666, %v1887
        %v1947 = vadd.f32 %v1667, %v1889
        %v1948 = vadd.f32 %v1668, %v1930
        %v1949 = vadd.f32 %v1669, %v1932
        %1950 = vrot.lane.b32.xlu0 %v170, 97
        %v1951 = vpop.permute.xlu0 %1950
        %1952 = vrot.lane.b32.xlu0 %v195, 97
        %v1953 = vpop.permute.xlu0 %1952
        %1954 = vrot.lane.b32.xlu0 %v171, 97
        %v1955 = vpop.permute.xlu0 %1954
        %1956 = vrot.lane.b32.xlu0 %v196, 97
        %v1957 = vpop.permute.xlu0 %1956
        %1958 = vrot.lane.b32.xlu0 %v172, 97
        %v1959 = vpop.permute.xlu0 %1958
        %1960 = vrot.lane.b32.xlu0 %v197, 97
        %v1961 = vpop.permute.xlu0 %1960
        %1962 = vrot.lane.b32.xlu0 %v173, 97
        %v1963 = vpop.permute.xlu0 %1962
        %1964 = vrot.lane.b32.xlu0 %v198, 97
        %v1965 = vpop.permute.xlu0 %1964
        %vm1966 = vcmp.lt.s32.totalorder %v175, 97
        %v1967 = vsel %vm1966, %v1963, %v1965
        %v1968 = vsel %vm1966, %v1961, %v1963
        %v1969 = vsel %vm1966, %v1959, %v1961
        %v1970 = vsel %vm1966, %v1957, %v1959
        %v1971 = vsel %vm1966, %v1955, %v1957
        %v1972 = vsel %vm1966, %v1953, %v1955
        %v1973 = vsel %vm1966, %v1951, %v1953
        %v1974 = vsel %vm1966, %v1965, %v1951
        %v1975 = vadd.s32 %v175, 32
        %v1976 = vadd.s32 %v176, 32
        %v1977 = vadd.s32 %v177, 32
        %v1978 = vadd.s32 %v178, 32
        %v1979 = vadd.s32 %v179, 32
        %v1980 = vadd.s32 %v180, 32
        %v1981 = vadd.s32 %v181, 32
        %v1982 = vadd.s32 %v182, 32
        %vm1983 = vcmp.ge.s32.totalorder %v1975, 0
        %vm1984 = vcmp.ge.s32.totalorder %v1976, 0
        %vm1985 = vcmp.ge.s32.totalorder %v1977, 0
        %vm1986 = vcmp.ge.s32.totalorder %v1978, 0
        %vm1987 = vcmp.ge.s32.totalorder %v1979, 0
        %vm1988 = vcmp.ge.s32.totalorder %v1980, 0
        %vm1989 = vcmp.ge.s32.totalorder %v1981, 0
        %vm1990 = vcmp.ge.s32.totalorder %v1982, 0
        %vm1991 = vcmp.lt.s32.totalorder %v1975, 1024
        %vm1992 = vcmp.lt.s32.totalorder %v1976, 1024
        %vm1993 = vcmp.lt.s32.totalorder %v1977, 1024
        %vm1994 = vcmp.lt.s32.totalorder %v1978, 1024
        %vm1995 = vcmp.lt.s32.totalorder %v1979, 1024
        %vm1996 = vcmp.lt.s32.totalorder %v1980, 1024
        %vm1997 = vcmp.lt.s32.totalorder %v1981, 1024
        %vm1998 = vcmp.lt.s32.totalorder %v1982, 1024
        %vm1999 = vmand %vm1983, %vm1991
        %vm2000 = vmand %vm1984, %vm1992
        %vm2001 = vmand %vm1985, %vm1993
        %vm2002 = vmand %vm1986, %vm1994
        %vm2003 = vmand %vm1987, %vm1995
        %vm2004 = vmand %vm1988, %vm1996
        %vm2005 = vmand %vm1989, %vm1997
        %vm2006 = vmand %vm1990, %vm1998
        %vm2007 = vmand %vm1999, %vm268
        %vm2008 = vmand %vm2000, %vm269
        %vm2009 = vmand %vm2001, %vm270
        %vm2010 = vmand %vm2002, %vm271
        %vm2011 = vmand %vm2003, %vm272
        %vm2012 = vmand %vm2004, %vm273
        %vm2013 = vmand %vm2005, %vm274
        %vm2014 = vmand %vm2006, %vm275
        %vm2015 = vmand %vm2007, %vm284
        %vm2016 = vmand %vm2008, %vm285
        %vm2017 = vmand %vm2009, %vm286
        %vm2018 = vmand %vm2010, %vm287
        %vm2019 = vmand %vm2011, %vm288
        %vm2020 = vmand %vm2012, %vm289
        %vm2021 = vmand %vm2013, %vm290
        %vm2022 = vmand %vm2014, %vm291
        %v2023 = vsel %vm2015, %v1973, 0.0
        %v2024 = vsel %vm2016, %v1972, 0.0
        %v2025 = vsel %vm2017, %v1971, 0.0
        %v2026 = vsel %vm2018, %v1970, 0.0
        %v2027 = vsel %vm2019, %v1969, 0.0
        %v2028 = vsel %vm2020, %v1968, 0.0
        %v2029 = vsel %vm2021, %v1967, 0.0
        %v2030 = vsel %vm2022, %v1974, 0.0
        %v2031 = vpack.c.bf16 %v2023, %v2023
        %v2032 = vpack.c.bf16 %v2024, %v2024
        %v2033 = vpack.c.bf16 %v2025, %v2025
        %v2034 = vpack.c.bf16 %v2026, %v2026
        %v2035 = vpack.c.bf16 %v2027, %v2027
        %v2036 = vpack.c.bf16 %v2028, %v2028
        %v2037 = vpack.c.bf16 %v2029, %v2029
        %v2038 = vpack.c.bf16 %v2030, %v2030
        %s2039 = scalar_lea.vmem %s1, 48
        %v2040 = vld [vmem:[%s2039] sm:$0xf]
        %v2041 = vld [vmem:[%s2039 + $0x4] sm:$0xf]
        %v2044 = vunpack.c.l.b16 %v2040
        %v2045 = vunpack.c.l.b16 %v2041
        %v2046 = vpack.c.b16 %v2045, %v2044
        %v2048 = vsel %vm399, %v2046, 0
        %v2051 = vand.u32 %v2031, %v406
        %v2054 = vand.u32 %v2032, %v406
        %v2057 = vand.u32 %v2033, %v406
        %v2060 = vand.u32 %v2034, %v406
        %v2063 = vand.u32 %v2035, %v406
        %v2066 = vand.u32 %v2036, %v406
        %v2069 = vand.u32 %v2037, %v406
        %v2072 = vand.u32 %v2038, %v406
        %2074 = vmatprep.subr.bf16.mxu0 %v2054
        %2075 = vmatpush1.bf16.msra.mxu0 %v2051
        %2076 = vmatprep.subr.bf16.mxu0 0
        %2077 = vmatpush1.bf16.msra.mxu0 0
        %2078 = vmatprep.subr.bf16.mxu0 0
        %2079 = vmatpush1.bf16.msra.mxu0 0
        %2080 = vmatprep.subr.bf16.mxu0 0
        %2081 = vmatpush1.bf16.msra.mxu0 0
        %2082 = vmatprep.subr.bf16.mxu0 0
        %2083 = vmatpush1.bf16.msra.mxu0 0
        %2084 = vmatprep.subr.bf16.mxu0 0
        %2085 = vmatpush1.bf16.msra.mxu0 0
        %2086 = vmatprep.subr.bf16.mxu0 0
        %2087 = vmatpush1.bf16.msra.mxu0 0
        %2088 = vmatprep.subr.bf16.mxu0 0
        %2089 = vmatpush1.bf16.msra.mxu0 0
        %2090 = vmatprep.subr.bf16.mxu0 0
        %2091 = vmatpush1.bf16.msra.mxu0 0
        %2092 = vmatprep.subr.bf16.mxu0 0
        %2093 = vmatpush1.bf16.msra.mxu0 0
        %2094 = vmatprep.subr.bf16.mxu0 0
        %2095 = vmatpush1.bf16.msra.mxu0 0
        %2096 = vmatprep.subr.bf16.mxu0 0
        %2097 = vmatpush1.bf16.msra.mxu0 0
        %2098 = vmatprep.subr.bf16.mxu0 0
        %2099 = vmatpush1.bf16.msra.mxu0 0
        %2100 = vmatprep.subr.bf16.mxu0 0
        %2101 = vmatpush1.bf16.msra.mxu0 0
        %2102 = vmatprep.subr.bf16.mxu0 0
        %2103 = vmatpush1.bf16.msra.mxu0 0
        %2104 = vmatprep.subr.bf16.mxu0 0
        %2105 = vmatpush1.bf16.msra.mxu0 0
        %2106 = vmatprep.mubr.bf16.mxu0 0
        %2107 = vmatmul.mubr.bf16.gmra.mrb[0].mxu0 %v2048
        %v2108 = vpop.f32.mrb[0].mxu0
        %v2109 = vadd.f32 0.0, %v2108
        %v2110 = vpop.f32.mrb[0].mxu0
        %v2111 = vadd.f32 0.0, %v2110
        %v2112 = vpop.f32.mrb[0].mxu0
        %v2113 = vadd.f32 0.0, %v2112
        %v2114 = vpop.f32.mrb[0].mxu0
        %v2115 = vadd.f32 0.0, %v2114
        %2116 = vdwg.mxu0
        %2117 = vmatprep.subr.bf16.mxu0 %v2060
        %2118 = vmatpush1.bf16.msra.mxu0 %v2057
        %2119 = vmatprep.subr.bf16.mxu0 0
        %2120 = vmatpush1.bf16.msra.mxu0 0
        %2121 = vmatprep.subr.bf16.mxu0 0
        %2122 = vmatpush1.bf16.msra.mxu0 0
        %2123 = vmatprep.subr.bf16.mxu0 0
        %2124 = vmatpush1.bf16.msra.mxu0 0
        %2125 = vmatprep.subr.bf16.mxu0 0
        %2126 = vmatpush1.bf16.msra.mxu0 0
        %2127 = vmatprep.subr.bf16.mxu0 0
        %2128 = vmatpush1.bf16.msra.mxu0 0
        %2129 = vmatprep.subr.bf16.mxu0 0
        %2130 = vmatpush1.bf16.msra.mxu0 0
        %2131 = vmatprep.subr.bf16.mxu0 0
        %2132 = vmatpush1.bf16.msra.mxu0 0
        %2133 = vmatprep.subr.bf16.mxu0 0
        %2134 = vmatpush1.bf16.msra.mxu0 0
        %2135 = vmatprep.subr.bf16.mxu0 0
        %2136 = vmatpush1.bf16.msra.mxu0 0
        %2137 = vmatprep.subr.bf16.mxu0 0
        %2138 = vmatpush1.bf16.msra.mxu0 0
        %2139 = vmatprep.subr.bf16.mxu0 0
        %2140 = vmatpush1.bf16.msra.mxu0 0
        %2141 = vmatprep.subr.bf16.mxu0 0
        %2142 = vmatpush1.bf16.msra.mxu0 0
        %2143 = vmatprep.subr.bf16.mxu0 0
        %2144 = vmatpush1.bf16.msra.mxu0 0
        %2145 = vmatprep.subr.bf16.mxu0 0
        %2146 = vmatpush1.bf16.msra.mxu0 0
        %2147 = vmatprep.subr.bf16.mxu0 0
        %2148 = vmatpush1.bf16.msra.mxu0 0
        %2149 = vmatprep.mubr.bf16.mxu0 0
        %2150 = vmatmul.mubr.bf16.gmra.mrb[0].mxu0 %v2048
        %v2151 = vpop.f32.mrb[0].mxu0
        %v2152 = vadd.f32 0.0, %v2151
        %v2153 = vpop.f32.mrb[0].mxu0
        %v2154 = vadd.f32 0.0, %v2153
        %v2155 = vpop.f32.mrb[0].mxu0
        %v2156 = vadd.f32 0.0, %v2155
        %v2157 = vpop.f32.mrb[0].mxu0
        %v2158 = vadd.f32 0.0, %v2157
        %2159 = vdwg.mxu0
        %2160 = vmatprep.subr.bf16.mxu0 %v2066
        %2161 = vmatpush1.bf16.msra.mxu0 %v2063
        %2162 = vmatprep.subr.bf16.mxu0 0
        %2163 = vmatpush1.bf16.msra.mxu0 0
        %2164 = vmatprep.subr.bf16.mxu0 0
        %2165 = vmatpush1.bf16.msra.mxu0 0
        %2166 = vmatprep.subr.bf16.mxu0 0
        %2167 = vmatpush1.bf16.msra.mxu0 0
        %2168 = vmatprep.subr.bf16.mxu0 0
        %2169 = vmatpush1.bf16.msra.mxu0 0
        %2170 = vmatprep.subr.bf16.mxu0 0
        %2171 = vmatpush1.bf16.msra.mxu0 0
        %2172 = vmatprep.subr.bf16.mxu0 0
        %2173 = vmatpush1.bf16.msra.mxu0 0
        %2174 = vmatprep.subr.bf16.mxu0 0
        %2175 = vmatpush1.bf16.msra.mxu0 0
        %2176 = vmatprep.subr.bf16.mxu0 0
        %2177 = vmatpush1.bf16.msra.mxu0 0
        %2178 = vmatprep.subr.bf16.mxu0 0
        %2179 = vmatpush1.bf16.msra.mxu0 0
        %2180 = vmatprep.subr.bf16.mxu0 0
        %2181 = vmatpush1.bf16.msra.mxu0 0
        %2182 = vmatprep.subr.bf16.mxu0 0
        %2183 = vmatpush1.bf16.msra.mxu0 0
        %2184 = vmatprep.subr.bf16.mxu0 0
        %2185 = vmatpush1.bf16.msra.mxu0 0
        %2186 = vmatprep.subr.bf16.mxu0 0
        %2187 = vmatpush1.bf16.msra.mxu0 0
        %2188 = vmatprep.subr.bf16.mxu0 0
        %2189 = vmatpush1.bf16.msra.mxu0 0
        %2190 = vmatprep.subr.bf16.mxu0 0
        %2191 = vmatpush1.bf16.msra.mxu0 0
        %2192 = vmatprep.mubr.bf16.mxu0 0
        %2193 = vmatmul.mubr.bf16.gmra.mrb[0].mxu0 %v2048
        %v2194 = vpop.f32.mrb[0].mxu0
        %v2195 = vadd.f32 0.0, %v2194
        %v2196 = vpop.f32.mrb[0].mxu0
        %v2197 = vadd.f32 0.0, %v2196
        %v2198 = vpop.f32.mrb[0].mxu0
        %v2199 = vadd.f32 0.0, %v2198
        %v2200 = vpop.f32.mrb[0].mxu0
        %v2201 = vadd.f32 0.0, %v2200
        %2202 = vdwg.mxu0
        %2203 = vmatprep.subr.bf16.mxu0 %v2072
        %2204 = vmatpush1.bf16.msra.mxu0 %v2069
        %2205 = vmatprep.subr.bf16.mxu0 0
        %2206 = vmatpush1.bf16.msra.mxu0 0
        %2207 = vmatprep.subr.bf16.mxu0 0
        %2208 = vmatpush1.bf16.msra.mxu0 0
        %2209 = vmatprep.subr.bf16.mxu0 0
        %2210 = vmatpush1.bf16.msra.mxu0 0
        %2211 = vmatprep.subr.bf16.mxu0 0
        %2212 = vmatpush1.bf16.msra.mxu0 0
        %2213 = vmatprep.subr.bf16.mxu0 0
        %2214 = vmatpush1.bf16.msra.mxu0 0
        %2215 = vmatprep.subr.bf16.mxu0 0
        %2216 = vmatpush1.bf16.msra.mxu0 0
        %2217 = vmatprep.subr.bf16.mxu0 0
        %2218 = vmatpush1.bf16.msra.mxu0 0
        %2219 = vmatprep.subr.bf16.mxu0 0
        %2220 = vmatpush1.bf16.msra.mxu0 0
        %2221 = vmatprep.subr.bf16.mxu0 0
        %2222 = vmatpush1.bf16.msra.mxu0 0
        %2223 = vmatprep.subr.bf16.mxu0 0
        %2224 = vmatpush1.bf16.msra.mxu0 0
        %2225 = vmatprep.subr.bf16.mxu0 0
        %2226 = vmatpush1.bf16.msra.mxu0 0
        %2227 = vmatprep.subr.bf16.mxu0 0
        %2228 = vmatpush1.bf16.msra.mxu0 0
        %2229 = vmatprep.subr.bf16.mxu0 0
        %2230 = vmatpush1.bf16.msra.mxu0 0
        %2231 = vmatprep.subr.bf16.mxu0 0
        %2232 = vmatpush1.bf16.msra.mxu0 0
        %2233 = vmatprep.subr.bf16.mxu0 0
        %2234 = vmatpush1.bf16.msra.mxu0 0
        %2235 = vmatprep.mubr.bf16.mxu0 0
        %2236 = vmatmul.mubr.bf16.gmra.mrb[0].mxu0 %v2048
        %v2237 = vpop.f32.mrb[0].mxu0
        %v2238 = vadd.f32 0.0, %v2237
        %v2239 = vpop.f32.mrb[0].mxu0
        %v2240 = vadd.f32 0.0, %v2239
        %v2241 = vpop.f32.mrb[0].mxu0
        %v2242 = vadd.f32 0.0, %v2241
        %v2243 = vpop.f32.mrb[0].mxu0
        %v2244 = vadd.f32 0.0, %v2243
        %2245 = vdwg.mxu0
        %v2246 = vadd.f32 %v1934, %v2109
        %v2247 = vadd.f32 %v1935, %v2111
        %v2248 = vadd.f32 %v1936, %v2152
        %v2249 = vadd.f32 %v1937, %v2154
        %v2250 = vadd.f32 %v1938, %v2195
        %v2251 = vadd.f32 %v1939, %v2197
        %v2252 = vadd.f32 %v1940, %v2238
        %v2253 = vadd.f32 %v1941, %v2240
        %v2254 = vadd.f32 %v1942, %v2113
        %v2255 = vadd.f32 %v1943, %v2115
        %v2256 = vadd.f32 %v1944, %v2156
        %v2257 = vadd.f32 %v1945, %v2158
        %v2258 = vadd.f32 %v1946, %v2199
        %v2259 = vadd.f32 %v1947, %v2201
        %v2260 = vadd.f32 %v1948, %v2242
        %v2261 = vadd.f32 %v1949, %v2244
        %2262 = vrot.lane.b32.xlu0 %v170, 96
        %v2263 = vpop.permute.xlu0 %2262
        %2264 = vrot.lane.b32.xlu0 %v195, 96
        %v2265 = vpop.permute.xlu0 %2264
        %2266 = vrot.lane.b32.xlu0 %v171, 96
        %v2267 = vpop.permute.xlu0 %2266
        %2268 = vrot.lane.b32.xlu0 %v196, 96
        %v2269 = vpop.permute.xlu0 %2268
        %2270 = vrot.lane.b32.xlu0 %v172, 96
        %v2271 = vpop.permute.xlu0 %2270
        %2272 = vrot.lane.b32.xlu0 %v197, 96
        %v2273 = vpop.permute.xlu0 %2272
        %2274 = vrot.lane.b32.xlu0 %v173, 96
        %v2275 = vpop.permute.xlu0 %2274
        %2276 = vrot.lane.b32.xlu0 %v198, 96
        %v2277 = vpop.permute.xlu0 %2276
        %vm2278 = vcmp.lt.s32.totalorder %v175, 96
        %v2279 = vsel %vm2278, %v2275, %v2277
        %v2280 = vsel %vm2278, %v2273, %v2275
        %v2281 = vsel %vm2278, %v2271, %v2273
        %v2282 = vsel %vm2278, %v2269, %v2271
        %v2283 = vsel %vm2278, %v2267, %v2269
        %v2284 = vsel %vm2278, %v2265, %v2267
        %v2285 = vsel %vm2278, %v2263, %v2265
        %v2286 = vsel %vm2278, %v2277, %v2263
        %vm2287 = vmand %vm1999, %vm343
        %vm2288 = vmand %vm2000, %vm344
        %vm2289 = vmand %vm2001, %vm345
        %vm2290 = vmand %vm2002, %vm346
        %vm2291 = vmand %vm2003, %vm347
        %vm2292 = vmand %vm2004, %vm348
        %vm2293 = vmand %vm2005, %vm349
        %vm2294 = vmand %vm2006, %vm350
        %vm2295 = vmand %vm2287, %vm359
        %vm2296 = vmand %vm2288, %vm360
        %vm2297 = vmand %vm2289, %vm361
        %vm2298 = vmand %vm2290, %vm362
        %vm2299 = vmand %vm2291, %vm363
        %vm2300 = vmand %vm2292, %vm364
        %vm2301 = vmand %vm2293, %vm365
        %vm2302 = vmand %vm2294, %vm366
        %v2303 = vsel %vm2295, %v2285, 0.0
        %v2304 = vsel %vm2296, %v2284, 0.0
        %v2305 = vsel %vm2297, %v2283, 0.0
        %v2306 = vsel %vm2298, %v2282, 0.0
        %v2307 = vsel %vm2299, %v2281, 0.0
        %v2308 = vsel %vm2300, %v2280, 0.0
        %v2309 = vsel %vm2301, %v2279, 0.0
        %v2310 = vsel %vm2302, %v2286, 0.0
        %v2311 = vpack.c.bf16 %v2303, %v2303
        %v2312 = vpack.c.bf16 %v2304, %v2304
        %v2313 = vpack.c.bf16 %v2305, %v2305
        %v2314 = vpack.c.bf16 %v2306, %v2306
        %v2315 = vpack.c.bf16 %v2307, %v2307
        %v2316 = vpack.c.bf16 %v2308, %v2308
        %v2317 = vpack.c.bf16 %v2309, %v2309
        %v2318 = vpack.c.bf16 %v2310, %v2310
        %s2319 = scalar_lea.vmem %s1, 56
        %v2320 = vld [vmem:[%s2319] sm:$0xf]
        %v2321 = vld [vmem:[%s2319 + $0x4] sm:$0xf]
        %v2324 = vunpack.c.l.b16 %v2320
        %v2325 = vunpack.c.l.b16 %v2321
        %v2326 = vpack.c.b16 %v2325, %v2324
        %v2328 = vsel %vm399, %v2326, 0
        %v2331 = vand.u32 %v2311, %v406
        %v2334 = vand.u32 %v2312, %v406
        %v2337 = vand.u32 %v2313, %v406
        %v2340 = vand.u32 %v2314, %v406
        %v2343 = vand.u32 %v2315, %v406
        %v2346 = vand.u32 %v2316, %v406
        %v2349 = vand.u32 %v2317, %v406
        %v2352 = vand.u32 %v2318, %v406
        %2354 = vmatprep.subr.bf16.mxu0 %v2334
        %2355 = vmatpush1.bf16.msra.mxu0 %v2331
        %2356 = vmatprep.subr.bf16.mxu0 0
        %2357 = vmatpush1.bf16.msra.mxu0 0
        %2358 = vmatprep.subr.bf16.mxu0 0
        %2359 = vmatpush1.bf16.msra.mxu0 0
        %2360 = vmatprep.subr.bf16.mxu0 0
        %2361 = vmatpush1.bf16.msra.mxu0 0
        %2362 = vmatprep.subr.bf16.mxu0 0
        %2363 = vmatpush1.bf16.msra.mxu0 0
        %2364 = vmatprep.subr.bf16.mxu0 0
        %2365 = vmatpush1.bf16.msra.mxu0 0
        %2366 = vmatprep.subr.bf16.mxu0 0
        %2367 = vmatpush1.bf16.msra.mxu0 0
        %2368 = vmatprep.subr.bf16.mxu0 0
        %2369 = vmatpush1.bf16.msra.mxu0 0
        %2370 = vmatprep.subr.bf16.mxu0 0
        %2371 = vmatpush1.bf16.msra.mxu0 0
        %2372 = vmatprep.subr.bf16.mxu0 0
        %2373 = vmatpush1.bf16.msra.mxu0 0
        %2374 = vmatprep.subr.bf16.mxu0 0
        %2375 = vmatpush1.bf16.msra.mxu0 0
        %2376 = vmatprep.subr.bf16.mxu0 0
        %2377 = vmatpush1.bf16.msra.mxu0 0
        %2378 = vmatprep.subr.bf16.mxu0 0
        %2379 = vmatpush1.bf16.msra.mxu0 0
        %2380 = vmatprep.subr.bf16.mxu0 0
        %2381 = vmatpush1.bf16.msra.mxu0 0
        %2382 = vmatprep.subr.bf16.mxu0 0
        %2383 = vmatpush1.bf16.msra.mxu0 0
        %2384 = vmatprep.subr.bf16.mxu0 0
        %2385 = vmatpush1.bf16.msra.mxu0 0
        %2386 = vmatprep.mubr.bf16.mxu0 0
        %2387 = vmatmul.mubr.bf16.gmra.mrb[0].mxu0 %v2328
        %v2388 = vpop.f32.mrb[0].mxu0
        %v2389 = vadd.f32 0.0, %v2388
        %v2390 = vpop.f32.mrb[0].mxu0
        %v2391 = vadd.f32 0.0, %v2390
        %v2392 = vpop.f32.mrb[0].mxu0
        %v2393 = vadd.f32 0.0, %v2392
        %v2394 = vpop.f32.mrb[0].mxu0
        %v2395 = vadd.f32 0.0, %v2394
        %2396 = vdwg.mxu0
        %2397 = vmatprep.subr.bf16.mxu0 %v2340
        %2398 = vmatpush1.bf16.msra.mxu0 %v2337
        %2399 = vmatprep.subr.bf16.mxu0 0
        %2400 = vmatpush1.bf16.msra.mxu0 0
        %2401 = vmatprep.subr.bf16.mxu0 0
        %2402 = vmatpush1.bf16.msra.mxu0 0
        %2403 = vmatprep.subr.bf16.mxu0 0
        %2404 = vmatpush1.bf16.msra.mxu0 0
        %2405 = vmatprep.subr.bf16.mxu0 0
        %2406 = vmatpush1.bf16.msra.mxu0 0
        %2407 = vmatprep.subr.bf16.mxu0 0
        %2408 = vmatpush1.bf16.msra.mxu0 0
        %2409 = vmatprep.subr.bf16.mxu0 0
        %2410 = vmatpush1.bf16.msra.mxu0 0
        %2411 = vmatprep.subr.bf16.mxu0 0
        %2412 = vmatpush1.bf16.msra.mxu0 0
        %2413 = vmatprep.subr.bf16.mxu0 0
        %2414 = vmatpush1.bf16.msra.mxu0 0
        %2415 = vmatprep.subr.bf16.mxu0 0
        %2416 = vmatpush1.bf16.msra.mxu0 0
        %2417 = vmatprep.subr.bf16.mxu0 0
        %2418 = vmatpush1.bf16.msra.mxu0 0
        %2419 = vmatprep.subr.bf16.mxu0 0
        %2420 = vmatpush1.bf16.msra.mxu0 0
        %2421 = vmatprep.subr.bf16.mxu0 0
        %2422 = vmatpush1.bf16.msra.mxu0 0
        %2423 = vmatprep.subr.bf16.mxu0 0
        %2424 = vmatpush1.bf16.msra.mxu0 0
        %2425 = vmatprep.subr.bf16.mxu0 0
        %2426 = vmatpush1.bf16.msra.mxu0 0
        %2427 = vmatprep.subr.bf16.mxu0 0
        %2428 = vmatpush1.bf16.msra.mxu0 0
        %2429 = vmatprep.mubr.bf16.mxu0 0
        %2430 = vmatmul.mubr.bf16.gmra.mrb[0].mxu0 %v2328
        %v2431 = vpop.f32.mrb[0].mxu0
        %v2432 = vadd.f32 0.0, %v2431
        %v2433 = vpop.f32.mrb[0].mxu0
        %v2434 = vadd.f32 0.0, %v2433
        %v2435 = vpop.f32.mrb[0].mxu0
        %v2436 = vadd.f32 0.0, %v2435
        %v2437 = vpop.f32.mrb[0].mxu0
        %v2438 = vadd.f32 0.0, %v2437
        %2439 = vdwg.mxu0
        %2440 = vmatprep.subr.bf16.mxu0 %v2346
        %2441 = vmatpush1.bf16.msra.mxu0 %v2343
        %2442 = vmatprep.subr.bf16.mxu0 0
        %2443 = vmatpush1.bf16.msra.mxu0 0
        %2444 = vmatprep.subr.bf16.mxu0 0
        %2445 = vmatpush1.bf16.msra.mxu0 0
        %2446 = vmatprep.subr.bf16.mxu0 0
        %2447 = vmatpush1.bf16.msra.mxu0 0
        %2448 = vmatprep.subr.bf16.mxu0 0
        %2449 = vmatpush1.bf16.msra.mxu0 0
        %2450 = vmatprep.subr.bf16.mxu0 0
        %2451 = vmatpush1.bf16.msra.mxu0 0
        %2452 = vmatprep.subr.bf16.mxu0 0
        %2453 = vmatpush1.bf16.msra.mxu0 0
        %2454 = vmatprep.subr.bf16.mxu0 0
        %2455 = vmatpush1.bf16.msra.mxu0 0
        %2456 = vmatprep.subr.bf16.mxu0 0
        %2457 = vmatpush1.bf16.msra.mxu0 0
        %2458 = vmatprep.subr.bf16.mxu0 0
        %2459 = vmatpush1.bf16.msra.mxu0 0
        %2460 = vmatprep.subr.bf16.mxu0 0
        %2461 = vmatpush1.bf16.msra.mxu0 0
        %2462 = vmatprep.subr.bf16.mxu0 0
        %2463 = vmatpush1.bf16.msra.mxu0 0
        %2464 = vmatprep.subr.bf16.mxu0 0
        %2465 = vmatpush1.bf16.msra.mxu0 0
        %2466 = vmatprep.subr.bf16.mxu0 0
        %2467 = vmatpush1.bf16.msra.mxu0 0
        %2468 = vmatprep.subr.bf16.mxu0 0
        %2469 = vmatpush1.bf16.msra.mxu0 0
        %2470 = vmatprep.subr.bf16.mxu0 0
        %2471 = vmatpush1.bf16.msra.mxu0 0
        %2472 = vmatprep.mubr.bf16.mxu0 0
        %2473 = vmatmul.mubr.bf16.gmra.mrb[0].mxu0 %v2328
        %v2474 = vpop.f32.mrb[0].mxu0
        %v2475 = vadd.f32 0.0, %v2474
        %v2476 = vpop.f32.mrb[0].mxu0
        %v2477 = vadd.f32 0.0, %v2476
        %v2478 = vpop.f32.mrb[0].mxu0
        %v2479 = vadd.f32 0.0, %v2478
        %v2480 = vpop.f32.mrb[0].mxu0
        %v2481 = vadd.f32 0.0, %v2480
        %2482 = vdwg.mxu0
        %2483 = vmatprep.subr.bf16.mxu0 %v2352
        %2484 = vmatpush1.bf16.msra.mxu0 %v2349
        %2485 = vmatprep.subr.bf16.mxu0 0
        %2486 = vmatpush1.bf16.msra.mxu0 0
        %2487 = vmatprep.subr.bf16.mxu0 0
        %2488 = vmatpush1.bf16.msra.mxu0 0
        %2489 = vmatprep.subr.bf16.mxu0 0
        %2490 = vmatpush1.bf16.msra.mxu0 0
        %2491 = vmatprep.subr.bf16.mxu0 0
        %2492 = vmatpush1.bf16.msra.mxu0 0
        %2493 = vmatprep.subr.bf16.mxu0 0
        %2494 = vmatpush1.bf16.msra.mxu0 0
        %2495 = vmatprep.subr.bf16.mxu0 0
        %2496 = vmatpush1.bf16.msra.mxu0 0
        %2497 = vmatprep.subr.bf16.mxu0 0
        %2498 = vmatpush1.bf16.msra.mxu0 0
        %2499 = vmatprep.subr.bf16.mxu0 0
        %2500 = vmatpush1.bf16.msra.mxu0 0
        %2501 = vmatprep.subr.bf16.mxu0 0
        %2502 = vmatpush1.bf16.msra.mxu0 0
        %2503 = vmatprep.subr.bf16.mxu0 0
        %2504 = vmatpush1.bf16.msra.mxu0 0
        %2505 = vmatprep.subr.bf16.mxu0 0
        %2506 = vmatpush1.bf16.msra.mxu0 0
        %2507 = vmatprep.subr.bf16.mxu0 0
        %2508 = vmatpush1.bf16.msra.mxu0 0
        %2509 = vmatprep.subr.bf16.mxu0 0
        %2510 = vmatpush1.bf16.msra.mxu0 0
        %2511 = vmatprep.subr.bf16.mxu0 0
        %2512 = vmatpush1.bf16.msra.mxu0 0
        %2513 = vmatprep.subr.bf16.mxu0 0
        %2514 = vmatpush1.bf16.msra.mxu0 0
        %2515 = vmatprep.mubr.bf16.mxu0 0
        %2516 = vmatmul.mubr.bf16.gmra.mrb[0].mxu0 %v2328
        %v2517 = vpop.f32.mrb[0].mxu0
        %v2518 = vadd.f32 0.0, %v2517
        %v2519 = vpop.f32.mrb[0].mxu0
        %v2520 = vadd.f32 0.0, %v2519
        %v2521 = vpop.f32.mrb[0].mxu0
        %v2522 = vadd.f32 0.0, %v2521
        %v2523 = vpop.f32.mrb[0].mxu0
        %v2524 = vadd.f32 0.0, %v2523
        %2525 = vdwg.mxu0
        %v2526 = vadd.f32 %v2246, %v2389
        %v2527 = vadd.f32 %v2247, %v2391
        %v2528 = vadd.f32 %v2248, %v2432
        %v2529 = vadd.f32 %v2249, %v2434
        %v2530 = vadd.f32 %v2250, %v2475
        %v2531 = vadd.f32 %v2251, %v2477
        %v2532 = vadd.f32 %v2252, %v2518
        %v2533 = vadd.f32 %v2253, %v2520
        %v2534 = vadd.f32 %v2254, %v2393
        %v2535 = vadd.f32 %v2255, %v2395
        %v2536 = vadd.f32 %v2256, %v2436
        %v2537 = vadd.f32 %v2257, %v2438
        %v2538 = vadd.f32 %v2258, %v2479
        %v2539 = vadd.f32 %v2259, %v2481
        %v2540 = vadd.f32 %v2260, %v2522
        %v2541 = vadd.f32 %v2261, %v2524
        %2542 = vrot.lane.b32.xlu0 %v170, 95
        %v2543 = vpop.permute.xlu0 %2542
        %2544 = vrot.lane.b32.xlu0 %v195, 95
        %v2545 = vpop.permute.xlu0 %2544
        %2546 = vrot.lane.b32.xlu0 %v171, 95
        %v2547 = vpop.permute.xlu0 %2546
        %2548 = vrot.lane.b32.xlu0 %v196, 95
        %v2549 = vpop.permute.xlu0 %2548
        %2550 = vrot.lane.b32.xlu0 %v172, 95
        %v2551 = vpop.permute.xlu0 %2550
        %2552 = vrot.lane.b32.xlu0 %v197, 95
        %v2553 = vpop.permute.xlu0 %2552
        %2554 = vrot.lane.b32.xlu0 %v173, 95
        %v2555 = vpop.permute.xlu0 %2554
        %2556 = vrot.lane.b32.xlu0 %v198, 95
        %v2557 = vpop.permute.xlu0 %2556
        %vm2558 = vcmp.lt.s32.totalorder %v175, 95
        %v2559 = vsel %vm2558, %v2555, %v2557
        %v2560 = vsel %vm2558, %v2553, %v2555
        %v2561 = vsel %vm2558, %v2551, %v2553
        %v2562 = vsel %vm2558, %v2549, %v2551
        %v2563 = vsel %vm2558, %v2547, %v2549
        %v2564 = vsel %vm2558, %v2545, %v2547
        %v2565 = vsel %vm2558, %v2543, %v2545
        %v2566 = vsel %vm2558, %v2557, %v2543
        %vm2567 = vmand %vm1999, %vm840
        %vm2568 = vmand %vm2000, %vm841
        %vm2569 = vmand %vm2001, %vm842
        %vm2570 = vmand %vm2002, %vm843
        %vm2571 = vmand %vm2003, %vm844
        %vm2572 = vmand %vm2004, %vm845
        %vm2573 = vmand %vm2005, %vm846
        %vm2574 = vmand %vm2006, %vm847
        %vm2575 = vmand %vm2567, %vm856
        %vm2576 = vmand %vm2568, %vm857
        %vm2577 = vmand %vm2569, %vm858
        %vm2578 = vmand %vm2570, %vm859
        %vm2579 = vmand %vm2571, %vm860
        %vm2580 = vmand %vm2572, %vm861
        %vm2581 = vmand %vm2573, %vm862
        %vm2582 = vmand %vm2574, %vm863
        %v2583 = vsel %vm2575, %v2565, 0.0
        %v2584 = vsel %vm2576, %v2564, 0.0
        %v2585 = vsel %vm2577, %v2563, 0.0
        %v2586 = vsel %vm2578, %v2562, 0.0
        %v2587 = vsel %vm2579, %v2561, 0.0
        %v2588 = vsel %vm2580, %v2560, 0.0
        %v2589 = vsel %vm2581, %v2559, 0.0
        %v2590 = vsel %vm2582, %v2566, 0.0
        %v2591 = vpack.c.bf16 %v2583, %v2583
        %v2592 = vpack.c.bf16 %v2584, %v2584
        %v2593 = vpack.c.bf16 %v2585, %v2585
        %v2594 = vpack.c.bf16 %v2586, %v2586
        %v2595 = vpack.c.bf16 %v2587, %v2587
        %v2596 = vpack.c.bf16 %v2588, %v2588
        %v2597 = vpack.c.bf16 %v2589, %v2589
        %v2598 = vpack.c.bf16 %v2590, %v2590
        %s2599 = scalar_lea.vmem %s1, 64
        %v2600 = vld [vmem:[%s2599] sm:$0xf]
        %v2601 = vld [vmem:[%s2599 + $0x4] sm:$0xf]
        %v2604 = vunpack.c.l.b16 %v2600
        %v2605 = vunpack.c.l.b16 %v2601
        %v2606 = vpack.c.b16 %v2605, %v2604
        %v2608 = vsel %vm399, %v2606, 0
        %v2611 = vand.u32 %v2591, %v406
        %v2614 = vand.u32 %v2592, %v406
        %v2617 = vand.u32 %v2593, %v406
        %v2620 = vand.u32 %v2594, %v406
        %v2623 = vand.u32 %v2595, %v406
        %v2626 = vand.u32 %v2596, %v406
        %v2629 = vand.u32 %v2597, %v406
        %v2632 = vand.u32 %v2598, %v406
        %2634 = vmatprep.subr.bf16.mxu0 %v2614
        %2635 = vmatpush1.bf16.msra.mxu0 %v2611
        %2636 = vmatprep.subr.bf16.mxu0 0
        %2637 = vmatpush1.bf16.msra.mxu0 0
        %2638 = vmatprep.subr.bf16.mxu0 0
        %2639 = vmatpush1.bf16.msra.mxu0 0
        %2640 = vmatprep.subr.bf16.mxu0 0
        %2641 = vmatpush1.bf16.msra.mxu0 0
        %2642 = vmatprep.subr.bf16.mxu0 0
        %2643 = vmatpush1.bf16.msra.mxu0 0
        %2644 = vmatprep.subr.bf16.mxu0 0
        %2645 = vmatpush1.bf16.msra.mxu0 0
        %2646 = vmatprep.subr.bf16.mxu0 0
        %2647 = vmatpush1.bf16.msra.mxu0 0
        %2648 = vmatprep.subr.bf16.mxu0 0
        %2649 = vmatpush1.bf16.msra.mxu0 0
        %2650 = vmatprep.subr.bf16.mxu0 0
        %2651 = vmatpush1.bf16.msra.mxu0 0
        %2652 = vmatprep.subr.bf16.mxu0 0
        %2653 = vmatpush1.bf16.msra.mxu0 0
        %2654 = vmatprep.subr.bf16.mxu0 0
        %2655 = vmatpush1.bf16.msra.mxu0 0
        %2656 = vmatprep.subr.bf16.mxu0 0
        %2657 = vmatpush1.bf16.msra.mxu0 0
        %2658 = vmatprep.subr.bf16.mxu0 0
        %2659 = vmatpush1.bf16.msra.mxu0 0
        %2660 = vmatprep.subr.bf16.mxu0 0
        %2661 = vmatpush1.bf16.msra.mxu0 0
        %2662 = vmatprep.subr.bf16.mxu0 0
        %2663 = vmatpush1.bf16.msra.mxu0 0
        %2664 = vmatprep.subr.bf16.mxu0 0
        %2665 = vmatpush1.bf16.msra.mxu0 0
        %2666 = vmatprep.mubr.bf16.mxu0 0
        %2667 = vmatmul.mubr.bf16.gmra.mrb[0].mxu0 %v2608
        %v2668 = vpop.f32.mrb[0].mxu0
        %v2669 = vadd.f32 0.0, %v2668
        %v2670 = vpop.f32.mrb[0].mxu0
        %v2671 = vadd.f32 0.0, %v2670
        %v2672 = vpop.f32.mrb[0].mxu0
        %v2673 = vadd.f32 0.0, %v2672
        %v2674 = vpop.f32.mrb[0].mxu0
        %v2675 = vadd.f32 0.0, %v2674
        %2676 = vdwg.mxu0
        %2677 = vmatprep.subr.bf16.mxu0 %v2620
        %2678 = vmatpush1.bf16.msra.mxu0 %v2617
        %2679 = vmatprep.subr.bf16.mxu0 0
        %2680 = vmatpush1.bf16.msra.mxu0 0
        %2681 = vmatprep.subr.bf16.mxu0 0
        %2682 = vmatpush1.bf16.msra.mxu0 0
        %2683 = vmatprep.subr.bf16.mxu0 0
        %2684 = vmatpush1.bf16.msra.mxu0 0
        %2685 = vmatprep.subr.bf16.mxu0 0
        %2686 = vmatpush1.bf16.msra.mxu0 0
        %2687 = vmatprep.subr.bf16.mxu0 0
        %2688 = vmatpush1.bf16.msra.mxu0 0
        %2689 = vmatprep.subr.bf16.mxu0 0
        %2690 = vmatpush1.bf16.msra.mxu0 0
        %2691 = vmatprep.subr.bf16.mxu0 0
        %2692 = vmatpush1.bf16.msra.mxu0 0
        %2693 = vmatprep.subr.bf16.mxu0 0
        %2694 = vmatpush1.bf16.msra.mxu0 0
        %2695 = vmatprep.subr.bf16.mxu0 0
        %2696 = vmatpush1.bf16.msra.mxu0 0
        %2697 = vmatprep.subr.bf16.mxu0 0
        %2698 = vmatpush1.bf16.msra.mxu0 0
        %2699 = vmatprep.subr.bf16.mxu0 0
        %2700 = vmatpush1.bf16.msra.mxu0 0
        %2701 = vmatprep.subr.bf16.mxu0 0
        %2702 = vmatpush1.bf16.msra.mxu0 0
        %2703 = vmatprep.subr.bf16.mxu0 0
        %2704 = vmatpush1.bf16.msra.mxu0 0
        %2705 = vmatprep.subr.bf16.mxu0 0
        %2706 = vmatpush1.bf16.msra.mxu0 0
        %2707 = vmatprep.subr.bf16.mxu0 0
        %2708 = vmatpush1.bf16.msra.mxu0 0
        %2709 = vmatprep.mubr.bf16.mxu0 0
        %2710 = vmatmul.mubr.bf16.gmra.mrb[0].mxu0 %v2608
        %v2711 = vpop.f32.mrb[0].mxu0
        %v2712 = vadd.f32 0.0, %v2711
        %v2713 = vpop.f32.mrb[0].mxu0
        %v2714 = vadd.f32 0.0, %v2713
        %v2715 = vpop.f32.mrb[0].mxu0
        %v2716 = vadd.f32 0.0, %v2715
        %v2717 = vpop.f32.mrb[0].mxu0
        %v2718 = vadd.f32 0.0, %v2717
        %2719 = vdwg.mxu0
        %2720 = vmatprep.subr.bf16.mxu0 %v2626
        %2721 = vmatpush1.bf16.msra.mxu0 %v2623
        %2722 = vmatprep.subr.bf16.mxu0 0
        %2723 = vmatpush1.bf16.msra.mxu0 0
        %2724 = vmatprep.subr.bf16.mxu0 0
        %2725 = vmatpush1.bf16.msra.mxu0 0
        %2726 = vmatprep.subr.bf16.mxu0 0
        %2727 = vmatpush1.bf16.msra.mxu0 0
        %2728 = vmatprep.subr.bf16.mxu0 0
        %2729 = vmatpush1.bf16.msra.mxu0 0
        %2730 = vmatprep.subr.bf16.mxu0 0
        %2731 = vmatpush1.bf16.msra.mxu0 0
        %2732 = vmatprep.subr.bf16.mxu0 0
        %2733 = vmatpush1.bf16.msra.mxu0 0
        %2734 = vmatprep.subr.bf16.mxu0 0
        %2735 = vmatpush1.bf16.msra.mxu0 0
        %2736 = vmatprep.subr.bf16.mxu0 0
        %2737 = vmatpush1.bf16.msra.mxu0 0
        %2738 = vmatprep.subr.bf16.mxu0 0
        %2739 = vmatpush1.bf16.msra.mxu0 0
        %2740 = vmatprep.subr.bf16.mxu0 0
        %2741 = vmatpush1.bf16.msra.mxu0 0
        %2742 = vmatprep.subr.bf16.mxu0 0
        %2743 = vmatpush1.bf16.msra.mxu0 0
        %2744 = vmatprep.subr.bf16.mxu0 0
        %2745 = vmatpush1.bf16.msra.mxu0 0
        %2746 = vmatprep.subr.bf16.mxu0 0
        %2747 = vmatpush1.bf16.msra.mxu0 0
        %2748 = vmatprep.subr.bf16.mxu0 0
        %2749 = vmatpush1.bf16.msra.mxu0 0
        %2750 = vmatprep.subr.bf16.mxu0 0
        %2751 = vmatpush1.bf16.msra.mxu0 0
        %2752 = vmatprep.mubr.bf16.mxu0 0
        %2753 = vmatmul.mubr.bf16.gmra.mrb[0].mxu0 %v2608
        %v2754 = vpop.f32.mrb[0].mxu0
        %v2755 = vadd.f32 0.0, %v2754
        %v2756 = vpop.f32.mrb[0].mxu0
        %v2757 = vadd.f32 0.0, %v2756
        %v2758 = vpop.f32.mrb[0].mxu0
        %v2759 = vadd.f32 0.0, %v2758
        %v2760 = vpop.f32.mrb[0].mxu0
        %v2761 = vadd.f32 0.0, %v2760
        %2762 = vdwg.mxu0
        %2763 = vmatprep.subr.bf16.mxu0 %v2632
        %2764 = vmatpush1.bf16.msra.mxu0 %v2629
        %2765 = vmatprep.subr.bf16.mxu0 0
        %2766 = vmatpush1.bf16.msra.mxu0 0
        %2767 = vmatprep.subr.bf16.mxu0 0
        %2768 = vmatpush1.bf16.msra.mxu0 0
        %2769 = vmatprep.subr.bf16.mxu0 0
        %2770 = vmatpush1.bf16.msra.mxu0 0
        %2771 = vmatprep.subr.bf16.mxu0 0
        %2772 = vmatpush1.bf16.msra.mxu0 0
        %2773 = vmatprep.subr.bf16.mxu0 0
        %2774 = vmatpush1.bf16.msra.mxu0 0
        %2775 = vmatprep.subr.bf16.mxu0 0
        %2776 = vmatpush1.bf16.msra.mxu0 0
        %2777 = vmatprep.subr.bf16.mxu0 0
        %2778 = vmatpush1.bf16.msra.mxu0 0
        %2779 = vmatprep.subr.bf16.mxu0 0
        %2780 = vmatpush1.bf16.msra.mxu0 0
        %2781 = vmatprep.subr.bf16.mxu0 0
        %2782 = vmatpush1.bf16.msra.mxu0 0
        %2783 = vmatprep.subr.bf16.mxu0 0
        %2784 = vmatpush1.bf16.msra.mxu0 0
        %2785 = vmatprep.subr.bf16.mxu0 0
        %2786 = vmatpush1.bf16.msra.mxu0 0
        %2787 = vmatprep.subr.bf16.mxu0 0
        %2788 = vmatpush1.bf16.msra.mxu0 0
        %2789 = vmatprep.subr.bf16.mxu0 0
        %2790 = vmatpush1.bf16.msra.mxu0 0
        %2791 = vmatprep.subr.bf16.mxu0 0
        %2792 = vmatpush1.bf16.msra.mxu0 0
        %2793 = vmatprep.subr.bf16.mxu0 0
        %2794 = vmatpush1.bf16.msra.mxu0 0
        %2795 = vmatprep.mubr.bf16.mxu0 0
        %2796 = vmatmul.mubr.bf16.gmra.mrb[0].mxu0 %v2608
        %v2797 = vpop.f32.mrb[0].mxu0
        %v2798 = vadd.f32 0.0, %v2797
        %v2799 = vpop.f32.mrb[0].mxu0
        %v2800 = vadd.f32 0.0, %v2799
        %v2801 = vpop.f32.mrb[0].mxu0
        %v2802 = vadd.f32 0.0, %v2801
        %v2803 = vpop.f32.mrb[0].mxu0
        %v2804 = vadd.f32 0.0, %v2803
        %2805 = vdwg.mxu0
        %v2806 = vadd.f32 %v2526, %v2669
        %v2807 = vadd.f32 %v2527, %v2671
        %v2808 = vadd.f32 %v2528, %v2712
        %v2809 = vadd.f32 %v2529, %v2714
        %v2810 = vadd.f32 %v2530, %v2755
        %v2811 = vadd.f32 %v2531, %v2757
        %v2812 = vadd.f32 %v2532, %v2798
        %v2813 = vadd.f32 %v2533, %v2800
        %v2814 = vadd.f32 %v2534, %v2673
        %v2815 = vadd.f32 %v2535, %v2675
        %v2816 = vadd.f32 %v2536, %v2716
        %v2817 = vadd.f32 %v2537, %v2718
        %v2818 = vadd.f32 %v2538, %v2759
        %v2819 = vadd.f32 %v2539, %v2761
        %v2820 = vadd.f32 %v2540, %v2802
        %v2821 = vadd.f32 %v2541, %v2804
        %v2822 = vld [vmem:[%s2] sm:$0xff]
        %v2823 = vld [vmem:[%s2 + $0x8] sm:$0xff]
        %2825 = vset.pattern.permute.xlu0 0
        %2826 = vperm.xlu0 %2825, %v2822
        %v2827 = vpop.permute.xlu0 %2826
        %2830 = vset.pattern.permute.xlu0 0
        %2831 = vperm.xlu0 %2830, %v2823
        %v2832 = vpop.permute.xlu0 %2831
        %v2834 = vadd.f32 %v2806, %v2827
        %v2835 = vadd.f32 %v2807, %v2827
        %v2836 = vadd.f32 %v2808, %v2827
        %v2837 = vadd.f32 %v2809, %v2827
        %v2838 = vadd.f32 %v2810, %v2827
        %v2839 = vadd.f32 %v2811, %v2827
        %v2840 = vadd.f32 %v2812, %v2827
        %v2841 = vadd.f32 %v2813, %v2827
        %v2842 = vadd.f32 %v2814, %v2832
        %v2843 = vadd.f32 %v2815, %v2832
        %v2844 = vadd.f32 %v2816, %v2832
        %v2845 = vadd.f32 %v2817, %v2832
        %v2846 = vadd.f32 %v2818, %v2832
        %v2847 = vadd.f32 %v2819, %v2832
        %v2848 = vadd.f32 %v2820, %v2832
        %v2849 = vadd.f32 %v2821, %v2832
        %v2850 = vmax.f32 %v2834, 0.0
        %v2851 = vmax.f32 %v2835, 0.0
        %v2852 = vmax.f32 %v2836, 0.0
        %v2853 = vmax.f32 %v2837, 0.0
        %v2854 = vmax.f32 %v2838, 0.0
        %v2855 = vmax.f32 %v2839, 0.0
        %v2856 = vmax.f32 %v2840, 0.0
        %v2857 = vmax.f32 %v2841, 0.0
        %v2858 = vmax.f32 %v2842, 0.0
        %v2859 = vmax.f32 %v2843, 0.0
        %v2860 = vmax.f32 %v2844, 0.0
        %v2861 = vmax.f32 %v2845, 0.0
        %v2862 = vmax.f32 %v2846, 0.0
        %v2863 = vmax.f32 %v2847, 0.0
        %v2864 = vmax.f32 %v2848, 0.0
        %v2865 = vmax.f32 %v2849, 0.0
        %2866 = vst [vmem:[%s163] sm:$0xff] %v2850
        %2867 = vst [vmem:[%s163 + $0x8] sm:$0xff] %v2851
        %2868 = vst [vmem:[%s163 + $0x10] sm:$0xff] %v2852
        %2869 = vst [vmem:[%s163 + $0x18] sm:$0xff] %v2853
        %2870 = vst [vmem:[%s163 + $0x20] sm:$0xff] %v2854
        %2871 = vst [vmem:[%s163 + $0x28] sm:$0xff] %v2855
        %2872 = vst [vmem:[%s163 + $0x30] sm:$0xff] %v2856
        %2873 = vst [vmem:[%s163 + $0x38] sm:$0xff] %v2857
        %2874 = vst [vmem:[%s163 + $0x40] sm:$0xff] %v2858
        %2875 = vst [vmem:[%s163 + $0x48] sm:$0xff] %v2859
        %2876 = vst [vmem:[%s163 + $0x50] sm:$0xff] %v2860
        %2877 = vst [vmem:[%s163 + $0x58] sm:$0xff] %v2861
        %2878 = vst [vmem:[%s163 + $0x60] sm:$0xff] %v2862
        %2879 = vst [vmem:[%s163 + $0x68] sm:$0xff] %v2863
        %2880 = vst [vmem:[%s163 + $0x70] sm:$0xff] %v2864
        %2881 = vst [vmem:[%s163 + $0x78] sm:$0xff] %v2865
        %s2882 = sand.u32 %s93, 1
        %s2883 = scalar_lea.sflag [#allocation3], %s2882
        %s2884 = sand.u32 %s93, 1
        %s2885 = smul.addr %s2884, 128
        %s2886 = scalar_lea.vmem [#allocation2], %s2885
        // Predicated region
        $region33: #{tpu_custom_call.1} parent=31 // pred_check
          %p2887 = pneg %p103
        $region34: #{tpu_custom_call.1} parent=31 // pred_check_branch
          %2889 = sbr.rel (%p2887) target = $region36
        $region35: #{tpu_custom_call.1} parent=31 // pred_region
          %s2891 = ssub.s32 2048, 2048
          %2892 = vsyncadd %s2883, %s2891
          %s2893 = smul.addr %s17, 16
          %s2894 = smul.addr %s2893, 128
          %s2895 = scalar_lea.hbm %s3, %s2894
          %s2896 = sshll.u32 %s2886, 4
          %s2897 = int_to_ptr.vmem [resolvable:$true] %s2896
          %2902 = dma.vmem_to_hbm [thread:$0]  %s2897, 2048, %s2895, %s2883, 1024, 1024, 64
        $region36: #{tpu_custom_call.1} parent=31 // pred_fallthru
          _
      $region32: #{tpu_custom_call.1} parent=5 // pred_fallthru
        _
      %p2903 = scmp.le.s32.totalorder 2, %s12
      // Predicated region
      $region37: #{tpu_custom_call.1} parent=5 // pred_check
        %p2904 = pneg %p2903
      $region38: #{tpu_custom_call.1} parent=5 // pred_check_branch
        %2906 = sbr.rel (%p2904) target = $region40
      $region39: #{tpu_custom_call.1} parent=5 // pred_region
        %s2907 = ssub.s32 %s12, 2
        // Predicated region
        $region41: #{tpu_custom_call.1} parent=39 // pred_check
          %p2908 = pneg %p109
        $region42: #{tpu_custom_call.1} parent=39 // pred_check_branch
          %2910 = sbr.rel (%p2908) target = $region44
        $region43: #{tpu_custom_call.1} parent=39 // pred_region
          %s2911 = sand.u32 %s94, 1
          %s2912 = scalar_lea.sflag [#allocation3], %s2911
          %s2913 = sand.u32 %s94, 1
          %s2914 = smul.addr %s2913, 128
          %s2915 = scalar_lea.vmem [#allocation2], %s2914
          %2916 = dma.done %s2912, 2048
        $region44: #{tpu_custom_call.1} parent=39 // pred_fallthru
          _
      $region40: #{tpu_custom_call.1} parent=5 // pred_fallthru
        _
    $region6: #{tpu_custom_call.1} parent=1 // loop_footer
      %s16 = sadd.s32 1, %s12
    $region7: #{tpu_custom_call.1} parent=1 // loop_footer_branch
      %11 = sbr.rel target = $region3
    $region8: #{tpu_custom_call.1} parent=1 // loop_exit
      _
    %2917 = vsyncpa [#allocation3], 1
    %s2918 = scalar_lea.sflag [#allocation3], 1
    %2919 = vsyncpa %s2918, 1

</llo_original>
